<compile_context>
chip_gen: v7x
topology: tpu7x:2x2x1
jax: 0.10.0
libtpu: 0.0.40
codegen_flags: <defaults>
</compile_context>

<pallas_src>
import jax
import jax.numpy as jnp
from jax.experimental import pallas as pl
from jax.experimental.pallas import tpu as pltpu


def _round_up(x, m):
    return ((x + m - 1) // m) * m


# Explicit scoped-VMEM budget: > v5e's 16 MiB default, < v7x's 64 MiB physical.
_VMEM_LIMIT = 48 * 1024 * 1024


def _pick_tile(M, desired, min_steps=2):
    """Row tile: multiple of 8, <= desired, preferably dividing M exactly (so
    jnp.pad / out[:M] are no-ops) and yielding >= min_steps grid steps so both
    v7x TensorCores get work."""
    desired = max(8, min(desired, _round_up(M, 8)))
    cap = desired
    if M >= 8 * min_steps:
        cap = min(cap, _round_up(-(-M // min_steps), 8))
    cap = max(8, (cap // 8) * 8)
    t = cap
    while t >= 8:
        if M % t == 0:
            return t
        t -= 8
    return cap  # no exact divisor of M -> caller pads once


# ----------------------------------------------------------------------------
# Pallas kernel 1: MLP linear projection (tokens @ W + b), tiled over M
# ----------------------------------------------------------------------------
def _mlp_kernel(x_ref, w_ref, b_ref, o_ref):
    y = (jnp.dot(x_ref[...], w_ref[...], preferred_element_type=jnp.float32)
         + b_ref[...])
    o_ref[...] = y.astype(o_ref.dtype)          # bf16 out: halves HBM traffic


def mlp_proj(x2d, w, b, *, tm=2048):
    """x2d: (M, Cin) float, w: (Cin, E) bf16, b: (1, E) f32 -> (M, E) bf16."""
    M, Cin = x2d.shape
    E = w.shape[1]
    tm = _pick_tile(M, tm)
    Mp = _round_up(M, tm)

    x = x2d.astype(w.dtype)
    if Mp != M:
        x = jnp.pad(x, ((0, Mp - M), (0, 0)))

    cost = pl.CostEstimate(
        flops=2 * Mp * Cin * E,
        transcendentals=0,
        bytes_accessed=Mp * Cin * 2 + Cin * E * 2 + E * 4 + Mp * E * 2,
    )
    out = pl.pallas_call(
        _mlp_kernel,
        out_shape=jax.ShapeDtypeStruct((Mp, E), w.dtype),
        grid=(Mp // tm,),
        in_specs=[
            pl.BlockSpec((tm, Cin), lambda i: (i, 0)),
            pl.BlockSpec((Cin, E), lambda i: (0, 0)),   # weight stays resident
            pl.BlockSpec((1, E), lambda i: (0, 0)),     # bias stays resident
        ],
        out_specs=pl.BlockSpec((tm, E), lambda i: (i, 0)),
        compiler_params=pltpu.CompilerParams(
            dimension_semantics=("parallel",),
            vmem_limit_bytes=_VMEM_LIMIT),
        cost_estimate=cost,
    )(x, w, b)
    return out if Mp == M else out[:M]


# ----------------------------------------------------------------------------
# Pallas kernel 2: fused head (c1-MLP + linear_fuse + linear_reduce + linear_pred)
# ----------------------------------------------------------------------------
def _head_kernel(x4_ref, x3_ref, x2_ref, c1_ref,
                 wf4_ref, wf3_ref, wf2_ref, wf1c_ref, bf_ref,
                 wrp_ref, brp_ref,
                 pred_ref, feat_ref):
    # linear_fuse: conv1x1 over the (virtual) channel-concat [c4|c3|c2|c1],
    # computed as four partial matmuls so the concat is never built.  The c1
    # branch MLP is folded into wf1c (c1 tokens feed the MXU directly).
    acc = jnp.dot(x4_ref[...], wf4_ref[...], preferred_element_type=jnp.float32)
    acc = acc + jnp.dot(x3_ref[...], wf3_ref[...], preferred_element_type=jnp.float32)
    acc = acc + jnp.dot(x2_ref[...], wf2_ref[...], preferred_element_type=jnp.float32)
    acc = acc + jnp.dot(c1_ref[...], wf1c_ref[...], preferred_element_type=jnp.float32)
    c = jnp.maximum(acc + bf_ref[...], 0.0)          # folded BN shift + ReLU

    # TODO(synk): Dropout2d(0.1) is identity at inference; training-mode channel
    # dropout is not implemented here.
    y = (jnp.dot(c.astype(wrp_ref.dtype), wrp_ref[...],
                 preferred_element_type=jnp.float32) + brp_ref[...])
    cr = feat_ref.shape[-1]
    feat_ref[...] = jnp.maximum(y[:, :cr], 0.0)      # linear_reduce (BN+ReLU)
    pred_ref[...] = y[:, cr:]                        # linear_pred (zero-padded lanes)


def head_call(x4, x3, x2, c1tok, p, *, tm=1024):
    """x*: (M, E) bf16 upsampled slabs, c1tok: (M, C1) bf16 raw c1 tokens
    -> (pred (M, num_class) f32, feat (M, 256) f32)."""
    M, E = x2.shape
    C1 = c1tok.shape[1]
    Cr, Cp = p["Cr"], p["Cp"]
    tm = _pick_tile(M, tm)
    Mp = _round_up(M, tm)
    if Mp != M:
        pad = ((0, Mp - M), (0, 0))
        x4, x3, x2, c1tok = (jnp.pad(t, pad) for t in (x4, x3, x2, c1tok))

    row = lambda i: (i, 0)
    const = lambda i: (0, 0)
    cost = pl.CostEstimate(
        flops=2 * Mp * (3 * E * E + C1 * E + E * (Cr + Cp)),
        transcendentals=0,
        bytes_accessed=(Mp * (3 * E + C1) * 2
                        + (3 * E * E + C1 * E + E * (Cr + Cp)) * 2
                        + (E + Cr + Cp) * 4
                        + Mp * (Cr + Cp) * 4),
    )

    pred_pad, feat = pl.pallas_call(
        _head_kernel,
        out_shape=(jax.ShapeDtypeStruct((Mp, Cp), jnp.float32),
                   jax.ShapeDtypeStruct((Mp, Cr), jnp.float32)),
        grid=(Mp // tm,),
        in_specs=[
            pl.BlockSpec((tm, E), row),
            pl.BlockSpec((tm, E), row),
            pl.BlockSpec((tm, E), row),
            pl.BlockSpec((tm, C1), row),
            pl.BlockSpec((E, E), const),      # resident weights
            pl.BlockSpec((E, E), const),
            pl.BlockSpec((E, E), const),
            pl.BlockSpec((C1, E), const),
            pl.BlockSpec((1, E), const),
            pl.BlockSpec((E, Cr + Cp), const),
            pl.BlockSpec((1, Cr + Cp), const),
        ],
        out_specs=(pl.BlockSpec((tm, Cp), row),
                   pl.BlockSpec((tm, Cr), row)),
        compiler_params=pltpu.CompilerParams(
            dimension_semantics=("parallel",),
            vmem_limit_bytes=_VMEM_LIMIT),
        cost_estimate=cost,
    )(x4, x3, x2, c1tok,
      p["wf4"], p["wf3"], p["wf2"], p["wf1c"], p["bf"],
      p["wrp"], p["brp"])

    if Mp != M:
        pred_pad, feat = pred_pad[:M], feat[:M]
    return pred_pad[:, :p["num_class"]], feat


# ----------------------------------------------------------------------------
# Wrapper: full SegFormerHead forward
# ----------------------------------------------------------------------------
def segformer_head_forward(c1, c2, c3, c4, p):
    n, _, h1, w1 = c1.shape
    E = p["w2"].shape[1]
    bf16 = jnp.bfloat16

    def tokens(c):
        n_, ci, hi, wi = c.shape
        return jnp.transpose(c, (0, 2, 3, 1)).reshape(n_ * hi * wi, ci), (n_, hi, wi)

    def mlp_branch(c, w, b):
        x, (n_, hi, wi) = tokens(c)
        return mlp_proj(x, w, b).reshape(n_, hi, wi, E)   # bf16 NHWC map

    e4 = mlp_branch(c4, p["w4"], p["b4"])
    e3 = mlp_branch(c3, p["w3"], p["b3"])
    e2 = mlp_branch(c2, p["w2"], p["b2"])

    # Bilinear, half-pixel centers == F.interpolate(align_corners=False).
    # Runs on bf16 slabs (half the HBM traffic of the previous f32 path).
    # TODO(synk): the bilinear resize still runs in XLA (jax.image.resize); an
    # in-kernel separable-interp upsample of the VMEM-resident e2/e3/e4 maps
    # would remove the remaining (M,E) HBM round-trips.
    up = lambda t: jax.image.resize(t, (n, h1, w1, E), method="bilinear")
    M = n * h1 * w1
    x4 = up(e4).reshape(M, E)
    x3 = up(e3).reshape(M, E)
    x2 = up(e2).reshape(M, E)

    # c1 branch: MLP is folded into the head weights; feed raw tokens.
    c1tok, _ = tokens(c1)
    c1tok = c1tok.astype(bf16)

    pred2, feat2 = head_call(x4, x3, x2, c1tok, p)
    nc, Cr = p["num_class"], p["Cr"]
    # TODO(synk): final NHWC->NCHW transposes stay in XLA to preserve the
    # module's NCHW return layout.
    pred = jnp.transpose(pred2.reshape(n, h1, w1, nc), (0, 3, 1, 2))
    feat = jnp.transpose(feat2.reshape(n, h1, w1, Cr), (0, 3, 1, 2))
    return pred, feat


# ----------------------------------------------------------------------------
# Pure-JAX reference (same prepared params / same bf16 casts) for sanity check
# ----------------------------------------------------------------------------
def reference_forward(c1, c2, c3, c4, p):
    n, _, h1, w1 = c1.shape
    E, Cr, nc = p["E"], p["Cr"], p["num_class"]
    bf16 = jnp.bfloat16

    def tokens(c):
        n_, ci, hi, wi = c.shape
        return jnp.transpose(c, (0, 2, 3, 1)).reshape(n_ * hi * wi, ci), (n_, hi, wi)

    def branch(c, w, b):
        x, (n_, hi, wi) = tokens(c)
        y = jnp.dot(x.astype(w.dtype), w, preferred_element_type=jnp.float32) + b
        return y.astype(bf16).reshape(n_, hi, wi, E)

    up = lambda t: jax.image.resize(t, (n, h1, w1, E), method="bilinear")
    M = n * h1 * w1
    x4 = up(branch(c4, p["w4"], p["b4"])).reshape(M, E)
    x3 = up(branch(c3, p["w3"], p["b3"])).reshape(M, E)
    x2 = up(branch(c2, p["w2"], p["b2"])).reshape(M, E)
    c1tok, _ = tokens(c1)
    c1tok = c1tok.astype(bf16)

    acc = (jnp.dot(x4, p["wf4"], preferred_element_type=jnp.float32)
           + jnp.dot(x3, p["wf3"], preferred_element_type=jnp.float32)
           + jnp.dot(x2, p["wf2"], preferred_element_type=jnp.float32)
           + jnp.dot(c1tok, p["wf1c"], preferred_element_type=jnp.float32))
    c = jnp.maximum(acc + p["bf"], 0.0)
    y = jnp.dot(c.astype(bf16), p["wrp"], preferred_element_type=jnp.float32) + p["brp"]
    feat = jnp.maximum(y[:, :Cr], 0.0)
    pred = y[:, Cr:Cr + nc]
    pred = jnp.transpose(pred.reshape(n, h1, w1, nc), (0, 3, 1, 2))
    feat = jnp.transpose(feat.reshape(n, h1, w1, Cr), (0, 3, 1, 2))
    return pred, feat


# ----------------------------------------------------------------------------
# Parameter construction
# ----------------------------------------------------------------------------
def init_params(key, embedding_dim, in_channels, num_class, reduce_dim=256):
    """Module-style f32 parameters (BN already reduced to eval-mode scale/shift)."""
    eps = 1e-5
    keys = jax.random.split(key, 20)
    ki = iter(range(20))

    def lin(cin, cout):
        w = jax.random.normal(keys[next(ki)], (cin, cout), jnp.float32) * 0.05
        b = jax.random.normal(keys[next(ki)], (cout,), jnp.float32) * 0.05
        return w, b

    def bn_fold(cout):
        gamma = 1.0 + 0.1 * jax.random.normal(keys[next(ki)], (cout,), jnp.float32)
        beta = 0.1 * jax.random.normal(keys[next(ki)], (cout,), jnp.float32)
        mean = 0.1 * jax.random.normal(keys[next(ki)], (cout,), jnp.float32)
        var = jnp.abs(jax.random.normal(keys[next(ki)], (cout,), jnp.float32)) + 0.5
        scale = gamma / jnp.sqrt(var + eps)
        shift = beta - mean * scale
        return scale.reshape(1, cout), shift.reshape(1, cout)

    c1c, c2c, c3c, c4c = in_channels
    p = {}
    p["w1"], p["b1"] = lin(c1c, embedding_dim)
    p["w2"], p["b2"] = lin(c2c, embedding_dim)
    p["w3"], p["b3"] = lin(c3c, embedding_dim)
    p["w4"], p["b4"] = lin(c4c, embedding_dim)
    # linear_fuse: conv1x1 (4E -> E, no bias) + BN
    p["wf"] = jax.random.normal(keys[next(ki)], (4 * embedding_dim, embedding_dim),
                                jnp.float32) * 0.05
    p["sf"], p["bf"] = bn_fold(embedding_dim)
    # linear_reduce: conv1x1 (E -> 256, no bias) + BN
    p["wr"] = jax.random.normal(keys[next(ki)], (embedding_dim, reduce_dim),
                                jnp.float32) * 0.05
    p["sr"], p["br"] = bn_fold(reduce_dim)
    # linear_pred: conv1x1 (E -> num_class, with bias)
    p["wp"], p["bp"] = lin(embedding_dim, num_class)
    return p


def prepare_params(raw, num_class):
    """Fold eval-mode BN scales into conv weights, fold the c1 MLP into the
    fuse weight (W1f = w1 @ wf1, b1 @ wf1 into the BN shift), pad pred to 128
    lanes, fuse reduce+pred weights, and cast matmul operands to bf16."""
    E = raw["w1"].shape[1]
    Cr = raw["wr"].shape[1]
    bf16 = jnp.bfloat16
    p = {"Cr": Cr, "num_class": num_class, "E": E}

    for i in (2, 3, 4):
        p[f"w{i}"] = raw[f"w{i}"].astype(bf16)
        p[f"b{i}"] = raw[f"b{i}"].reshape(1, E).astype(jnp.float32)

    # linear_fuse: fold BN scale into the 1x1 conv weight; split into per-branch
    # K-blocks (torch concat order: [c4, c3, c2, c1]).
    wf = raw["wf"] * raw["sf"]                       # (4E, E) * (1, E)
    p["wf4"] = wf[0 * E:1 * E].astype(bf16)
    p["wf3"] = wf[1 * E:2 * E].astype(bf16)
    p["wf2"] = wf[2 * E:3 * E].astype(bf16)
    wf1 = wf[3 * E:4 * E]                            # c1 K-block, f32
    # Fold c1 MLP:  (x@w1 + b1) @ wf1  ==  x @ (w1@wf1) + b1@wf1   (exact in f32)
    p["wf1c"] = jnp.dot(raw["w1"], wf1).astype(bf16)                 # (C1, E)
    p["bf"] = (raw["bf"] + jnp.dot(raw["b1"].reshape(1, E), wf1)).astype(jnp.float32)

    # linear_reduce (BN folded) + linear_pred fused into one wide weight; pred
    # columns zero-padded to a multiple of 128 so the store is lane-dense.
    # Note: production E=256/768 and Cr=256 are already multiples of 128.
    wr = raw["wr"] * raw["sr"]                       # (E, Cr)
    Cp = _round_up(max(num_class, 1), 128)
    wp_pad = jnp.zeros((E, Cp), jnp.float32).at[:, :num_class].set(raw["wp"])
    bp_pad = jnp.zeros((1, Cp), jnp.float32).at[:, :num_class].set(
        raw["bp"].reshape(1, num_class))
    p["Cp"] = Cp
    p["wrp"] = jnp.concatenate([wr, wp_pad], axis=1).astype(bf16)    # (E, Cr+Cp)
    p["brp"] = jnp.concatenate([raw["br"], bp_pad], axis=1).astype(jnp.float32)
    return p


if __name__ == "__main__":
    key = jax.random.PRNGKey(0)
    k1, k2, k3, k4, kp = jax.random.split(key, 5)

    embedding_dim = 32
    num_class = 6
    in_channels = (8, 16, 32, 64)
    N = 2

    # SegFormer pyramid: c1 is the highest resolution.
    c1 = jax.random.normal(k1, (N, in_channels[0], 16, 16), jnp.float32)
    c2 = jax.random.normal(k2, (N, in_channels[1], 8, 8), jnp.float32)
    c3 = jax.random.normal(k3, (N, in_channels[2], 4, 4), jnp.float32)
    c4 = jax.random.normal(k4, (N, in_channels[3], 2, 2), jnp.float32)

    raw = init_params(kp, embedding_dim, in_channels, num_class)
    params = prepare_params(raw, num_class)

    fwd = jax.jit(lambda a, b, c, d: segformer_head_forward(a, b, c, d, params))
    pred, feat = fwd(c1, c2, c3, c4)
    jax.block_until_ready((pred, feat))

    ref_pred, ref_feat = reference_forward(c1, c2, c3, c4, params)
    assert pred.shape == (N, num_class, 16, 16), pred.shape
    assert feat.shape == (N, 256, 16, 16), feat.shape
    assert jnp.allclose(pred, ref_pred, atol=2e-3, rtol=2e-3)
    assert jnp.allclose(feat, ref_feat, atol=2e-3, rtol=2e-3)

    print("KERNEL_OK")
</pallas_src>

<mosaic_0001>
module attributes {stable_mosaic.version = 11 : i64} {
  func.func @_mlp_kernel(%arg0: i32, %arg1: memref<16x32xbf16, #tpu.memory_space<vmem>>, %arg2: memref<32x32xbf16, #tpu.memory_space<vmem>>, %arg3: memref<1x32xf32, #tpu.memory_space<vmem>>, %arg4: memref<16x32xbf16, #tpu.memory_space<vmem>>) attributes {dimension_semantics = [#tpu.dimension_semantics<parallel>], iteration_bounds = array<i64: 2>, scalar_prefetch = 0 : i64, scratch_operands = 0 : i64, tpu.core_type = #tpu.core_type<tc>, window_params = [{transform_indices = @transform_0, window_bounds = array<i64: 16, 32>}, {pipeline_mode = #tpu.pipeline_mode<synchronous>, transform_indices = @transform_1, window_bounds = array<i64: 32, 32>}, {pipeline_mode = #tpu.pipeline_mode<synchronous>, transform_indices = @transform_2, window_bounds = array<i64: 1, 32>}, {transform_indices = @transform_3, window_bounds = array<i64: 16, 32>}]} {
    %c0 = arith.constant 0 : index
    %c0_0 = arith.constant 0 : index
    %0 = vector.load %arg1[%c0, %c0_0] : memref<16x32xbf16, #tpu.memory_space<vmem>>, vector<16x32xbf16>
    %c0_1 = arith.constant 0 : index
    %c0_2 = arith.constant 0 : index
    %1 = vector.load %arg2[%c0_1, %c0_2] : memref<32x32xbf16, #tpu.memory_space<vmem>>, vector<32x32xbf16>
    %cst = arith.constant dense<0.000000e+00> : vector<16x32xf32>
    %2 = tpu.matmul %0, %1, %cst {dimension_numbers = #tpu.dot_dimension_numbers<[1], [0], [0], [1], [0, 0, 1, 1], [], []>} : vector<16x32xbf16>, vector<32x32xbf16>, vector<16x32xf32> -> vector<16x32xf32>
    %c0_3 = arith.constant 0 : index
    %c0_4 = arith.constant 0 : index
    %3 = vector.load %arg3[%c0_3, %c0_4] : memref<1x32xf32, #tpu.memory_space<vmem>>, vector<1x32xf32>
    %4 = vector.broadcast %3 : vector<1x32xf32> to vector<16x32xf32>
    %5 = arith.addf %2, %4 : vector<16x32xf32>
    %6 = arith.truncf %5 : vector<16x32xf32> to vector<16x32xbf16>
    %c0_5 = arith.constant 0 : index
    %c0_6 = arith.constant 0 : index
    %7 = vector.load %arg4[%c0_5, %c0_6] : memref<16x32xbf16, #tpu.memory_space<vmem>>, vector<16x32xbf16>
    tpu.vector_store %arg4[%c0_5, %c0_6], %6 {strides = array<i32>} : memref<16x32xbf16, #tpu.memory_space<vmem>>, vector<16x32xbf16>,
    return
  }
  func.func @transform_0(%arg0: i32) -> (i32, i32) {
    %c0_i32 = arith.constant 0 : i32
    %c0_i32_0 = arith.constant 0 : i32
    return %arg0, %c0_i32 : i32, i32
  }
  func.func @transform_1(%arg0: i32) -> (i32, i32) {
    %c0_i32 = arith.constant 0 : i32
    %c0_i32_0 = arith.constant 0 : i32
    %c0_i32_1 = arith.constant 0 : i32
    return %c0_i32, %c0_i32_0 : i32, i32
  }
  func.func @transform_2(%arg0: i32) -> (i32, i32) {
    %c0_i32 = arith.constant 0 : i32
    %c0_i32_0 = arith.constant 0 : i32
    %c0_i32_1 = arith.constant 0 : i32
    return %c0_i32, %c0_i32_0 : i32, i32
  }
  func.func @transform_3(%arg0: i32) -> (i32, i32) {
    %c0_i32 = arith.constant 0 : i32
    %c0_i32_0 = arith.constant 0 : i32
    return %arg0, %c0_i32 : i32, i32
  }
}

module attributes {stable_mosaic.version = 11 : i64} {
  func.func @_mlp_kernel(%arg0: i32, %arg1: memref<8x64xbf16, #tpu.memory_space<vmem>>, %arg2: memref<64x32xbf16, #tpu.memory_space<vmem>>, %arg3: memref<1x32xf32, #tpu.memory_space<vmem>>, %arg4: memref<8x32xbf16, #tpu.memory_space<vmem>>) attributes {dimension_semantics = [#tpu.dimension_semantics<parallel>], iteration_bounds = array<i64: 1>, scalar_prefetch = 0 : i64, scratch_operands = 0 : i64, tpu.core_type = #tpu.core_type<tc>, window_params = [{transform_indices = @transform_0, window_bounds = array<i64: 8, 64>}, {pipeline_mode = #tpu.pipeline_mode<synchronous>, transform_indices = @transform_1, window_bounds = array<i64: 64, 32>}, {pipeline_mode = #tpu.pipeline_mode<synchronous>, transform_indices = @transform_2, window_bounds = array<i64: 1, 32>}, {transform_indices = @transform_3, window_bounds = array<i64: 8, 32>}]} {
    %c0 = arith.constant 0 : index
    %c0_0 = arith.constant 0 : index
    %0 = vector.load %arg1[%c0, %c0_0] : memref<8x64xbf16, #tpu.memory_space<vmem>>, vector<8x64xbf16>
    %c0_1 = arith.constant 0 : index
    %c0_2 = arith.constant 0 : index
    %1 = vector.load %arg2[%c0_1, %c0_2] : memref<64x32xbf16, #tpu.memory_space<vmem>>, vector<64x32xbf16>
    %cst = arith.constant dense<0.000000e+00> : vector<8x32xf32>
    %2 = tpu.matmul %0, %1, %cst {dimension_numbers = #tpu.dot_dimension_numbers<[1], [0], [0], [1], [0, 0, 1, 1], [], []>} : vector<8x64xbf16>, vector<64x32xbf16>, vector<8x32xf32> -> vector<8x32xf32>
    %c0_3 = arith.constant 0 : index
    %c0_4 = arith.constant 0 : index
    %3 = vector.load %arg3[%c0_3, %c0_4] : memref<1x32xf32, #tpu.memory_space<vmem>>, vector<1x32xf32>
    %4 = vector.broadcast %3 : vector<1x32xf32> to vector<8x32xf32>
    %5 = arith.addf %2, %4 : vector<8x32xf32>
    %6 = arith.truncf %5 : vector<8x32xf32> to vector<8x32xbf16>
    %c0_5 = arith.constant 0 : index
    %c0_6 = arith.constant 0 : index
    %7 = vector.load %arg4[%c0_5, %c0_6] : memref<8x32xbf16, #tpu.memory_space<vmem>>, vector<8x32xbf16>
    tpu.vector_store %arg4[%c0_5, %c0_6], %6 {strides = array<i32>} : memref<8x32xbf16, #tpu.memory_space<vmem>>, vector<8x32xbf16>,
    return
  }
  func.func @transform_0(%arg0: i32) -> (i32, i32) {
    %c0_i32 = arith.constant 0 : i32
    %c0_i32_0 = arith.constant 0 : i32
    return %arg0, %c0_i32 : i32, i32
  }
  func.func @transform_1(%arg0: i32) -> (i32, i32) {
    %c0_i32 = arith.constant 0 : i32
    %c0_i32_0 = arith.constant 0 : i32
    %c0_i32_1 = arith.constant 0 : i32
    return %c0_i32, %c0_i32_0 : i32, i32
  }
  func.func @transform_2(%arg0: i32) -> (i32, i32) {
    %c0_i32 = arith.constant 0 : i32
    %c0_i32_0 = arith.constant 0 : i32
    %c0_i32_1 = arith.constant 0 : i32
    return %c0_i32, %c0_i32_0 : i32, i32
  }
  func.func @transform_3(%arg0: i32) -> (i32, i32) {
    %c0_i32 = arith.constant 0 : i32
    %c0_i32_0 = arith.constant 0 : i32
    return %arg0, %c0_i32 : i32, i32
  }
}

module attributes {stable_mosaic.version = 11 : i64} {
  func.func @_mlp_kernel(%arg0: i32, %arg1: memref<64x16xbf16, #tpu.memory_space<vmem>>, %arg2: memref<16x32xbf16, #tpu.memory_space<vmem>>, %arg3: memref<1x32xf32, #tpu.memory_space<vmem>>, %arg4: memref<64x32xbf16, #tpu.memory_space<vmem>>) attributes {dimension_semantics = [#tpu.dimension_semantics<parallel>], iteration_bounds = array<i64: 2>, scalar_prefetch = 0 : i64, scratch_operands = 0 : i64, tpu.core_type = #tpu.core_type<tc>, window_params = [{transform_indices = @transform_0, window_bounds = array<i64: 64, 16>}, {pipeline_mode = #tpu.pipeline_mode<synchronous>, transform_indices = @transform_1, window_bounds = array<i64: 16, 32>}, {pipeline_mode = #tpu.pipeline_mode<synchronous>, transform_indices = @transform_2, window_bounds = array<i64: 1, 32>}, {transform_indices = @transform_3, window_bounds = array<i64: 64, 32>}]} {
    %c0 = arith.constant 0 : index
    %c0_0 = arith.constant 0 : index
    %0 = vector.load %arg1[%c0, %c0_0] : memref<64x16xbf16, #tpu.memory_space<vmem>>, vector<64x16xbf16>
    %c0_1 = arith.constant 0 : index
    %c0_2 = arith.constant 0 : index
    %1 = vector.load %arg2[%c0_1, %c0_2] : memref<16x32xbf16, #tpu.memory_space<vmem>>, vector<16x32xbf16>
    %cst = arith.constant dense<0.000000e+00> : vector<64x32xf32>
    %2 = tpu.matmul %0, %1, %cst {dimension_numbers = #tpu.dot_dimension_numbers<[1], [0], [0], [1], [0, 0, 1, 1], [], []>} : vector<64x16xbf16>, vector<16x32xbf16>, vector<64x32xf32> -> vector<64x32xf32>
    %c0_3 = arith.constant 0 : index
    %c0_4 = arith.constant 0 : index
    %3 = vector.load %arg3[%c0_3, %c0_4] : memref<1x32xf32, #tpu.memory_space<vmem>>, vector<1x32xf32>
    %4 = vector.broadcast %3 : vector<1x32xf32> to vector<64x32xf32>
    %5 = arith.addf %2, %4 : vector<64x32xf32>
    %6 = arith.truncf %5 : vector<64x32xf32> to vector<64x32xbf16>
    %c0_5 = arith.constant 0 : index
    %c0_6 = arith.constant 0 : index
    %7 = vector.load %arg4[%c0_5, %c0_6] : memref<64x32xbf16, #tpu.memory_space<vmem>>, vector<64x32xbf16>
    tpu.vector_store %arg4[%c0_5, %c0_6], %6 {strides = array<i32>} : memref<64x32xbf16, #tpu.memory_space<vmem>>, vector<64x32xbf16>,
    return
  }
  func.func @transform_0(%arg0: i32) -> (i32, i32) {
    %c0_i32 = arith.constant 0 : i32
    %c0_i32_0 = arith.constant 0 : i32
    return %arg0, %c0_i32 : i32, i32
  }
  func.func @transform_1(%arg0: i32) -> (i32, i32) {
    %c0_i32 = arith.constant 0 : i32
    %c0_i32_0 = arith.constant 0 : i32
    %c0_i32_1 = arith.constant 0 : i32
    return %c0_i32, %c0_i32_0 : i32, i32
  }
  func.func @transform_2(%arg0: i32) -> (i32, i32) {
    %c0_i32 = arith.constant 0 : i32
    %c0_i32_0 = arith.constant 0 : i32
    %c0_i32_1 = arith.constant 0 : i32
    return %c0_i32, %c0_i32_0 : i32, i32
  }
  func.func @transform_3(%arg0: i32) -> (i32, i32) {
    %c0_i32 = arith.constant 0 : i32
    %c0_i32_0 = arith.constant 0 : i32
    return %arg0, %c0_i32 : i32, i32
  }
}

module attributes {stable_mosaic.version = 11 : i64} {
  func.func @_head_kernel(%arg0: i32, %arg1: memref<256x32xbf16, #tpu.memory_space<vmem>>, %arg2: memref<256x32xbf16, #tpu.memory_space<vmem>>, %arg3: memref<256x32xbf16, #tpu.memory_space<vmem>>, %arg4: memref<256x8xbf16, #tpu.memory_space<vmem>>, %arg5: memref<32x32xbf16, #tpu.memory_space<vmem>>, %arg6: memref<32x32xbf16, #tpu.memory_space<vmem>>, %arg7: memref<32x32xbf16, #tpu.memory_space<vmem>>, %arg8: memref<8x32xbf16, #tpu.memory_space<vmem>>, %arg9: memref<1x32xf32, #tpu.memory_space<vmem>>, %arg10: memref<32x384xbf16, #tpu.memory_space<vmem>>, %arg11: memref<1x384xf32, #tpu.memory_space<vmem>>, %arg12: memref<256x128xf32, #tpu.memory_space<vmem>>, %arg13: memref<256x256xf32, #tpu.memory_space<vmem>>) attributes {dimension_semantics = [#tpu.dimension_semantics<parallel>], iteration_bounds = array<i64: 2>, scalar_prefetch = 0 : i64, scratch_operands = 0 : i64, tpu.core_type = #tpu.core_type<tc>, window_params = [{transform_indices = @transform_0, window_bounds = array<i64: 256, 32>}, {transform_indices = @transform_1, window_bounds = array<i64: 256, 32>}, {transform_indices = @transform_2, window_bounds = array<i64: 256, 32>}, {transform_indices = @transform_3, window_bounds = array<i64: 256, 8>}, {pipeline_mode = #tpu.pipeline_mode<synchronous>, transform_indices = @transform_4, window_bounds = array<i64: 32, 32>}, {pipeline_mode = #tpu.pipeline_mode<synchronous>, transform_indices = @transform_5, window_bounds = array<i64: 32, 32>}, {pipeline_mode = #tpu.pipeline_mode<synchronous>, transform_indices = @transform_6, window_bounds = array<i64: 32, 32>}, {pipeline_mode = #tpu.pipeline_mode<synchronous>, transform_indices = @transform_7, window_bounds = array<i64: 8, 32>}, {pipeline_mode = #tpu.pipeline_mode<synchronous>, transform_indices = @transform_8, window_bounds = array<i64: 1, 32>}, {pipeline_mode = #tpu.pipeline_mode<synchronous>, transform_indices = @transform_9, window_bounds = array<i64: 32, 384>}, {pipeline_mode = #tpu.pipeline_mode<synchronous>, transform_indices = @transform_10, window_bounds = array<i64: 1, 384>}, {transform_indices = @transform_11, window_bounds = array<i64: 256, 128>}, {transform_indices = @transform_12, window_bounds = array<i64: 256, 256>}]} {
    %c0 = arith.constant 0 : index
    %c0_0 = arith.constant 0 : index
    %0 = vector.load %arg1[%c0, %c0_0] : memref<256x32xbf16, #tpu.memory_space<vmem>>, vector<256x32xbf16>
    %c0_1 = arith.constant 0 : index
    %c0_2 = arith.constant 0 : index
    %1 = vector.load %arg5[%c0_1, %c0_2] : memref<32x32xbf16, #tpu.memory_space<vmem>>, vector<32x32xbf16>
    %cst = arith.constant dense<0.000000e+00> : vector<256x32xf32>
    %2 = tpu.matmul %0, %1, %cst {dimension_numbers = #tpu.dot_dimension_numbers<[1], [0], [0], [1], [0, 0, 1, 1], [], []>} : vector<256x32xbf16>, vector<32x32xbf16>, vector<256x32xf32> -> vector<256x32xf32>
    %c0_3 = arith.constant 0 : index
    %c0_4 = arith.constant 0 : index
    %3 = vector.load %arg2[%c0_3, %c0_4] : memref<256x32xbf16, #tpu.memory_space<vmem>>, vector<256x32xbf16>
    %c0_5 = arith.constant 0 : index
    %c0_6 = arith.constant 0 : index
    %4 = vector.load %arg6[%c0_5, %c0_6] : memref<32x32xbf16, #tpu.memory_space<vmem>>, vector<32x32xbf16>
    %cst_7 = arith.constant dense<0.000000e+00> : vector<256x32xf32>
    %5 = tpu.matmul %3, %4, %cst_7 {dimension_numbers = #tpu.dot_dimension_numbers<[1], [0], [0], [1], [0, 0, 1, 1], [], []>} : vector<256x32xbf16>, vector<32x32xbf16>, vector<256x32xf32> -> vector<256x32xf32>
    %6 = arith.addf %2, %5 : vector<256x32xf32>
    %c0_8 = arith.constant 0 : index
    %c0_9 = arith.constant 0 : index
    %7 = vector.load %arg3[%c0_8, %c0_9] : memref<256x32xbf16, #tpu.memory_space<vmem>>, vector<256x32xbf16>
    %c0_10 = arith.constant 0 : index
    %c0_11 = arith.constant 0 : index
    %8 = vector.load %arg7[%c0_10, %c0_11] : memref<32x32xbf16, #tpu.memory_space<vmem>>, vector<32x32xbf16>
    %cst_12 = arith.constant dense<0.000000e+00> : vector<256x32xf32>
    %9 = tpu.matmul %7, %8, %cst_12 {dimension_numbers = #tpu.dot_dimension_numbers<[1], [0], [0], [1], [0, 0, 1, 1], [], []>} : vector<256x32xbf16>, vector<32x32xbf16>, vector<256x32xf32> -> vector<256x32xf32>
    %10 = arith.addf %6, %9 : vector<256x32xf32>
    %c0_13 = arith.constant 0 : index
    %c0_14 = arith.constant 0 : index
    %11 = vector.load %arg4[%c0_13, %c0_14] : memref<256x8xbf16, #tpu.memory_space<vmem>>, vector<256x8xbf16>
    %c0_15 = arith.constant 0 : index
    %c0_16 = arith.constant 0 : index
    %12 = vector.load %arg8[%c0_15, %c0_16] : memref<8x32xbf16, #tpu.memory_space<vmem>>, vector<8x32xbf16>
    %cst_17 = arith.constant dense<0.000000e+00> : vector<256x32xf32>
    %13 = tpu.matmul %11, %12, %cst_17 {dimension_numbers = #tpu.dot_dimension_numbers<[1], [0], [0], [1], [0, 0, 1, 1], [], []>} : vector<256x8xbf16>, vector<8x32xbf16>, vector<256x32xf32> -> vector<256x32xf32>
    %14 = arith.addf %10, %13 : vector<256x32xf32>
    %c0_18 = arith.constant 0 : index
    %c0_19 = arith.constant 0 : index
    %15 = vector.load %arg9[%c0_18, %c0_19] : memref<1x32xf32, #tpu.memory_space<vmem>>, vector<1x32xf32>
    %16 = vector.broadcast %15 : vector<1x32xf32> to vector<256x32xf32>
    %17 = arith.addf %14, %16 : vector<256x32xf32>
    %cst_20 = arith.constant 0.000000e+00 : f32
    %18 = vector.broadcast %cst_20 : f32 to vector<256x32xf32>
    %19 = arith.maximumf %17, %18 : vector<256x32xf32>
    %20 = arith.truncf %19 : vector<256x32xf32> to vector<256x32xbf16>
    %c0_21 = arith.constant 0 : index
    %c0_22 = arith.constant 0 : index
    %21 = vector.load %arg10[%c0_21, %c0_22] : memref<32x384xbf16, #tpu.memory_space<vmem>>, vector<32x384xbf16>
    %cst_23 = arith.constant dense<0.000000e+00> : vector<256x384xf32>
    %22 = tpu.matmul %20, %21, %cst_23 {dimension_numbers = #tpu.dot_dimension_numbers<[1], [0], [0], [1], [0, 0, 1, 1], [], []>} : vector<256x32xbf16>, vector<32x384xbf16>, vector<256x384xf32> -> vector<256x384xf32>
    %c0_24 = arith.constant 0 : index
    %c0_25 = arith.constant 0 : index
    %23 = vector.load %arg11[%c0_24, %c0_25] : memref<1x384xf32, #tpu.memory_space<vmem>>, vector<1x384xf32>
    %24 = vector.broadcast %23 : vector<1x384xf32> to vector<256x384xf32>
    %25 = arith.addf %22, %24 : vector<256x384xf32>
    %26 = vector.extract_strided_slice %25 {offsets = [0, 0], sizes = [256, 256], strides = [1, 1]} : vector<256x384xf32> to vector<256x256xf32>
    %cst_26 = arith.constant 0.000000e+00 : f32
    %27 = vector.broadcast %cst_26 : f32 to vector<256x256xf32>
    %28 = arith.maximumf %26, %27 : vector<256x256xf32>
    %c0_27 = arith.constant 0 : index
    %c0_28 = arith.constant 0 : index
    %29 = vector.load %arg13[%c0_27, %c0_28] : memref<256x256xf32, #tpu.memory_space<vmem>>, vector<256x256xf32>
    tpu.vector_store %arg13[%c0_27, %c0_28], %28 {strides = array<i32>} : memref<256x256xf32, #tpu.memory_space<vmem>>, vector<256x256xf32>,
    %30 = vector.extract_strided_slice %25 {offsets = [0, 256], sizes = [256, 128], strides = [1, 1]} : vector<256x384xf32> to vector<256x128xf32>
    %c0_29 = arith.constant 0 : index
    %c0_30 = arith.constant 0 : index
    %31 = vector.load %arg12[%c0_29, %c0_30] : memref<256x128xf32, #tpu.memory_space<vmem>>, vector<256x128xf32>
    tpu.vector_store %arg12[%c0_29, %c0_30], %30 {strides = array<i32>} : memref<256x128xf32, #tpu.memory_space<vmem>>, vector<256x128xf32>,
    return
  }
  func.func @transform_0(%arg0: i32) -> (i32, i32) {
    %c0_i32 = arith.constant 0 : i32
    %c0_i32_0 = arith.constant 0 : i32
    return %arg0, %c0_i32 : i32, i32
  }
  func.func @transform_1(%arg0: i32) -> (i32, i32) {
    %c0_i32 = arith.constant 0 : i32
    %c0_i32_0 = arith.constant 0 : i32
    return %arg0, %c0_i32 : i32, i32
  }
  func.func @transform_2(%arg0: i32) -> (i32, i32) {
    %c0_i32 = arith.constant 0 : i32
    %c0_i32_0 = arith.constant 0 : i32
    return %arg0, %c0_i32 : i32, i32
  }
  func.func @transform_3(%arg0: i32) -> (i32, i32) {
    %c0_i32 = arith.constant 0 : i32
    %c0_i32_0 = arith.constant 0 : i32
    return %arg0, %c0_i32 : i32, i32
  }
  func.func @transform_4(%arg0: i32) -> (i32, i32) {
    %c0_i32 = arith.constant 0 : i32
    %c0_i32_0 = arith.constant 0 : i32
    %c0_i32_1 = arith.constant 0 : i32
    return %c0_i32, %c0_i32_0 : i32, i32
  }
  func.func @transform_5(%arg0: i32) -> (i32, i32) {
    %c0_i32 = arith.constant 0 : i32
    %c0_i32_0 = arith.constant 0 : i32
    %c0_i32_1 = arith.constant 0 : i32
    return %c0_i32, %c0_i32_0 : i32, i32
  }
  func.func @transform_6(%arg0: i32) -> (i32, i32) {
    %c0_i32 = arith.constant 0 : i32
    %c0_i32_0 = arith.constant 0 : i32
    %c0_i32_1 = arith.constant 0 : i32
    return %c0_i32, %c0_i32_0 : i32, i32
  }
  func.func @transform_7(%arg0: i32) -> (i32, i32) {
    %c0_i32 = arith.constant 0 : i32
    %c0_i32_0 = arith.constant 0 : i32
    %c0_i32_1 = arith.constant 0 : i32
    return %c0_i32, %c0_i32_0 : i32, i32
  }
  func.func @transform_8(%arg0: i32) -> (i32, i32) {
    %c0_i32 = arith.constant 0 : i32
    %c0_i32_0 = arith.constant 0 : i32
    %c0_i32_1 = arith.constant 0 : i32
    return %c0_i32, %c0_i32_0 : i32, i32
  }
  func.func @transform_9(%arg0: i32) -> (i32, i32) {
    %c0_i32 = arith.constant 0 : i32
    %c0_i32_0 = arith.constant 0 : i32
    %c0_i32_1 = arith.constant 0 : i32
    return %c0_i32, %c0_i32_0 : i32, i32
  }
  func.func @transform_10(%arg0: i32) -> (i32, i32) {
    %c0_i32 = arith.constant 0 : i32
    %c0_i32_0 = arith.constant 0 : i32
    %c0_i32_1 = arith.constant 0 : i32
    return %c0_i32, %c0_i32_0 : i32, i32
  }
  func.func @transform_11(%arg0: i32) -> (i32, i32) {
    %c0_i32 = arith.constant 0 : i32
    %c0_i32_0 = arith.constant 0 : i32
    return %arg0, %c0_i32 : i32, i32
  }
  func.func @transform_12(%arg0: i32) -> (i32, i32) {
    %c0_i32 = arith.constant 0 : i32
    %c0_i32_0 = arith.constant 0 : i32
    return %arg0, %c0_i32 : i32, i32
  }
}

</mosaic_0001>

<llo_original>
// kernel: _lambda_.4
$region0: #{_lambda_.4}
  #allocation0 [shape = 'u32[]', space=smem, size = 0x4, offset = 0x4, fixed_abs, tag = 'smem constant byte address 0x4 - core index']
  #allocation1 [shape = 'u32[144,128]{1,0:T(1,128)}', space=vmem, size = 0x12000, scoped, tag = 'internal scratch']
  %s0 = inlined_call_operand.vmem [shape: bf16[8,64], index: 0, kind: input, shape index: {}]
  %s1 = inlined_call_operand.vmem [shape: bf16[64,32], index: 1, kind: input, shape index: {}]
  %s2 = inlined_call_operand.vmem [shape: f32[1,32], index: 2, kind: input, shape index: {}]
  %s3 = inlined_call_operand.vmem [shape: bf16[8,32], index: 3, kind: output, shape index: {}]
  %s4 = sld [smem:[#allocation0]]
  $region22: #{_lambda_.4} parent=0
    _
  %s6 = ssub.s32 1, %s4
  %s7 = scalar_select 0, %s6, %s4
  // Predicated region
  $region2: #{_lambda_.4} parent=0 // pred_check
    _
  $region3: #{_lambda_.4} parent=0 // pred_check_branch
    %9 = sbr.rel (0) target = $region5
  $region4: #{_lambda_.4} parent=0 // pred_region
    _
  $region5: #{_lambda_.4} parent=0 // pred_fallthru
    _
  // Predicated region
  $region6: #{_lambda_.4} parent=0 // pred_check
    _
  $region7: #{_lambda_.4} parent=0 // pred_check_branch
    %11 = sbr.rel (0) target = $region9
  $region8: #{_lambda_.4} parent=0 // pred_region
    _
  $region9: #{_lambda_.4} parent=0 // pred_fallthru
    _
  // Predicated region
  $region10: #{_lambda_.4} parent=0 // pred_check
    _
  $region11: #{_lambda_.4} parent=0 // pred_check_branch
    %13 = sbr.rel (0) target = $region13
  $region12: #{_lambda_.4} parent=0 // pred_region
    _
  $region13: #{_lambda_.4} parent=0 // pred_fallthru
    _
  %v15 = vld [vmem:[%s0] sm:$0xf]
  %v16 = vld [vmem:[%s1] sm:$0xf]
  %v17 = vld [vmem:[%s1 + $0x4] sm:$0xf]
  %v18 = vld [vmem:[%s1 + $0x8] sm:$0xf]
  %v19 = vld [vmem:[%s1 + $0xc] sm:$0xf]
  %v20 = vld [vmem:[%s1 + $0x10] sm:$0xf]
  %v21 = vld [vmem:[%s1 + $0x14] sm:$0xf]
  %v22 = vld [vmem:[%s1 + $0x18] sm:$0xf]
  %v23 = vld [vmem:[%s1 + $0x1c] sm:$0xf]
  %v24 = vld [vmem:[%s2] sm:$0x1]
  %v26 = vlaneseq
  %v27 = vshrl.u32 %v26, 7
  %v28 = vsub.s32 0, %v27
  %v29 = vrot.slane %v24, %v28
  %v39 = vunpack.c.l.b16 %v16
  %v40 = vunpack.c.l.b16 %v17
  %v41 = vunpack.c.l.b16 %v18
  %v42 = vunpack.c.l.b16 %v19
  %v43 = vunpack.c.l.b16 %v20
  %v44 = vunpack.c.l.b16 %v21
  %v45 = vunpack.c.l.b16 %v22
  %v46 = vunpack.c.l.b16 %v23
  %v47 = vpack.c.b16 %v40, %v39
  %v48 = vpack.c.b16 %v42, %v41
  %v49 = vpack.c.b16 %v44, %v43
  %v50 = vpack.c.b16 %v46, %v45
  %vm55 = vcmask 523264
  %v57 = vsel %vm55, %v15, 0
  %59 = vmatprep.subr.bf16.mxu0 0
  %60 = vmatpush1.bf16.msra.mxu0 %v47
  %61 = vmatprep.subr.bf16.mxu0 0
  %62 = vmatpush1.bf16.msra.mxu0 %v48
  %63 = vmatprep.subr.bf16.mxu0 0
  %64 = vmatpush1.bf16.msra.mxu0 %v49
  %65 = vmatprep.subr.bf16.mxu0 0
  %66 = vmatpush1.bf16.msra.mxu0 %v50
  %67 = vmatprep.subr.bf16.mxu0 0
  %68 = vmatpush1.bf16.msra.mxu0 0
  %69 = vmatprep.subr.bf16.mxu0 0
  %70 = vmatpush1.bf16.msra.mxu0 0
  %71 = vmatprep.subr.bf16.mxu0 0
  %72 = vmatpush1.bf16.msra.mxu0 0
  %73 = vmatprep.subr.bf16.mxu0 0
  %74 = vmatpush1.bf16.msra.mxu0 0
  %75 = vmatprep.subr.bf16.mxu0 0
  %76 = vmatpush1.bf16.msra.mxu0 0
  %77 = vmatprep.subr.bf16.mxu0 0
  %78 = vmatpush1.bf16.msra.mxu0 0
  %79 = vmatprep.subr.bf16.mxu0 0
  %80 = vmatpush1.bf16.msra.mxu0 0
  %81 = vmatprep.subr.bf16.mxu0 0
  %82 = vmatpush1.bf16.msra.mxu0 0
  %83 = vmatprep.subr.bf16.mxu0 0
  %84 = vmatpush1.bf16.msra.mxu0 0
  %85 = vmatprep.subr.bf16.mxu0 0
  %86 = vmatpush1.bf16.msra.mxu0 0
  %87 = vmatprep.subr.bf16.mxu0 0
  %88 = vmatpush1.bf16.msra.mxu0 0
  %89 = vmatprep.subr.bf16.mxu0 0
  %90 = vmatpush1.bf16.msra.mxu0 0
  %91 = vmatprep.mubr.bf16.mxu0 0
  %92 = vmatmul.mubr.bf16.gmra.mrb[0].mxu0 %v57
  %v93 = vpop.f32.mrb[0].mxu0
  %v94 = vadd.f32 %v29, %v93
  %v95 = vpop.f32.mrb[0].mxu0
  %v96 = vpop.f32.mrb[0].mxu0
  %v97 = vpop.f32.mrb[0].mxu0
  %98 = vdwg.mxu0
  %v99 = vpack.c.bf16 %v94, %v94
  %vm100 = vcmask 257024
  %101 = vst.msk [vmem:[%s3] sm:$0xf] %vm100, %v99
  // Predicated region
  $region14: #{_lambda_.4} parent=0 // pred_check
    _
  $region15: #{_lambda_.4} parent=0 // pred_check_branch
    %103 = sbr.rel (0) target = $region17
  $region16: #{_lambda_.4} parent=0 // pred_region
    _
  $region17: #{_lambda_.4} parent=0 // pred_fallthru
    _
  // Predicated region
  $region18: #{_lambda_.4} parent=0 // pred_check
    _
  $region19: #{_lambda_.4} parent=0 // pred_check_branch
    %105 = sbr.rel (0) target = $region21
  $region20: #{_lambda_.4} parent=0 // pred_region
    _
  $region21: #{_lambda_.4} parent=0 // pred_fallthru
    _

// kernel: _lambda_.5
$region0: #{_lambda_.5}
  #allocation0 [shape = 'u32[]', space=smem, size = 0x4, offset = 0x4, fixed_abs, tag = 'smem constant byte address 0x4 - core index']
  #allocation1 [shape = 'u32[144,128]{1,0:T(1,128)}', space=vmem, size = 0x12000, scoped, tag = 'internal scratch']
  %s0 = inlined_call_operand.vmem [shape: bf16[32,32], index: 0, kind: input, shape index: {}]
  %s1 = inlined_call_operand.vmem [shape: bf16[32,32], index: 1, kind: input, shape index: {}]
  %s2 = inlined_call_operand.vmem [shape: f32[1,32], index: 2, kind: input, shape index: {}]
  %s3 = inlined_call_operand.vmem [shape: bf16[32,32], index: 3, kind: output, shape index: {}]
  %s4 = sld [smem:[#allocation0]]
  $region45: #{_lambda_.5} parent=0
    _
  %s6 = ssub.s32 1, %s4
  %s7 = scalar_select 0, %s6, %s4
  loop: start=0, step=1, limit=4
  $region2: #{_lambda_.5} parent=0 // loop_pre_header
    _
  $region3: #{_lambda_.5} parent=0 // loop_header
    %s9 = sphi 0, %s13
    %p10 = scmp.ge.s32.totalorder %s9, 4
    %s19 = sphi 0, %s21
    %s22 = sphi 0, %s19
    %s23 = sphi 0, %s22
    %s39 = sphi 0, %s23
    %s43 = sphi 0, %s43
    %s45 = sphi 0, %s43
    %s46 = sphi 0, %s45
    %s60 = sphi 0, %s46
    %s64 = sphi 0, %s64
    %s66 = sphi 0, %s64
    %s67 = sphi 0, %s66
    %s81 = sphi 0, %s67
    %s87 = sphi 0, %s89
    %s90 = sphi 0, %s87
    %s91 = sphi 0, %s90
    %s107 = sphi 0, %s91
  $region4: #{_lambda_.5} parent=0 // loop_header_branch
    %12 = sbr.rel (%p10) target = $region8
  $region5: #{_lambda_.5} parent=0 // loop_body
    %s14 = ssub.s32 %s9, 1
    %s15 = ssub.s32 %s9, 2
    %s16 = sadd.s32 %s9, 1
    %s17 = ssub.s32 %s9, %s16
    %p18 = scmp.eq.s32.totalorder %s17, 0
    %s20 = sadd.s32 %s19, 1
    %s21 = scalar_select %p18, %s19, %s20
    %p24 = pneg %p18
    %p25 = scmp.eq.s32.totalorder %s9, 1
    %p26 = por %p24, %p25
    %p27 = scmp.ne.s32.totalorder %s19, %s22
    %p28 = scmp.eq.s32.totalorder %s9, 0
    %p29 = por %p27, %p28
    %p30 = scmp.ne.s32.totalorder %s19, %s22
    %p31 = scmp.eq.s32.totalorder %s14, 1
    %p32 = por %p30, %p31
    %p33 = scmp.ne.s32.totalorder %s22, %s23
    %p34 = scmp.eq.s32.totalorder %s14, 0
    %p35 = por %p33, %p34
    %p36 = scmp.ne.s32.totalorder %s22, %s23
    %p37 = scmp.eq.s32.totalorder %s15, 1
    %p38 = por %p36, %p37
    %p40 = scmp.ne.s32.totalorder %s23, %s39
    %p41 = scmp.eq.s32.totalorder %s15, 0
    %p42 = por %p40, %p41
    %s44 = sadd.s32 %s43, 1
    %p47 = scmp.eq.s32.totalorder %s9, 1
    %p48 = scmp.ne.s32.totalorder %s43, %s45
    %p49 = scmp.eq.s32.totalorder %s9, 0
    %p50 = por %p48, %p49
    %p51 = scmp.ne.s32.totalorder %s43, %s45
    %p52 = scmp.eq.s32.totalorder %s14, 1
    %p53 = por %p51, %p52
    %p54 = scmp.ne.s32.totalorder %s45, %s46
    %p55 = scmp.eq.s32.totalorder %s14, 0
    %p56 = por %p54, %p55
    %p57 = scmp.ne.s32.totalorder %s45, %s46
    %p58 = scmp.eq.s32.totalorder %s15, 1
    %p59 = por %p57, %p58
    %p61 = scmp.ne.s32.totalorder %s46, %s60
    %p62 = scmp.eq.s32.totalorder %s15, 0
    %p63 = por %p61, %p62
    %s65 = sadd.s32 %s64, 1
    %p68 = scmp.eq.s32.totalorder %s9, 1
    %p69 = scmp.ne.s32.totalorder %s64, %s66
    %p70 = scmp.eq.s32.totalorder %s9, 0
    %p71 = por %p69, %p70
    %p72 = scmp.ne.s32.totalorder %s64, %s66
    %p73 = scmp.eq.s32.totalorder %s14, 1
    %p74 = por %p72, %p73
    %p75 = scmp.ne.s32.totalorder %s66, %s67
    %p76 = scmp.eq.s32.totalorder %s14, 0
    %p77 = por %p75, %p76
    %p78 = scmp.ne.s32.totalorder %s66, %s67
    %p79 = scmp.eq.s32.totalorder %s15, 1
    %p80 = por %p78, %p79
    %p82 = scmp.ne.s32.totalorder %s67, %s81
    %p83 = scmp.eq.s32.totalorder %s15, 0
    %p84 = por %p82, %p83
    %s85 = ssub.s32 %s9, %s16
    %p86 = scmp.eq.s32.totalorder %s85, 0
    %s88 = sadd.s32 %s87, 1
    %s89 = scalar_select %p86, %s87, %s88
    %p92 = pneg %p86
    %p93 = scmp.eq.s32.totalorder %s9, 1
    %p94 = por %p92, %p93
    %p95 = scmp.ne.s32.totalorder %s87, %s90
    %p96 = scmp.eq.s32.totalorder %s9, 0
    %p97 = por %p95, %p96
    %p98 = scmp.ne.s32.totalorder %s87, %s90
    %p99 = scmp.eq.s32.totalorder %s14, 1
    %p100 = por %p98, %p99
    %p101 = scmp.ne.s32.totalorder %s90, %s91
    %p102 = scmp.eq.s32.totalorder %s14, 0
    %p103 = por %p101, %p102
    %p104 = scmp.ne.s32.totalorder %s90, %s91
    %p105 = scmp.eq.s32.totalorder %s15, 1
    %p106 = por %p104, %p105
    %p108 = scmp.ne.s32.totalorder %s91, %s107
    %p109 = scmp.eq.s32.totalorder %s15, 0
    %p110 = por %p108, %p109
    %p111 = scmp.le.s32.totalorder 1, %s9
    %p112 = scmp.lt.s32.totalorder %s9, 3
    %p113 = pnand %p111, %p112
    %p114 = pneg %p113
    // Predicated region
    $region9: #{_lambda_.5} parent=5 // pred_check
      _
    $region10: #{_lambda_.5} parent=5 // pred_check_branch
      %116 = sbr.rel (%p113) target = $region12
    $region11: #{_lambda_.5} parent=5 // pred_region
      %s117 = ssub.s32 %s9, 1
      // Predicated region
      $region13: #{_lambda_.5} parent=11 // pred_check
        %p118 = pneg %p56
      $region14: #{_lambda_.5} parent=11 // pred_check_branch
        %120 = sbr.rel (%p118) target = $region16
      $region15: #{_lambda_.5} parent=11 // pred_region
        _
      $region16: #{_lambda_.5} parent=11 // pred_fallthru
        _
      // Predicated region
      $region17: #{_lambda_.5} parent=11 // pred_check
        %p121 = pneg %p77
      $region18: #{_lambda_.5} parent=11 // pred_check_branch
        %123 = sbr.rel (%p121) target = $region20
      $region19: #{_lambda_.5} parent=11 // pred_region
        _
      $region20: #{_lambda_.5} parent=11 // pred_fallthru
        _
    $region12: #{_lambda_.5} parent=5 // pred_fallthru
      _
    %p124 = scmp.lt.s32.totalorder %s9, 2
    // Predicated region
    $region21: #{_lambda_.5} parent=5 // pred_check
      %p125 = pneg %p124
    $region22: #{_lambda_.5} parent=5 // pred_check_branch
      %127 = sbr.rel (%p125) target = $region24
    $region23: #{_lambda_.5} parent=5 // pred_region
      // Predicated region
      $region25: #{_lambda_.5} parent=23 // pred_check
        %p128 = pneg %p29
      $region26: #{_lambda_.5} parent=23 // pred_check_branch
        %130 = sbr.rel (%p128) target = $region28
      $region27: #{_lambda_.5} parent=23 // pred_region
        %s131 = smul.u32 2, %s9
        %p132 = scmp.lt.s32.totalorder %s131, 3
        %s133 = scalar_select %p132, %s131, 3
        %s134 = smul.addr %s133, 4
        %s135 = scalar_lea.vmem %s0, %s134
        %s136 = smul.u32 2, %s9
      $region28: #{_lambda_.5} parent=23 // pred_fallthru
        _
    $region24: #{_lambda_.5} parent=5 // pred_fallthru
      _
    %p137 = scmp.le.s32.totalorder 1, %s9
    %p138 = scmp.lt.s32.totalorder %s9, 3
    %p139 = pnand %p137, %p138
    %p140 = pneg %p139
    // Predicated region
    $region29: #{_lambda_.5} parent=5 // pred_check
      _
    $region30: #{_lambda_.5} parent=5 // pred_check_branch
      %142 = sbr.rel (%p139) target = $region32
    $region31: #{_lambda_.5} parent=5 // pred_region
      %s143 = ssub.s32 %s9, 1
      %s144 = smul.u32 2, %s14
      %p145 = scmp.lt.s32.totalorder %s144, 3
      %s146 = scalar_select %p145, %s144, 3
      %s147 = smul.addr %s146, 4
      %s148 = scalar_lea.vmem %s0, %s147
      %p149 = pneg %p35
      %p150 = pneg %p32
      %p151 = pneg %p56
      %p152 = pneg %p53
      %p153 = pneg %p77
      %p154 = pneg %p74
      %p155 = pneg %p103
      %p156 = pneg %p100
      %s157 = smul.u32 2, %s14
      %p158 = scmp.lt.s32.totalorder %s157, 3
      %s159 = scalar_select %p158, %s157, 3
      %s160 = smul.addr %s159, 4
      %s161 = scalar_lea.vmem %s3, %s160
      %s162 = smul.u32 2, %s14
      %p163 = scmp.lt.s32.totalorder %s162, 3
      %s164 = scalar_select %p163, %s162, 3
      %s165 = smul.addr %s164, 4
      %s166 = scalar_lea.vmem %s0, %s165
      %s167 = smul.u32 2, %s14
      %s168 = smul.u32 2, %s14
      %p169 = scmp.lt.s32.totalorder %s168, 3
      %s170 = scalar_select %p169, %s168, 3
      %s171 = smul.addr %s170, 4
      %s172 = scalar_lea.vmem %s3, %s171
      %s173 = smul.u32 2, %s14
      %v175 = vld [vmem:[%s166] sm:$0xf]
      %v176 = vld [vmem:[%s166 + $0x4] sm:$0xf]
      %v177 = vld [vmem:[%s1] sm:$0xf]
      %v178 = vld [vmem:[%s1 + $0x4] sm:$0xf]
      %v179 = vld [vmem:[%s1 + $0x8] sm:$0xf]
      %v180 = vld [vmem:[%s1 + $0xc] sm:$0xf]
      %v181 = vld [vmem:[%s2] sm:$0x1]
      %v183 = vlaneseq
      %v184 = vshrl.u32 %v183, 7
      %v185 = vsub.s32 0, %v184
      %v186 = vrot.slane %v181, %v185
      %v190 = vunpack.c.l.b16 %v175
      %v191 = vunpack.c.l.b16 %v176
      %v192 = vpack.c.b16 %v191, %v190
      %v197 = vunpack.c.l.b16 %v177
      %v198 = vunpack.c.l.b16 %v178
      %v199 = vunpack.c.l.b16 %v179
      %v200 = vunpack.c.l.b16 %v180
      %v201 = vpack.c.b16 %v198, %v197
      %v202 = vpack.c.b16 %v200, %v199
      %vm205 = vcmask 261120
      %v207 = vsel %vm205, %v192, 0
      %209 = vmatprep.subr.bf16.mxu0 0
      %210 = vmatpush1.bf16.msra.mxu0 %v201
      %211 = vmatprep.subr.bf16.mxu0 0
      %212 = vmatpush1.bf16.msra.mxu0 %v202
      %213 = vmatprep.subr.bf16.mxu0 0
      %214 = vmatpush1.bf16.msra.mxu0 0
      %215 = vmatprep.subr.bf16.mxu0 0
      %216 = vmatpush1.bf16.msra.mxu0 0
      %217 = vmatprep.subr.bf16.mxu0 0
      %218 = vmatpush1.bf16.msra.mxu0 0
      %219 = vmatprep.subr.bf16.mxu0 0
      %220 = vmatpush1.bf16.msra.mxu0 0
      %221 = vmatprep.subr.bf16.mxu0 0
      %222 = vmatpush1.bf16.msra.mxu0 0
      %223 = vmatprep.subr.bf16.mxu0 0
      %224 = vmatpush1.bf16.msra.mxu0 0
      %225 = vmatprep.subr.bf16.mxu0 0
      %226 = vmatpush1.bf16.msra.mxu0 0
      %227 = vmatprep.subr.bf16.mxu0 0
      %228 = vmatpush1.bf16.msra.mxu0 0
      %229 = vmatprep.subr.bf16.mxu0 0
      %230 = vmatpush1.bf16.msra.mxu0 0
      %231 = vmatprep.subr.bf16.mxu0 0
      %232 = vmatpush1.bf16.msra.mxu0 0
      %233 = vmatprep.subr.bf16.mxu0 0
      %234 = vmatpush1.bf16.msra.mxu0 0
      %235 = vmatprep.subr.bf16.mxu0 0
      %236 = vmatpush1.bf16.msra.mxu0 0
      %237 = vmatprep.subr.bf16.mxu0 0
      %238 = vmatpush1.bf16.msra.mxu0 0
      %239 = vmatprep.subr.bf16.mxu0 0
      %240 = vmatpush1.bf16.msra.mxu0 0
      %241 = vmatprep.mubr.bf16.mxu0 0
      %242 = vmatmul.mubr.bf16.gmra.mrb[0].mxu0 %v207
      %v243 = vpop.f32.mrb[0].mxu0
      %v244 = vadd.f32 %v186, %v243
      %v245 = vpop.f32.mrb[0].mxu0
      %v246 = vpop.f32.mrb[0].mxu0
      %v247 = vadd.f32 %v186, %v246
      %v248 = vpop.f32.mrb[0].mxu0
      %249 = vdwg.mxu0
      %v250 = vpack.c.bf16 %v247, %v244
      %v252 = vunpack.c.l.b16 %v250
      %v253 = vunpack.c.h.b16 %v250
      %v254 = vpack.c.b16 %v252, %v252
      %v255 = vpack.c.b16 %v253, %v253
      %vm258 = vcmask 257024
      %259 = vst.msk [vmem:[%s172] sm:$0xf] %vm258, %v254
      %260 = vst.msk [vmem:[%s172 + $0x4] sm:$0xf] %vm258, %v255
      %s261 = smul.u32 2, %s14
      %p262 = scmp.lt.s32.totalorder %s261, 3
      %s263 = scalar_select %p262, %s261, 3
      %s264 = smul.addr %s263, 4
      %s265 = scalar_lea.vmem %s3, %s264
      // Predicated region
      $region33: #{_lambda_.5} parent=31 // pred_check
        %p266 = pneg %p100
      $region34: #{_lambda_.5} parent=31 // pred_check_branch
        %268 = sbr.rel (%p266) target = $region36
      $region35: #{_lambda_.5} parent=31 // pred_region
        %s269 = smul.u32 2, %s14
      $region36: #{_lambda_.5} parent=31 // pred_fallthru
        _
    $region32: #{_lambda_.5} parent=5 // pred_fallthru
      _
    %p270 = scmp.le.s32.totalorder 2, %s9
    // Predicated region
    $region37: #{_lambda_.5} parent=5 // pred_check
      %p271 = pneg %p270
    $region38: #{_lambda_.5} parent=5 // pred_check_branch
      %273 = sbr.rel (%p271) target = $region40
    $region39: #{_lambda_.5} parent=5 // pred_region
      %s274 = ssub.s32 %s9, 2
      // Predicated region
      $region41: #{_lambda_.5} parent=39 // pred_check
        %p275 = pneg %p106
      $region42: #{_lambda_.5} parent=39 // pred_check_branch
        %277 = sbr.rel (%p275) target = $region44
      $region43: #{_lambda_.5} parent=39 // pred_region
        %s278 = smul.u32 2, %s15
        %p279 = scmp.lt.s32.totalorder %s278, 3
        %s280 = scalar_select %p279, %s278, 3
        %s281 = smul.addr %s280, 4
        %s282 = scalar_lea.vmem %s3, %s281
      $region44: #{_lambda_.5} parent=39 // pred_fallthru
        _
    $region40: #{_lambda_.5} parent=5 // pred_fallthru
      _
  $region6: #{_lambda_.5} parent=0 // loop_footer
    %s13 = sadd.s32 1, %s9
  $region7: #{_lambda_.5} parent=0 // loop_footer_branch
    %8 = sbr.rel target = $region3
  $region8: #{_lambda_.5} parent=0 // loop_exit
    _

// kernel: _lambda_.6
$region0: #{_lambda_.6}
  #allocation0 [shape = 'u32[]', space=smem, size = 0x4, offset = 0x4, fixed_abs, tag = 'smem constant byte address 0x4 - core index']
  #allocation1 [shape = 'u32[144,128]{1,0:T(1,128)}', space=vmem, size = 0x12000, scoped, tag = 'internal scratch']
  %s0 = inlined_call_operand.vmem [shape: bf16[128,16], index: 0, kind: input, shape index: {}]
  %s1 = inlined_call_operand.vmem [shape: bf16[16,32], index: 1, kind: input, shape index: {}]
  %s2 = inlined_call_operand.vmem [shape: f32[1,32], index: 2, kind: input, shape index: {}]
  %s3 = inlined_call_operand.vmem [shape: bf16[128,32], index: 3, kind: output, shape index: {}]
  %s4 = sld [smem:[#allocation0]]
  $region45: #{_lambda_.6} parent=0
    _
  %s6 = ssub.s32 1, %s4
  %s7 = scalar_select 0, %s6, %s4
  loop: start=0, step=1, limit=4
  $region2: #{_lambda_.6} parent=0 // loop_pre_header
    _
  $region3: #{_lambda_.6} parent=0 // loop_header
    %s9 = sphi 0, %s13
    %p10 = scmp.ge.s32.totalorder %s9, 4
    %s19 = sphi 0, %s21
    %s22 = sphi 0, %s19
    %s23 = sphi 0, %s22
    %s39 = sphi 0, %s23
    %s43 = sphi 0, %s43
    %s45 = sphi 0, %s43
    %s46 = sphi 0, %s45
    %s60 = sphi 0, %s46
    %s64 = sphi 0, %s64
    %s66 = sphi 0, %s64
    %s67 = sphi 0, %s66
    %s81 = sphi 0, %s67
    %s87 = sphi 0, %s89
    %s90 = sphi 0, %s87
    %s91 = sphi 0, %s90
    %s107 = sphi 0, %s91
  $region4: #{_lambda_.6} parent=0 // loop_header_branch
    %12 = sbr.rel (%p10) target = $region8
  $region5: #{_lambda_.6} parent=0 // loop_body
    %s14 = ssub.s32 %s9, 1
    %s15 = ssub.s32 %s9, 2
    %s16 = sadd.s32 %s9, 1
    %s17 = ssub.s32 %s9, %s16
    %p18 = scmp.eq.s32.totalorder %s17, 0
    %s20 = sadd.s32 %s19, 1
    %s21 = scalar_select %p18, %s19, %s20
    %p24 = pneg %p18
    %p25 = scmp.eq.s32.totalorder %s9, 1
    %p26 = por %p24, %p25
    %p27 = scmp.ne.s32.totalorder %s19, %s22
    %p28 = scmp.eq.s32.totalorder %s9, 0
    %p29 = por %p27, %p28
    %p30 = scmp.ne.s32.totalorder %s19, %s22
    %p31 = scmp.eq.s32.totalorder %s14, 1
    %p32 = por %p30, %p31
    %p33 = scmp.ne.s32.totalorder %s22, %s23
    %p34 = scmp.eq.s32.totalorder %s14, 0
    %p35 = por %p33, %p34
    %p36 = scmp.ne.s32.totalorder %s22, %s23
    %p37 = scmp.eq.s32.totalorder %s15, 1
    %p38 = por %p36, %p37
    %p40 = scmp.ne.s32.totalorder %s23, %s39
    %p41 = scmp.eq.s32.totalorder %s15, 0
    %p42 = por %p40, %p41
    %s44 = sadd.s32 %s43, 1
    %p47 = scmp.eq.s32.totalorder %s9, 1
    %p48 = scmp.ne.s32.totalorder %s43, %s45
    %p49 = scmp.eq.s32.totalorder %s9, 0
    %p50 = por %p48, %p49
    %p51 = scmp.ne.s32.totalorder %s43, %s45
    %p52 = scmp.eq.s32.totalorder %s14, 1
    %p53 = por %p51, %p52
    %p54 = scmp.ne.s32.totalorder %s45, %s46
    %p55 = scmp.eq.s32.totalorder %s14, 0
    %p56 = por %p54, %p55
    %p57 = scmp.ne.s32.totalorder %s45, %s46
    %p58 = scmp.eq.s32.totalorder %s15, 1
    %p59 = por %p57, %p58
    %p61 = scmp.ne.s32.totalorder %s46, %s60
    %p62 = scmp.eq.s32.totalorder %s15, 0
    %p63 = por %p61, %p62
    %s65 = sadd.s32 %s64, 1
    %p68 = scmp.eq.s32.totalorder %s9, 1
    %p69 = scmp.ne.s32.totalorder %s64, %s66
    %p70 = scmp.eq.s32.totalorder %s9, 0
    %p71 = por %p69, %p70
    %p72 = scmp.ne.s32.totalorder %s64, %s66
    %p73 = scmp.eq.s32.totalorder %s14, 1
    %p74 = por %p72, %p73
    %p75 = scmp.ne.s32.totalorder %s66, %s67
    %p76 = scmp.eq.s32.totalorder %s14, 0
    %p77 = por %p75, %p76
    %p78 = scmp.ne.s32.totalorder %s66, %s67
    %p79 = scmp.eq.s32.totalorder %s15, 1
    %p80 = por %p78, %p79
    %p82 = scmp.ne.s32.totalorder %s67, %s81
    %p83 = scmp.eq.s32.totalorder %s15, 0
    %p84 = por %p82, %p83
    %s85 = ssub.s32 %s9, %s16
    %p86 = scmp.eq.s32.totalorder %s85, 0
    %s88 = sadd.s32 %s87, 1
    %s89 = scalar_select %p86, %s87, %s88
    %p92 = pneg %p86
    %p93 = scmp.eq.s32.totalorder %s9, 1
    %p94 = por %p92, %p93
    %p95 = scmp.ne.s32.totalorder %s87, %s90
    %p96 = scmp.eq.s32.totalorder %s9, 0
    %p97 = por %p95, %p96
    %p98 = scmp.ne.s32.totalorder %s87, %s90
    %p99 = scmp.eq.s32.totalorder %s14, 1
    %p100 = por %p98, %p99
    %p101 = scmp.ne.s32.totalorder %s90, %s91
    %p102 = scmp.eq.s32.totalorder %s14, 0
    %p103 = por %p101, %p102
    %p104 = scmp.ne.s32.totalorder %s90, %s91
    %p105 = scmp.eq.s32.totalorder %s15, 1
    %p106 = por %p104, %p105
    %p108 = scmp.ne.s32.totalorder %s91, %s107
    %p109 = scmp.eq.s32.totalorder %s15, 0
    %p110 = por %p108, %p109
    %p111 = scmp.le.s32.totalorder 1, %s9
    %p112 = scmp.lt.s32.totalorder %s9, 3
    %p113 = pnand %p111, %p112
    %p114 = pneg %p113
    // Predicated region
    $region9: #{_lambda_.6} parent=5 // pred_check
      _
    $region10: #{_lambda_.6} parent=5 // pred_check_branch
      %116 = sbr.rel (%p113) target = $region12
    $region11: #{_lambda_.6} parent=5 // pred_region
      %s117 = ssub.s32 %s9, 1
      // Predicated region
      $region13: #{_lambda_.6} parent=11 // pred_check
        %p118 = pneg %p56
      $region14: #{_lambda_.6} parent=11 // pred_check_branch
        %120 = sbr.rel (%p118) target = $region16
      $region15: #{_lambda_.6} parent=11 // pred_region
        _
      $region16: #{_lambda_.6} parent=11 // pred_fallthru
        _
      // Predicated region
      $region17: #{_lambda_.6} parent=11 // pred_check
        %p121 = pneg %p77
      $region18: #{_lambda_.6} parent=11 // pred_check_branch
        %123 = sbr.rel (%p121) target = $region20
      $region19: #{_lambda_.6} parent=11 // pred_region
        _
      $region20: #{_lambda_.6} parent=11 // pred_fallthru
        _
    $region12: #{_lambda_.6} parent=5 // pred_fallthru
      _
    %p124 = scmp.lt.s32.totalorder %s9, 2
    // Predicated region
    $region21: #{_lambda_.6} parent=5 // pred_check
      %p125 = pneg %p124
    $region22: #{_lambda_.6} parent=5 // pred_check_branch
      %127 = sbr.rel (%p125) target = $region24
    $region23: #{_lambda_.6} parent=5 // pred_region
      // Predicated region
      $region25: #{_lambda_.6} parent=23 // pred_check
        %p128 = pneg %p29
      $region26: #{_lambda_.6} parent=23 // pred_check_branch
        %130 = sbr.rel (%p128) target = $region28
      $region27: #{_lambda_.6} parent=23 // pred_region
        %s131 = smul.u32 8, %s9
        %p132 = scmp.lt.s32.totalorder %s131, 15
        %s133 = scalar_select %p132, %s131, 15
        %s134 = smul.addr %s133, 4
        %s135 = scalar_lea.vmem %s0, %s134
        %s136 = smul.u32 8, %s9
      $region28: #{_lambda_.6} parent=23 // pred_fallthru
        _
    $region24: #{_lambda_.6} parent=5 // pred_fallthru
      _
    %p137 = scmp.le.s32.totalorder 1, %s9
    %p138 = scmp.lt.s32.totalorder %s9, 3
    %p139 = pnand %p137, %p138
    %p140 = pneg %p139
    // Predicated region
    $region29: #{_lambda_.6} parent=5 // pred_check
      _
    $region30: #{_lambda_.6} parent=5 // pred_check_branch
      %142 = sbr.rel (%p139) target = $region32
    $region31: #{_lambda_.6} parent=5 // pred_region
      %s143 = ssub.s32 %s9, 1
      %s144 = smul.u32 8, %s14
      %p145 = scmp.lt.s32.totalorder %s144, 15
      %s146 = scalar_select %p145, %s144, 15
      %s147 = smul.addr %s146, 4
      %s148 = scalar_lea.vmem %s0, %s147
      %p149 = pneg %p35
      %p150 = pneg %p32
      %p151 = pneg %p56
      %p152 = pneg %p53
      %p153 = pneg %p77
      %p154 = pneg %p74
      %p155 = pneg %p103
      %p156 = pneg %p100
      %s157 = smul.u32 8, %s14
      %p158 = scmp.lt.s32.totalorder %s157, 15
      %s159 = scalar_select %p158, %s157, 15
      %s160 = smul.addr %s159, 4
      %s161 = scalar_lea.vmem %s3, %s160
      %s162 = smul.u32 8, %s14
      %p163 = scmp.lt.s32.totalorder %s162, 15
      %s164 = scalar_select %p163, %s162, 15
      %s165 = smul.addr %s164, 4
      %s166 = scalar_lea.vmem %s0, %s165
      %s167 = smul.u32 8, %s14
      %s168 = smul.u32 8, %s14
      %p169 = scmp.lt.s32.totalorder %s168, 15
      %s170 = scalar_select %p169, %s168, 15
      %s171 = smul.addr %s170, 4
      %s172 = scalar_lea.vmem %s3, %s171
      %s173 = smul.u32 8, %s14
      %v175 = vld [vmem:[%s166] sm:$0xf]
      %v176 = vld [vmem:[%s166 + $0x4] sm:$0xf]
      %v177 = vld [vmem:[%s166 + $0x8] sm:$0xf]
      %v178 = vld [vmem:[%s166 + $0xc] sm:$0xf]
      %v179 = vld [vmem:[%s166 + $0x10] sm:$0xf]
      %v180 = vld [vmem:[%s166 + $0x14] sm:$0xf]
      %v181 = vld [vmem:[%s166 + $0x18] sm:$0xf]
      %v182 = vld [vmem:[%s166 + $0x1c] sm:$0xf]
      %v183 = vld [vmem:[%s1] sm:$0xf]
      %v184 = vld [vmem:[%s1 + $0x4] sm:$0xf]
      %v185 = vld [vmem:[%s2] sm:$0x1]
      %v187 = vlaneseq
      %v188 = vshrl.u32 %v187, 7
      %v189 = vsub.s32 0, %v188
      %v190 = vrot.slane %v185, %v189
      %v200 = vunpack.c.l.b16 %v175
      %v201 = vunpack.c.l.b16 %v176
      %v202 = vunpack.c.l.b16 %v177
      %v203 = vunpack.c.l.b16 %v178
      %v204 = vunpack.c.l.b16 %v179
      %v205 = vunpack.c.l.b16 %v180
      %v206 = vunpack.c.l.b16 %v181
      %v207 = vunpack.c.l.b16 %v182
      %v208 = vpack.c.b16 %v201, %v200
      %v209 = vpack.c.b16 %v203, %v202
      %v210 = vpack.c.b16 %v205, %v204
      %v211 = vpack.c.b16 %v207, %v206
      %v214 = vunpack.c.l.b16 %v183
      %v215 = vunpack.c.l.b16 %v184
      %v216 = vpack.c.b16 %v215, %v214
      %vm218 = vcmask 130048
      %v220 = vsel %vm218, %v208, 0
      %v223 = vsel %vm218, %v209, 0
      %v226 = vsel %vm218, %v210, 0
      %v229 = vsel %vm218, %v211, 0
      %231 = vmatprep.subr.bf16.mxu0 0
      %232 = vmatpush1.bf16.msra.mxu0 %v216
      %233 = vmatprep.subr.bf16.mxu0 0
      %234 = vmatpush1.bf16.msra.mxu0 0
      %235 = vmatprep.subr.bf16.mxu0 0
      %236 = vmatpush1.bf16.msra.mxu0 0
      %237 = vmatprep.subr.bf16.mxu0 0
      %238 = vmatpush1.bf16.msra.mxu0 0
      %239 = vmatprep.subr.bf16.mxu0 0
      %240 = vmatpush1.bf16.msra.mxu0 0
      %241 = vmatprep.subr.bf16.mxu0 0
      %242 = vmatpush1.bf16.msra.mxu0 0
      %243 = vmatprep.subr.bf16.mxu0 0
      %244 = vmatpush1.bf16.msra.mxu0 0
      %245 = vmatprep.subr.bf16.mxu0 0
      %246 = vmatpush1.bf16.msra.mxu0 0
      %247 = vmatprep.subr.bf16.mxu0 0
      %248 = vmatpush1.bf16.msra.mxu0 0
      %249 = vmatprep.subr.bf16.mxu0 0
      %250 = vmatpush1.bf16.msra.mxu0 0
      %251 = vmatprep.subr.bf16.mxu0 0
      %252 = vmatpush1.bf16.msra.mxu0 0
      %253 = vmatprep.subr.bf16.mxu0 0
      %254 = vmatpush1.bf16.msra.mxu0 0
      %255 = vmatprep.subr.bf16.mxu0 0
      %256 = vmatpush1.bf16.msra.mxu0 0
      %257 = vmatprep.subr.bf16.mxu0 0
      %258 = vmatpush1.bf16.msra.mxu0 0
      %259 = vmatprep.subr.bf16.mxu0 0
      %260 = vmatpush1.bf16.msra.mxu0 0
      %261 = vmatprep.subr.bf16.mxu0 0
      %262 = vmatpush1.bf16.msra.mxu0 0
      %263 = vmatprep.mubr.bf16.mxu0 0
      %264 = vmatmul.mubr.bf16.gmra.mrb[0].mxu0 %v220
      %v265 = vpop.f32.mrb[0].mxu0
      %v266 = vadd.f32 %v190, %v265
      %v267 = vpop.f32.mrb[0].mxu0
      %v268 = vpop.f32.mrb[0].mxu0
      %v269 = vadd.f32 %v190, %v268
      %v270 = vpop.f32.mrb[0].mxu0
      %271 = vmatprep.mubr.bf16.mxu0 0
      %272 = vmatmul.mubr.bf16.gmra.mrb[0].mxu0 %v223
      %v273 = vpop.f32.mrb[0].mxu0
      %v274 = vadd.f32 %v190, %v273
      %v275 = vpop.f32.mrb[0].mxu0
      %v276 = vpop.f32.mrb[0].mxu0
      %v277 = vadd.f32 %v190, %v276
      %v278 = vpop.f32.mrb[0].mxu0
      %279 = vmatprep.mubr.bf16.mxu0 0
      %280 = vmatmul.mubr.bf16.gmra.mrb[0].mxu0 %v226
      %v281 = vpop.f32.mrb[0].mxu0
      %v282 = vadd.f32 %v190, %v281
      %v283 = vpop.f32.mrb[0].mxu0
      %v284 = vpop.f32.mrb[0].mxu0
      %v285 = vadd.f32 %v190, %v284
      %v286 = vpop.f32.mrb[0].mxu0
      %287 = vmatprep.mubr.bf16.mxu0 0
      %288 = vmatmul.mubr.bf16.gmra.mrb[0].mxu0 %v229
      %v289 = vpop.f32.mrb[0].mxu0
      %v290 = vadd.f32 %v190, %v289
      %v291 = vpop.f32.mrb[0].mxu0
      %v292 = vpop.f32.mrb[0].mxu0
      %v293 = vadd.f32 %v190, %v292
      %v294 = vpop.f32.mrb[0].mxu0
      %295 = vdwg.mxu0
      %v296 = vpack.c.bf16 %v269, %v266
      %v297 = vpack.c.bf16 %v277, %v274
      %v298 = vpack.c.bf16 %v285, %v282
      %v299 = vpack.c.bf16 %v293, %v290
      %v304 = vunpack.c.l.b16 %v296
      %v305 = vunpack.c.h.b16 %v296
      %v306 = vunpack.c.l.b16 %v297
      %v307 = vunpack.c.h.b16 %v297
      %v308 = vunpack.c.l.b16 %v298
      %v309 = vunpack.c.h.b16 %v298
      %v310 = vunpack.c.l.b16 %v299
      %v311 = vunpack.c.h.b16 %v299
      %v312 = vpack.c.b16 %v304, %v304
      %v313 = vpack.c.b16 %v305, %v305
      %v314 = vpack.c.b16 %v306, %v306
      %v315 = vpack.c.b16 %v307, %v307
      %v316 = vpack.c.b16 %v308, %v308
      %v317 = vpack.c.b16 %v309, %v309
      %v318 = vpack.c.b16 %v310, %v310
      %v319 = vpack.c.b16 %v311, %v311
      %vm328 = vcmask 257024
      %329 = vst.msk [vmem:[%s172] sm:$0xf] %vm328, %v312
      %330 = vst.msk [vmem:[%s172 + $0x4] sm:$0xf] %vm328, %v313
      %331 = vst.msk [vmem:[%s172 + $0x8] sm:$0xf] %vm328, %v314
      %332 = vst.msk [vmem:[%s172 + $0xc] sm:$0xf] %vm328, %v315
      %333 = vst.msk [vmem:[%s172 + $0x10] sm:$0xf] %vm328, %v316
      %334 = vst.msk [vmem:[%s172 + $0x14] sm:$0xf] %vm328, %v317
      %335 = vst.msk [vmem:[%s172 + $0x18] sm:$0xf] %vm328, %v318
      %336 = vst.msk [vmem:[%s172 + $0x1c] sm:$0xf] %vm328, %v319
      %s337 = smul.u32 8, %s14
      %p338 = scmp.lt.s32.totalorder %s337, 15
      %s339 = scalar_select %p338, %s337, 15
      %s340 = smul.addr %s339, 4
      %s341 = scalar_lea.vmem %s3, %s340
      // Predicated region
      $region33: #{_lambda_.6} parent=31 // pred_check
        %p342 = pneg %p100
      $region34: #{_lambda_.6} parent=31 // pred_check_branch
        %344 = sbr.rel (%p342) target = $region36
      $region35: #{_lambda_.6} parent=31 // pred_region
        %s345 = smul.u32 8, %s14
      $region36: #{_lambda_.6} parent=31 // pred_fallthru
        _
    $region32: #{_lambda_.6} parent=5 // pred_fallthru
      _
    %p346 = scmp.le.s32.totalorder 2, %s9
    // Predicated region
    $region37: #{_lambda_.6} parent=5 // pred_check
      %p347 = pneg %p346
    $region38: #{_lambda_.6} parent=5 // pred_check_branch
      %349 = sbr.rel (%p347) target = $region40
    $region39: #{_lambda_.6} parent=5 // pred_region
      %s350 = ssub.s32 %s9, 2
      // Predicated region
      $region41: #{_lambda_.6} parent=39 // pred_check
        %p351 = pneg %p106
      $region42: #{_lambda_.6} parent=39 // pred_check_branch
        %353 = sbr.rel (%p351) target = $region44
      $region43: #{_lambda_.6} parent=39 // pred_region
        %s354 = smul.u32 8, %s15
        %p355 = scmp.lt.s32.totalorder %s354, 15
        %s356 = scalar_select %p355, %s354, 15
        %s357 = smul.addr %s356, 4
        %s358 = scalar_lea.vmem %s3, %s357
      $region44: #{_lambda_.6} parent=39 // pred_fallthru
        _
    $region40: #{_lambda_.6} parent=5 // pred_fallthru
      _
  $region6: #{_lambda_.6} parent=0 // loop_footer
    %s13 = sadd.s32 1, %s9
  $region7: #{_lambda_.6} parent=0 // loop_footer_branch
    %8 = sbr.rel target = $region3
  $region8: #{_lambda_.6} parent=0 // loop_exit
    _

// kernel: _lambda_.7
$region0: #{_lambda_.7}
  #allocation0 [shape = 'u32[]', space=smem, size = 0x4, offset = 0x4, fixed_abs, tag = 'smem constant byte address 0x4 - core index']
  #allocation1 [shape = 'u32[144,128]{1,0:T(1,128)}', space=vmem, size = 0x12000, scoped, tag = 'internal scratch']
  %s0 = inlined_call_operand.vmem [shape: bf16[512,32], index: 0, kind: input, shape index: {}]
  %s1 = inlined_call_operand.vmem [shape: bf16[512,32], index: 1, kind: input, shape index: {}]
  %s2 = inlined_call_operand.vmem [shape: bf16[512,32], index: 2, kind: input, shape index: {}]
  %s3 = inlined_call_operand.vmem [shape: bf16[512,8], index: 3, kind: input, shape index: {}]
  %s4 = inlined_call_operand.vmem [shape: bf16[32,32], index: 4, kind: input, shape index: {}]
  %s5 = inlined_call_operand.vmem [shape: bf16[32,32], index: 5, kind: input, shape index: {}]
  %s6 = inlined_call_operand.vmem [shape: bf16[32,32], index: 6, kind: input, shape index: {}]
  %s7 = inlined_call_operand.vmem [shape: bf16[8,32], index: 7, kind: input, shape index: {}]
  %s8 = inlined_call_operand.vmem [shape: f32[1,32], index: 8, kind: input, shape index: {}]
  %s9 = inlined_call_operand.vmem [shape: bf16[32,384], index: 9, kind: input, shape index: {}]
  %s10 = inlined_call_operand.vmem [shape: f32[1,384], index: 10, kind: input, shape index: {}]
  %s11 = inlined_call_operand.vmem [shape: f32[512,128], index: 11, kind: output, shape index: {0}]
  %s12 = inlined_call_operand.hbm [shape: f32[512,256], index: 12, kind: output, shape index: {1}]
  %13 = xla_tuple %s11, %s12
  %s14 = sld [smem:[#allocation0]]
  $region85: #{_lambda_.7} parent=0
    _
  %s16 = ssub.s32 1, %s14
  %s17 = scalar_select 0, %s16, %s14
  $region1: #{_lambda_.7} parent=0
    #allocation2 [shape = 'u8[524288]{0}', space=vmem, size = 0x80000, scoped, tag = 'output window, operand 1']
    #allocation3 [shape = 's32[2]{0}', space=sflag, size = 0x8, scoped, tag = 'scoped memory for _lambda_.7']
    %18 = vsyncpa [#allocation3], 0
    %s19 = scalar_lea.sflag [#allocation3], 1
    %20 = vsyncpa %s19, 0
    loop: start=0, step=1, limit=4
    $region2: #{_lambda_.7} parent=1 // loop_pre_header
      _
    $region3: #{_lambda_.7} parent=1 // loop_header
      %s22 = sphi 0, %s26
      %p23 = scmp.ge.s32.totalorder %s22, 4
      %s32 = sphi 0, %s34
      %s35 = sphi 0, %s32
      %s36 = sphi 0, %s35
      %s52 = sphi 0, %s36
      %s58 = sphi 0, %s60
      %s61 = sphi 0, %s58
      %s62 = sphi 0, %s61
      %s78 = sphi 0, %s62
      %s84 = sphi 0, %s86
      %s87 = sphi 0, %s84
      %s88 = sphi 0, %s87
      %s104 = sphi 0, %s88
      %s110 = sphi 0, %s112
      %s113 = sphi 0, %s110
      %s114 = sphi 0, %s113
      %s130 = sphi 0, %s114
      %s134 = sphi 0, %s134
      %s136 = sphi 0, %s134
      %s137 = sphi 0, %s136
      %s151 = sphi 0, %s137
      %s155 = sphi 0, %s155
      %s157 = sphi 0, %s155
      %s158 = sphi 0, %s157
      %s172 = sphi 0, %s158
      %s176 = sphi 0, %s176
      %s178 = sphi 0, %s176
      %s179 = sphi 0, %s178
      %s193 = sphi 0, %s179
      %s197 = sphi 0, %s197
      %s199 = sphi 0, %s197
      %s200 = sphi 0, %s199
      %s214 = sphi 0, %s200
      %s218 = sphi 0, %s218
      %s220 = sphi 0, %s218
      %s221 = sphi 0, %s220
      %s235 = sphi 0, %s221
      %s239 = sphi 0, %s239
      %s241 = sphi 0, %s239
      %s242 = sphi 0, %s241
      %s256 = sphi 0, %s242
      %s260 = sphi 0, %s260
      %s262 = sphi 0, %s260
      %s263 = sphi 0, %s262
      %s277 = sphi 0, %s263
      %s283 = sphi 0, %s285
      %s286 = sphi 0, %s283
      %s287 = sphi 0, %s286
      %s303 = sphi 0, %s287
      %s309 = sphi 0, %s311
      %s312 = sphi 0, %s309
      %s313 = sphi 0, %s312
      %s329 = sphi 0, %s313
    $region4: #{_lambda_.7} parent=1 // loop_header_branch
      %25 = sbr.rel (%p23) target = $region8
    $region5: #{_lambda_.7} parent=1 // loop_body
      %s27 = ssub.s32 %s22, 1
      %s28 = ssub.s32 %s22, 2
      %s29 = sadd.s32 %s22, 1
      %s30 = ssub.s32 %s22, %s29
      %p31 = scmp.eq.s32.totalorder %s30, 0
      %s33 = sadd.s32 %s32, 1
      %s34 = scalar_select %p31, %s32, %s33
      %p37 = pneg %p31
      %p38 = scmp.eq.s32.totalorder %s22, 1
      %p39 = por %p37, %p38
      %p40 = scmp.ne.s32.totalorder %s32, %s35
      %p41 = scmp.eq.s32.totalorder %s22, 0
      %p42 = por %p40, %p41
      %p43 = scmp.ne.s32.totalorder %s32, %s35
      %p44 = scmp.eq.s32.totalorder %s27, 1
      %p45 = por %p43, %p44
      %p46 = scmp.ne.s32.totalorder %s35, %s36
      %p47 = scmp.eq.s32.totalorder %s27, 0
      %p48 = por %p46, %p47
      %p49 = scmp.ne.s32.totalorder %s35, %s36
      %p50 = scmp.eq.s32.totalorder %s28, 1
      %p51 = por %p49, %p50
      %p53 = scmp.ne.s32.totalorder %s36, %s52
      %p54 = scmp.eq.s32.totalorder %s28, 0
      %p55 = por %p53, %p54
      %s56 = ssub.s32 %s22, %s29
      %p57 = scmp.eq.s32.totalorder %s56, 0
      %s59 = sadd.s32 %s58, 1
      %s60 = scalar_select %p57, %s58, %s59
      %p63 = pneg %p57
      %p64 = scmp.eq.s32.totalorder %s22, 1
      %p65 = por %p63, %p64
      %p66 = scmp.ne.s32.totalorder %s58, %s61
      %p67 = scmp.eq.s32.totalorder %s22, 0
      %p68 = por %p66, %p67
      %p69 = scmp.ne.s32.totalorder %s58, %s61
      %p70 = scmp.eq.s32.totalorder %s27, 1
      %p71 = por %p69, %p70
      %p72 = scmp.ne.s32.totalorder %s61, %s62
      %p73 = scmp.eq.s32.totalorder %s27, 0
      %p74 = por %p72, %p73
      %p75 = scmp.ne.s32.totalorder %s61, %s62
      %p76 = scmp.eq.s32.totalorder %s28, 1
      %p77 = por %p75, %p76
      %p79 = scmp.ne.s32.totalorder %s62, %s78
      %p80 = scmp.eq.s32.totalorder %s28, 0
      %p81 = por %p79, %p80
      %s82 = ssub.s32 %s22, %s29
      %p83 = scmp.eq.s32.totalorder %s82, 0
      %s85 = sadd.s32 %s84, 1
      %s86 = scalar_select %p83, %s84, %s85
      %p89 = pneg %p83
      %p90 = scmp.eq.s32.totalorder %s22, 1
      %p91 = por %p89, %p90
      %p92 = scmp.ne.s32.totalorder %s84, %s87
      %p93 = scmp.eq.s32.totalorder %s22, 0
      %p94 = por %p92, %p93
      %p95 = scmp.ne.s32.totalorder %s84, %s87
      %p96 = scmp.eq.s32.totalorder %s27, 1
      %p97 = por %p95, %p96
      %p98 = scmp.ne.s32.totalorder %s87, %s88
      %p99 = scmp.eq.s32.totalorder %s27, 0
      %p100 = por %p98, %p99
      %p101 = scmp.ne.s32.totalorder %s87, %s88
      %p102 = scmp.eq.s32.totalorder %s28, 1
      %p103 = por %p101, %p102
      %p105 = scmp.ne.s32.totalorder %s88, %s104
      %p106 = scmp.eq.s32.totalorder %s28, 0
      %p107 = por %p105, %p106
      %s108 = ssub.s32 %s22, %s29
      %p109 = scmp.eq.s32.totalorder %s108, 0
      %s111 = sadd.s32 %s110, 1
      %s112 = scalar_select %p109, %s110, %s111
      %p115 = pneg %p109
      %p116 = scmp.eq.s32.totalorder %s22, 1
      %p117 = por %p115, %p116
      %p118 = scmp.ne.s32.totalorder %s110, %s113
      %p119 = scmp.eq.s32.totalorder %s22, 0
      %p120 = por %p118, %p119
      %p121 = scmp.ne.s32.totalorder %s110, %s113
      %p122 = scmp.eq.s32.totalorder %s27, 1
      %p123 = por %p121, %p122
      %p124 = scmp.ne.s32.totalorder %s113, %s114
      %p125 = scmp.eq.s32.totalorder %s27, 0
      %p126 = por %p124, %p125
      %p127 = scmp.ne.s32.totalorder %s113, %s114
      %p128 = scmp.eq.s32.totalorder %s28, 1
      %p129 = por %p127, %p128
      %p131 = scmp.ne.s32.totalorder %s114, %s130
      %p132 = scmp.eq.s32.totalorder %s28, 0
      %p133 = por %p131, %p132
      %s135 = sadd.s32 %s134, 1
      %p138 = scmp.eq.s32.totalorder %s22, 1
      %p139 = scmp.ne.s32.totalorder %s134, %s136
      %p140 = scmp.eq.s32.totalorder %s22, 0
      %p141 = por %p139, %p140
      %p142 = scmp.ne.s32.totalorder %s134, %s136
      %p143 = scmp.eq.s32.totalorder %s27, 1
      %p144 = por %p142, %p143
      %p145 = scmp.ne.s32.totalorder %s136, %s137
      %p146 = scmp.eq.s32.totalorder %s27, 0
      %p147 = por %p145, %p146
      %p148 = scmp.ne.s32.totalorder %s136, %s137
      %p149 = scmp.eq.s32.totalorder %s28, 1
      %p150 = por %p148, %p149
      %p152 = scmp.ne.s32.totalorder %s137, %s151
      %p153 = scmp.eq.s32.totalorder %s28, 0
      %p154 = por %p152, %p153
      %s156 = sadd.s32 %s155, 1
      %p159 = scmp.eq.s32.totalorder %s22, 1
      %p160 = scmp.ne.s32.totalorder %s155, %s157
      %p161 = scmp.eq.s32.totalorder %s22, 0
      %p162 = por %p160, %p161
      %p163 = scmp.ne.s32.totalorder %s155, %s157
      %p164 = scmp.eq.s32.totalorder %s27, 1
      %p165 = por %p163, %p164
      %p166 = scmp.ne.s32.totalorder %s157, %s158
      %p167 = scmp.eq.s32.totalorder %s27, 0
      %p168 = por %p166, %p167
      %p169 = scmp.ne.s32.totalorder %s157, %s158
      %p170 = scmp.eq.s32.totalorder %s28, 1
      %p171 = por %p169, %p170
      %p173 = scmp.ne.s32.totalorder %s158, %s172
      %p174 = scmp.eq.s32.totalorder %s28, 0
      %p175 = por %p173, %p174
      %s177 = sadd.s32 %s176, 1
      %p180 = scmp.eq.s32.totalorder %s22, 1
      %p181 = scmp.ne.s32.totalorder %s176, %s178
      %p182 = scmp.eq.s32.totalorder %s22, 0
      %p183 = por %p181, %p182
      %p184 = scmp.ne.s32.totalorder %s176, %s178
      %p185 = scmp.eq.s32.totalorder %s27, 1
      %p186 = por %p184, %p185
      %p187 = scmp.ne.s32.totalorder %s178, %s179
      %p188 = scmp.eq.s32.totalorder %s27, 0
      %p189 = por %p187, %p188
      %p190 = scmp.ne.s32.totalorder %s178, %s179
      %p191 = scmp.eq.s32.totalorder %s28, 1
      %p192 = por %p190, %p191
      %p194 = scmp.ne.s32.totalorder %s179, %s193
      %p195 = scmp.eq.s32.totalorder %s28, 0
      %p196 = por %p194, %p195
      %s198 = sadd.s32 %s197, 1
      %p201 = scmp.eq.s32.totalorder %s22, 1
      %p202 = scmp.ne.s32.totalorder %s197, %s199
      %p203 = scmp.eq.s32.totalorder %s22, 0
      %p204 = por %p202, %p203
      %p205 = scmp.ne.s32.totalorder %s197, %s199
      %p206 = scmp.eq.s32.totalorder %s27, 1
      %p207 = por %p205, %p206
      %p208 = scmp.ne.s32.totalorder %s199, %s200
      %p209 = scmp.eq.s32.totalorder %s27, 0
      %p210 = por %p208, %p209
      %p211 = scmp.ne.s32.totalorder %s199, %s200
      %p212 = scmp.eq.s32.totalorder %s28, 1
      %p213 = por %p211, %p212
      %p215 = scmp.ne.s32.totalorder %s200, %s214
      %p216 = scmp.eq.s32.totalorder %s28, 0
      %p217 = por %p215, %p216
      %s219 = sadd.s32 %s218, 1
      %p222 = scmp.eq.s32.totalorder %s22, 1
      %p223 = scmp.ne.s32.totalorder %s218, %s220
      %p224 = scmp.eq.s32.totalorder %s22, 0
      %p225 = por %p223, %p224
      %p226 = scmp.ne.s32.totalorder %s218, %s220
      %p227 = scmp.eq.s32.totalorder %s27, 1
      %p228 = por %p226, %p227
      %p229 = scmp.ne.s32.totalorder %s220, %s221
      %p230 = scmp.eq.s32.totalorder %s27, 0
      %p231 = por %p229, %p230
      %p232 = scmp.ne.s32.totalorder %s220, %s221
      %p233 = scmp.eq.s32.totalorder %s28, 1
      %p234 = por %p232, %p233
      %p236 = scmp.ne.s32.totalorder %s221, %s235
      %p237 = scmp.eq.s32.totalorder %s28, 0
      %p238 = por %p236, %p237
      %s240 = sadd.s32 %s239, 1
      %p243 = scmp.eq.s32.totalorder %s22, 1
      %p244 = scmp.ne.s32.totalorder %s239, %s241
      %p245 = scmp.eq.s32.totalorder %s22, 0
      %p246 = por %p244, %p245
      %p247 = scmp.ne.s32.totalorder %s239, %s241
      %p248 = scmp.eq.s32.totalorder %s27, 1
      %p249 = por %p247, %p248
      %p250 = scmp.ne.s32.totalorder %s241, %s242
      %p251 = scmp.eq.s32.totalorder %s27, 0
      %p252 = por %p250, %p251
      %p253 = scmp.ne.s32.totalorder %s241, %s242
      %p254 = scmp.eq.s32.totalorder %s28, 1
      %p255 = por %p253, %p254
      %p257 = scmp.ne.s32.totalorder %s242, %s256
      %p258 = scmp.eq.s32.totalorder %s28, 0
      %p259 = por %p257, %p258
      %s261 = sadd.s32 %s260, 1
      %p264 = scmp.eq.s32.totalorder %s22, 1
      %p265 = scmp.ne.s32.totalorder %s260, %s262
      %p266 = scmp.eq.s32.totalorder %s22, 0
      %p267 = por %p265, %p266
      %p268 = scmp.ne.s32.totalorder %s260, %s262
      %p269 = scmp.eq.s32.totalorder %s27, 1
      %p270 = por %p268, %p269
      %p271 = scmp.ne.s32.totalorder %s262, %s263
      %p272 = scmp.eq.s32.totalorder %s27, 0
      %p273 = por %p271, %p272
      %p274 = scmp.ne.s32.totalorder %s262, %s263
      %p275 = scmp.eq.s32.totalorder %s28, 1
      %p276 = por %p274, %p275
      %p278 = scmp.ne.s32.totalorder %s263, %s277
      %p279 = scmp.eq.s32.totalorder %s28, 0
      %p280 = por %p278, %p279
      %s281 = ssub.s32 %s22, %s29
      %p282 = scmp.eq.s32.totalorder %s281, 0
      %s284 = sadd.s32 %s283, 1
      %s285 = scalar_select %p282, %s283, %s284
      %p288 = pneg %p282
      %p289 = scmp.eq.s32.totalorder %s22, 1
      %p290 = por %p288, %p289
      %p291 = scmp.ne.s32.totalorder %s283, %s286
      %p292 = scmp.eq.s32.totalorder %s22, 0
      %p293 = por %p291, %p292
      %p294 = scmp.ne.s32.totalorder %s283, %s286
      %p295 = scmp.eq.s32.totalorder %s27, 1
      %p296 = por %p294, %p295
      %p297 = scmp.ne.s32.totalorder %s286, %s287
      %p298 = scmp.eq.s32.totalorder %s27, 0
      %p299 = por %p297, %p298
      %p300 = scmp.ne.s32.totalorder %s286, %s287
      %p301 = scmp.eq.s32.totalorder %s28, 1
      %p302 = por %p300, %p301
      %p304 = scmp.ne.s32.totalorder %s287, %s303
      %p305 = scmp.eq.s32.totalorder %s28, 0
      %p306 = por %p304, %p305
      %s307 = ssub.s32 %s22, %s29
      %p308 = scmp.eq.s32.totalorder %s307, 0
      %s310 = sadd.s32 %s309, 1
      %s311 = scalar_select %p308, %s309, %s310
      %p314 = pneg %p308
      %p315 = scmp.eq.s32.totalorder %s22, 1
      %p316 = por %p314, %p315
      %p317 = scmp.ne.s32.totalorder %s309, %s312
      %p318 = scmp.eq.s32.totalorder %s22, 0
      %p319 = por %p317, %p318
      %p320 = scmp.ne.s32.totalorder %s309, %s312
      %p321 = scmp.eq.s32.totalorder %s27, 1
      %p322 = por %p320, %p321
      %p323 = scmp.ne.s32.totalorder %s312, %s313
      %p324 = scmp.eq.s32.totalorder %s27, 0
      %p325 = por %p323, %p324
      %p326 = scmp.ne.s32.totalorder %s312, %s313
      %p327 = scmp.eq.s32.totalorder %s28, 1
      %p328 = por %p326, %p327
      %p330 = scmp.ne.s32.totalorder %s313, %s329
      %p331 = scmp.eq.s32.totalorder %s28, 0
      %p332 = por %p330, %p331
      %p333 = scmp.le.s32.totalorder 1, %s22
      %p334 = scmp.lt.s32.totalorder %s22, 3
      %p335 = pnand %p333, %p334
      %p336 = pneg %p335
      // Predicated region
      $region9: #{_lambda_.7} parent=5 // pred_check
        _
      $region10: #{_lambda_.7} parent=5 // pred_check_branch
        %338 = sbr.rel (%p335) target = $region12
      $region11: #{_lambda_.7} parent=5 // pred_region
        %s339 = ssub.s32 %s22, 1
        // Predicated region
        $region13: #{_lambda_.7} parent=11 // pred_check
          %p340 = pneg %p147
        $region14: #{_lambda_.7} parent=11 // pred_check_branch
          %342 = sbr.rel (%p340) target = $region16
        $region15: #{_lambda_.7} parent=11 // pred_region
          _
        $region16: #{_lambda_.7} parent=11 // pred_fallthru
          _
        // Predicated region
        $region17: #{_lambda_.7} parent=11 // pred_check
          %p343 = pneg %p168
        $region18: #{_lambda_.7} parent=11 // pred_check_branch
          %345 = sbr.rel (%p343) target = $region20
        $region19: #{_lambda_.7} parent=11 // pred_region
          _
        $region20: #{_lambda_.7} parent=11 // pred_fallthru
          _
        // Predicated region
        $region21: #{_lambda_.7} parent=11 // pred_check
          %p346 = pneg %p189
        $region22: #{_lambda_.7} parent=11 // pred_check_branch
          %348 = sbr.rel (%p346) target = $region24
        $region23: #{_lambda_.7} parent=11 // pred_region
          _
        $region24: #{_lambda_.7} parent=11 // pred_fallthru
          _
        // Predicated region
        $region25: #{_lambda_.7} parent=11 // pred_check
          %p349 = pneg %p210
        $region26: #{_lambda_.7} parent=11 // pred_check_branch
          %351 = sbr.rel (%p349) target = $region28
        $region27: #{_lambda_.7} parent=11 // pred_region
          _
        $region28: #{_lambda_.7} parent=11 // pred_fallthru
          _
        // Predicated region
        $region29: #{_lambda_.7} parent=11 // pred_check
          %p352 = pneg %p231
        $region30: #{_lambda_.7} parent=11 // pred_check_branch
          %354 = sbr.rel (%p352) target = $region32
        $region31: #{_lambda_.7} parent=11 // pred_region
          _
        $region32: #{_lambda_.7} parent=11 // pred_fallthru
          _
        // Predicated region
        $region33: #{_lambda_.7} parent=11 // pred_check
          %p355 = pneg %p252
        $region34: #{_lambda_.7} parent=11 // pred_check_branch
          %357 = sbr.rel (%p355) target = $region36
        $region35: #{_lambda_.7} parent=11 // pred_region
          _
        $region36: #{_lambda_.7} parent=11 // pred_fallthru
          _
        // Predicated region
        $region37: #{_lambda_.7} parent=11 // pred_check
          %p358 = pneg %p273
        $region38: #{_lambda_.7} parent=11 // pred_check_branch
          %360 = sbr.rel (%p358) target = $region40
        $region39: #{_lambda_.7} parent=11 // pred_region
          _
        $region40: #{_lambda_.7} parent=11 // pred_fallthru
          _
      $region12: #{_lambda_.7} parent=5 // pred_fallthru
        _
      %p361 = scmp.lt.s32.totalorder %s22, 2
      // Predicated region
      $region41: #{_lambda_.7} parent=5 // pred_check
        %p362 = pneg %p361
      $region42: #{_lambda_.7} parent=5 // pred_check_branch
        %364 = sbr.rel (%p362) target = $region44
      $region43: #{_lambda_.7} parent=5 // pred_region
        // Predicated region
        $region45: #{_lambda_.7} parent=43 // pred_check
          %p365 = pneg %p42
        $region46: #{_lambda_.7} parent=43 // pred_check_branch
          %367 = sbr.rel (%p365) target = $region48
        $region47: #{_lambda_.7} parent=43 // pred_region
          %s368 = smul.u32 32, %s22
          %p369 = scmp.lt.s32.totalorder %s368, 63
          %s370 = scalar_select %p369, %s368, 63
          %s371 = smul.addr %s370, 4
          %s372 = scalar_lea.vmem %s0, %s371
          %s373 = smul.u32 32, %s22
        $region48: #{_lambda_.7} parent=43 // pred_fallthru
          _
        // Predicated region
        $region49: #{_lambda_.7} parent=43 // pred_check
          %p374 = pneg %p68
        $region50: #{_lambda_.7} parent=43 // pred_check_branch
          %376 = sbr.rel (%p374) target = $region52
        $region51: #{_lambda_.7} parent=43 // pred_region
          %s377 = smul.u32 32, %s22
          %p378 = scmp.lt.s32.totalorder %s377, 63
          %s379 = scalar_select %p378, %s377, 63
          %s380 = smul.addr %s379, 4
          %s381 = scalar_lea.vmem %s1, %s380
          %s382 = smul.u32 32, %s22
        $region52: #{_lambda_.7} parent=43 // pred_fallthru
          _
        // Predicated region
        $region53: #{_lambda_.7} parent=43 // pred_check
          %p383 = pneg %p94
        $region54: #{_lambda_.7} parent=43 // pred_check_branch
          %385 = sbr.rel (%p383) target = $region56
        $region55: #{_lambda_.7} parent=43 // pred_region
          %s386 = smul.u32 32, %s22
          %p387 = scmp.lt.s32.totalorder %s386, 63
          %s388 = scalar_select %p387, %s386, 63
          %s389 = smul.addr %s388, 4
          %s390 = scalar_lea.vmem %s2, %s389
          %s391 = smul.u32 32, %s22
        $region56: #{_lambda_.7} parent=43 // pred_fallthru
          _
        // Predicated region
        $region57: #{_lambda_.7} parent=43 // pred_check
          %p392 = pneg %p120
        $region58: #{_lambda_.7} parent=43 // pred_check_branch
          %394 = sbr.rel (%p392) target = $region60
        $region59: #{_lambda_.7} parent=43 // pred_region
          %s395 = smul.u32 32, %s22
          %p396 = scmp.lt.s32.totalorder %s395, 63
          %s397 = scalar_select %p396, %s395, 63
          %s398 = smul.addr %s397, 4
          %s399 = scalar_lea.vmem %s3, %s398
          %s400 = smul.u32 32, %s22
        $region60: #{_lambda_.7} parent=43 // pred_fallthru
          _
      $region44: #{_lambda_.7} parent=5 // pred_fallthru
        _
      %p401 = scmp.le.s32.totalorder 1, %s22
      %p402 = scmp.lt.s32.totalorder %s22, 3
      %p403 = pnand %p401, %p402
      %p404 = pneg %p403
      // Predicated region
      $region61: #{_lambda_.7} parent=5 // pred_check
        _
      $region62: #{_lambda_.7} parent=5 // pred_check_branch
        %406 = sbr.rel (%p403) target = $region64
      $region63: #{_lambda_.7} parent=5 // pred_region
        %s407 = ssub.s32 %s22, 1
        %s408 = smul.u32 32, %s27
        %p409 = scmp.lt.s32.totalorder %s408, 63
        %s410 = scalar_select %p409, %s408, 63
        %s411 = smul.addr %s410, 4
        %s412 = scalar_lea.vmem %s0, %s411
        %p413 = pneg %p48
        %p414 = pneg %p45
        %s415 = smul.u32 32, %s27
        %p416 = scmp.lt.s32.totalorder %s415, 63
        %s417 = scalar_select %p416, %s415, 63
        %s418 = smul.addr %s417, 4
        %s419 = scalar_lea.vmem %s1, %s418
        %p420 = pneg %p74
        %p421 = pneg %p71
        %s422 = smul.u32 32, %s27
        %p423 = scmp.lt.s32.totalorder %s422, 63
        %s424 = scalar_select %p423, %s422, 63
        %s425 = smul.addr %s424, 4
        %s426 = scalar_lea.vmem %s2, %s425
        %p427 = pneg %p100
        %p428 = pneg %p97
        %s429 = smul.u32 32, %s27
        %p430 = scmp.lt.s32.totalorder %s429, 63
        %s431 = scalar_select %p430, %s429, 63
        %s432 = smul.addr %s431, 4
        %s433 = scalar_lea.vmem %s3, %s432
        %p434 = pneg %p126
        %p435 = pneg %p123
        %p436 = pneg %p147
        %p437 = pneg %p144
        %p438 = pneg %p168
        %p439 = pneg %p165
        %p440 = pneg %p189
        %p441 = pneg %p186
        %p442 = pneg %p210
        %p443 = pneg %p207
        %p444 = pneg %p231
        %p445 = pneg %p228
        %p446 = pneg %p252
        %p447 = pneg %p249
        %p448 = pneg %p273
        %p449 = pneg %p270
        %p450 = pneg %p299
        %p451 = pneg %p296
        %s452 = smul.u32 32, %s27
        %p453 = scmp.lt.s32.totalorder %s452, 63
        %s454 = scalar_select %p453, %s452, 63
        %s455 = smul.addr %s454, 8
        %s456 = scalar_lea.vmem %s11, %s455
        %p457 = pneg %p325
        %p458 = pneg %p322
        %s459 = sand.u32 %s312, 1
        %s460 = scalar_lea.sflag [#allocation3], %s459
        %s461 = sand.u32 %s312, 1
        %s462 = smul.addr %s461, 512
        %s463 = scalar_lea.vmem [#allocation2], %s462
        %s464 = smul.u32 32, %s27
        %p465 = scmp.lt.s32.totalorder %s464, 63
        %s466 = scalar_select %p465, %s464, 63
        %s467 = smul.addr %s466, 4
        %s468 = scalar_lea.vmem %s0, %s467
        %s469 = smul.u32 32, %s27
        %s470 = smul.u32 32, %s27
        %p471 = scmp.lt.s32.totalorder %s470, 63
        %s472 = scalar_select %p471, %s470, 63
        %s473 = smul.addr %s472, 4
        %s474 = scalar_lea.vmem %s1, %s473
        %s475 = smul.u32 32, %s27
        %s476 = smul.u32 32, %s27
        %p477 = scmp.lt.s32.totalorder %s476, 63
        %s478 = scalar_select %p477, %s476, 63
        %s479 = smul.addr %s478, 4
        %s480 = scalar_lea.vmem %s2, %s479
        %s481 = smul.u32 32, %s27
        %s482 = smul.u32 32, %s27
        %p483 = scmp.lt.s32.totalorder %s482, 63
        %s484 = scalar_select %p483, %s482, 63
        %s485 = smul.addr %s484, 4
        %s486 = scalar_lea.vmem %s3, %s485
        %s487 = smul.u32 32, %s27
        %s488 = smul.u32 32, %s27
        %p489 = scmp.lt.s32.totalorder %s488, 63
        %s490 = scalar_select %p489, %s488, 63
        %s491 = smul.addr %s490, 8
        %s492 = scalar_lea.vmem %s11, %s491
        %s493 = smul.u32 32, %s27
        %s494 = smul.u32 32, %s27
        %v496 = vld [vmem:[%s468] sm:$0xf]
        %v497 = vld [vmem:[%s468 + $0x4] sm:$0xf]
        %v498 = vld [vmem:[%s468 + $0x8] sm:$0xf]
        %v499 = vld [vmem:[%s468 + $0xc] sm:$0xf]
        %v500 = vld [vmem:[%s468 + $0x10] sm:$0xf]
        %v501 = vld [vmem:[%s468 + $0x14] sm:$0xf]
        %v502 = vld [vmem:[%s468 + $0x18] sm:$0xf]
        %v503 = vld [vmem:[%s468 + $0x1c] sm:$0xf]
        %v504 = vld [vmem:[%s468 + $0x20] sm:$0xf]
        %v505 = vld [vmem:[%s468 + $0x24] sm:$0xf]
        %v506 = vld [vmem:[%s468 + $0x28] sm:$0xf]
        %v507 = vld [vmem:[%s468 + $0x2c] sm:$0xf]
        %v508 = vld [vmem:[%s468 + $0x30] sm:$0xf]
        %v509 = vld [vmem:[%s468 + $0x34] sm:$0xf]
        %v510 = vld [vmem:[%s468 + $0x38] sm:$0xf]
        %v511 = vld [vmem:[%s468 + $0x3c] sm:$0xf]
        %v512 = vld [vmem:[%s468 + $0x40] sm:$0xf]
        %v513 = vld [vmem:[%s468 + $0x44] sm:$0xf]
        %v514 = vld [vmem:[%s468 + $0x48] sm:$0xf]
        %v515 = vld [vmem:[%s468 + $0x4c] sm:$0xf]
        %v516 = vld [vmem:[%s468 + $0x50] sm:$0xf]
        %v517 = vld [vmem:[%s468 + $0x54] sm:$0xf]
        %v518 = vld [vmem:[%s468 + $0x58] sm:$0xf]
        %v519 = vld [vmem:[%s468 + $0x5c] sm:$0xf]
        %v520 = vld [vmem:[%s468 + $0x60] sm:$0xf]
        %v521 = vld [vmem:[%s468 + $0x64] sm:$0xf]
        %v522 = vld [vmem:[%s468 + $0x68] sm:$0xf]
        %v523 = vld [vmem:[%s468 + $0x6c] sm:$0xf]
        %v524 = vld [vmem:[%s468 + $0x70] sm:$0xf]
        %v525 = vld [vmem:[%s468 + $0x74] sm:$0xf]
        %v526 = vld [vmem:[%s468 + $0x78] sm:$0xf]
        %v527 = vld [vmem:[%s468 + $0x7c] sm:$0xf]
        %v528 = vld [vmem:[%s4] sm:$0xf]
        %v529 = vld [vmem:[%s4 + $0x4] sm:$0xf]
        %v530 = vld [vmem:[%s4 + $0x8] sm:$0xf]
        %v531 = vld [vmem:[%s4 + $0xc] sm:$0xf]
        %v532 = vld [vmem:[%s474] sm:$0xf]
        %v533 = vld [vmem:[%s474 + $0x4] sm:$0xf]
        %v534 = vld [vmem:[%s474 + $0x8] sm:$0xf]
        %v535 = vld [vmem:[%s474 + $0xc] sm:$0xf]
        %v536 = vld [vmem:[%s474 + $0x10] sm:$0xf]
        %v537 = vld [vmem:[%s474 + $0x14] sm:$0xf]
        %v538 = vld [vmem:[%s474 + $0x18] sm:$0xf]
        %v539 = vld [vmem:[%s474 + $0x1c] sm:$0xf]
        %v540 = vld [vmem:[%s474 + $0x20] sm:$0xf]
        %v541 = vld [vmem:[%s474 + $0x24] sm:$0xf]
        %v542 = vld [vmem:[%s474 + $0x28] sm:$0xf]
        %v543 = vld [vmem:[%s474 + $0x2c] sm:$0xf]
        %v544 = vld [vmem:[%s474 + $0x30] sm:$0xf]
        %v545 = vld [vmem:[%s474 + $0x34] sm:$0xf]
        %v546 = vld [vmem:[%s474 + $0x38] sm:$0xf]
        %v547 = vld [vmem:[%s474 + $0x3c] sm:$0xf]
        %v548 = vld [vmem:[%s474 + $0x40] sm:$0xf]
        %v549 = vld [vmem:[%s474 + $0x44] sm:$0xf]
        %v550 = vld [vmem:[%s474 + $0x48] sm:$0xf]
        %v551 = vld [vmem:[%s474 + $0x4c] sm:$0xf]
        %v552 = vld [vmem:[%s474 + $0x50] sm:$0xf]
        %v553 = vld [vmem:[%s474 + $0x54] sm:$0xf]
        %v554 = vld [vmem:[%s474 + $0x58] sm:$0xf]
        %v555 = vld [vmem:[%s474 + $0x5c] sm:$0xf]
        %v556 = vld [vmem:[%s474 + $0x60] sm:$0xf]
        %v557 = vld [vmem:[%s474 + $0x64] sm:$0xf]
        %v558 = vld [vmem:[%s474 + $0x68] sm:$0xf]
        %v559 = vld [vmem:[%s474 + $0x6c] sm:$0xf]
        %v560 = vld [vmem:[%s474 + $0x70] sm:$0xf]
        %v561 = vld [vmem:[%s474 + $0x74] sm:$0xf]
        %v562 = vld [vmem:[%s474 + $0x78] sm:$0xf]
        %v563 = vld [vmem:[%s474 + $0x7c] sm:$0xf]
        %v564 = vld [vmem:[%s5] sm:$0xf]
        %v565 = vld [vmem:[%s5 + $0x4] sm:$0xf]
        %v566 = vld [vmem:[%s5 + $0x8] sm:$0xf]
        %v567 = vld [vmem:[%s5 + $0xc] sm:$0xf]
        %v600 = vunpack.c.l.b16 %v532
        %v601 = vunpack.c.l.b16 %v533
        %v602 = vunpack.c.l.b16 %v534
        %v603 = vunpack.c.l.b16 %v535
        %v604 = vunpack.c.l.b16 %v536
        %v605 = vunpack.c.l.b16 %v537
        %v606 = vunpack.c.l.b16 %v538
        %v607 = vunpack.c.l.b16 %v539
        %v608 = vunpack.c.l.b16 %v540
        %v609 = vunpack.c.l.b16 %v541
        %v610 = vunpack.c.l.b16 %v542
        %v611 = vunpack.c.l.b16 %v543
        %v612 = vunpack.c.l.b16 %v544
        %v613 = vunpack.c.l.b16 %v545
        %v614 = vunpack.c.l.b16 %v546
        %v615 = vunpack.c.l.b16 %v547
        %v616 = vunpack.c.l.b16 %v548
        %v617 = vunpack.c.l.b16 %v549
        %v618 = vunpack.c.l.b16 %v550
        %v619 = vunpack.c.l.b16 %v551
        %v620 = vunpack.c.l.b16 %v552
        %v621 = vunpack.c.l.b16 %v553
        %v622 = vunpack.c.l.b16 %v554
        %v623 = vunpack.c.l.b16 %v555
        %v624 = vunpack.c.l.b16 %v556
        %v625 = vunpack.c.l.b16 %v557
        %v626 = vunpack.c.l.b16 %v558
        %v627 = vunpack.c.l.b16 %v559
        %v628 = vunpack.c.l.b16 %v560
        %v629 = vunpack.c.l.b16 %v561
        %v630 = vunpack.c.l.b16 %v562
        %v631 = vunpack.c.l.b16 %v563
        %v632 = vpack.c.b16 %v601, %v600
        %v633 = vpack.c.b16 %v603, %v602
        %v634 = vpack.c.b16 %v605, %v604
        %v635 = vpack.c.b16 %v607, %v606
        %v636 = vpack.c.b16 %v609, %v608
        %v637 = vpack.c.b16 %v611, %v610
        %v638 = vpack.c.b16 %v613, %v612
        %v639 = vpack.c.b16 %v615, %v614
        %v640 = vpack.c.b16 %v617, %v616
        %v641 = vpack.c.b16 %v619, %v618
        %v642 = vpack.c.b16 %v621, %v620
        %v643 = vpack.c.b16 %v623, %v622
        %v644 = vpack.c.b16 %v625, %v624
        %v645 = vpack.c.b16 %v627, %v626
        %v646 = vpack.c.b16 %v629, %v628
        %v647 = vpack.c.b16 %v631, %v630
        %v652 = vunpack.c.l.b16 %v564
        %v653 = vunpack.c.l.b16 %v565
        %v654 = vunpack.c.l.b16 %v566
        %v655 = vunpack.c.l.b16 %v567
        %v656 = vpack.c.b16 %v653, %v652
        %v657 = vpack.c.b16 %v655, %v654
        %vm660 = vcmask 261120
        %v662 = vsel %vm660, %v632, 0
        %v665 = vsel %vm660, %v633, 0
        %v668 = vsel %vm660, %v634, 0
        %v671 = vsel %vm660, %v635, 0
        %v674 = vsel %vm660, %v636, 0
        %v677 = vsel %vm660, %v637, 0
        %v680 = vsel %vm660, %v638, 0
        %v683 = vsel %vm660, %v639, 0
        %v686 = vsel %vm660, %v640, 0
        %v689 = vsel %vm660, %v641, 0
        %v692 = vsel %vm660, %v642, 0
        %v695 = vsel %vm660, %v643, 0
        %v698 = vsel %vm660, %v644, 0
        %v701 = vsel %vm660, %v645, 0
        %v704 = vsel %vm660, %v646, 0
        %v707 = vsel %vm660, %v647, 0
        %709 = vmatprep.subr.bf16.mxu0 0
        %710 = vmatpush1.bf16.msra.mxu0 %v656
        %711 = vmatprep.subr.bf16.mxu0 0
        %712 = vmatpush1.bf16.msra.mxu0 %v657
        %713 = vmatprep.subr.bf16.mxu0 0
        %714 = vmatpush1.bf16.msra.mxu0 0
        %715 = vmatprep.subr.bf16.mxu0 0
        %716 = vmatpush1.bf16.msra.mxu0 0
        %717 = vmatprep.subr.bf16.mxu0 0
        %718 = vmatpush1.bf16.msra.mxu0 0
        %719 = vmatprep.subr.bf16.mxu0 0
        %720 = vmatpush1.bf16.msra.mxu0 0
        %721 = vmatprep.subr.bf16.mxu0 0
        %722 = vmatpush1.bf16.msra.mxu0 0
        %723 = vmatprep.subr.bf16.mxu0 0
        %724 = vmatpush1.bf16.msra.mxu0 0
        %725 = vmatprep.subr.bf16.mxu0 0
        %726 = vmatpush1.bf16.msra.mxu0 0
        %727 = vmatprep.subr.bf16.mxu0 0
        %728 = vmatpush1.bf16.msra.mxu0 0
        %729 = vmatprep.subr.bf16.mxu0 0
        %730 = vmatpush1.bf16.msra.mxu0 0
        %731 = vmatprep.subr.bf16.mxu0 0
        %732 = vmatpush1.bf16.msra.mxu0 0
        %733 = vmatprep.subr.bf16.mxu0 0
        %734 = vmatpush1.bf16.msra.mxu0 0
        %735 = vmatprep.subr.bf16.mxu0 0
        %736 = vmatpush1.bf16.msra.mxu0 0
        %737 = vmatprep.subr.bf16.mxu0 0
        %738 = vmatpush1.bf16.msra.mxu0 0
        %739 = vmatprep.subr.bf16.mxu0 0
        %740 = vmatpush1.bf16.msra.mxu0 0
        %741 = vmatprep.mubr.bf16.mxu0 0
        %742 = vmatmul.mubr.bf16.gmra.mrb[0].mxu0 %v662
        %v743 = vpop.f32.mrb[0].mxu0
        %v744 = vadd.f32 0.0, %v743
        %v745 = vpop.f32.mrb[0].mxu0
        %v746 = vpop.f32.mrb[0].mxu0
        %v747 = vadd.f32 0.0, %v746
        %v748 = vpop.f32.mrb[0].mxu0
        %749 = vmatprep.mubr.bf16.mxu0 0
        %750 = vmatmul.mubr.bf16.gmra.mrb[0].mxu0 %v665
        %v751 = vpop.f32.mrb[0].mxu0
        %v752 = vadd.f32 0.0, %v751
        %v753 = vpop.f32.mrb[0].mxu0
        %v754 = vpop.f32.mrb[0].mxu0
        %v755 = vadd.f32 0.0, %v754
        %v756 = vpop.f32.mrb[0].mxu0
        %757 = vmatprep.mubr.bf16.mxu0 0
        %758 = vmatmul.mubr.bf16.gmra.mrb[0].mxu0 %v668
        %v759 = vpop.f32.mrb[0].mxu0
        %v760 = vadd.f32 0.0, %v759
        %v761 = vpop.f32.mrb[0].mxu0
        %v762 = vpop.f32.mrb[0].mxu0
        %v763 = vadd.f32 0.0, %v762
        %v764 = vpop.f32.mrb[0].mxu0
        %765 = vmatprep.mubr.bf16.mxu0 0
        %766 = vmatmul.mubr.bf16.gmra.mrb[0].mxu0 %v671
        %v767 = vpop.f32.mrb[0].mxu0
        %v768 = vadd.f32 0.0, %v767
        %v769 = vpop.f32.mrb[0].mxu0
        %v770 = vpop.f32.mrb[0].mxu0
        %v771 = vadd.f32 0.0, %v770
        %v772 = vpop.f32.mrb[0].mxu0
        %773 = vmatprep.mubr.bf16.mxu0 0
        %774 = vmatmul.mubr.bf16.gmra.mrb[0].mxu0 %v674
        %v775 = vpop.f32.mrb[0].mxu0
        %v776 = vadd.f32 0.0, %v775
        %v777 = vpop.f32.mrb[0].mxu0
        %v778 = vpop.f32.mrb[0].mxu0
        %v779 = vadd.f32 0.0, %v778
        %v780 = vpop.f32.mrb[0].mxu0
        %781 = vmatprep.mubr.bf16.mxu0 0
        %782 = vmatmul.mubr.bf16.gmra.mrb[0].mxu0 %v677
        %v783 = vpop.f32.mrb[0].mxu0
        %v784 = vadd.f32 0.0, %v783
        %v785 = vpop.f32.mrb[0].mxu0
        %v786 = vpop.f32.mrb[0].mxu0
        %v787 = vadd.f32 0.0, %v786
        %v788 = vpop.f32.mrb[0].mxu0
        %789 = vmatprep.mubr.bf16.mxu0 0
        %790 = vmatmul.mubr.bf16.gmra.mrb[0].mxu0 %v680
        %v791 = vpop.f32.mrb[0].mxu0
        %v792 = vadd.f32 0.0, %v791
        %v793 = vpop.f32.mrb[0].mxu0
        %v794 = vpop.f32.mrb[0].mxu0
        %v795 = vadd.f32 0.0, %v794
        %v796 = vpop.f32.mrb[0].mxu0
        %797 = vmatprep.mubr.bf16.mxu0 0
        %798 = vmatmul.mubr.bf16.gmra.mrb[0].mxu0 %v683
        %v799 = vpop.f32.mrb[0].mxu0
        %v800 = vadd.f32 0.0, %v799
        %v801 = vpop.f32.mrb[0].mxu0
        %v802 = vpop.f32.mrb[0].mxu0
        %v803 = vadd.f32 0.0, %v802
        %v804 = vpop.f32.mrb[0].mxu0
        %805 = vmatprep.mubr.bf16.mxu0 0
        %806 = vmatmul.mubr.bf16.gmra.mrb[0].mxu0 %v686
        %v807 = vpop.f32.mrb[0].mxu0
        %v808 = vadd.f32 0.0, %v807
        %v809 = vpop.f32.mrb[0].mxu0
        %v810 = vpop.f32.mrb[0].mxu0
        %v811 = vadd.f32 0.0, %v810
        %v812 = vpop.f32.mrb[0].mxu0
        %813 = vmatprep.mubr.bf16.mxu0 0
        %814 = vmatmul.mubr.bf16.gmra.mrb[0].mxu0 %v689
        %v815 = vpop.f32.mrb[0].mxu0
        %v816 = vadd.f32 0.0, %v815
        %v817 = vpop.f32.mrb[0].mxu0
        %v818 = vpop.f32.mrb[0].mxu0
        %v819 = vadd.f32 0.0, %v818
        %v820 = vpop.f32.mrb[0].mxu0
        %821 = vmatprep.mubr.bf16.mxu0 0
        %822 = vmatmul.mubr.bf16.gmra.mrb[0].mxu0 %v692
        %v823 = vpop.f32.mrb[0].mxu0
        %v824 = vadd.f32 0.0, %v823
        %v825 = vpop.f32.mrb[0].mxu0
        %v826 = vpop.f32.mrb[0].mxu0
        %v827 = vadd.f32 0.0, %v826
        %v828 = vpop.f32.mrb[0].mxu0
        %829 = vmatprep.mubr.bf16.mxu0 0
        %830 = vmatmul.mubr.bf16.gmra.mrb[0].mxu0 %v695
        %v831 = vpop.f32.mrb[0].mxu0
        %v832 = vadd.f32 0.0, %v831
        %v833 = vpop.f32.mrb[0].mxu0
        %v834 = vpop.f32.mrb[0].mxu0
        %v835 = vadd.f32 0.0, %v834
        %v836 = vpop.f32.mrb[0].mxu0
        %837 = vmatprep.mubr.bf16.mxu0 0
        %838 = vmatmul.mubr.bf16.gmra.mrb[0].mxu0 %v698
        %v839 = vpop.f32.mrb[0].mxu0
        %v840 = vadd.f32 0.0, %v839
        %v841 = vpop.f32.mrb[0].mxu0
        %v842 = vpop.f32.mrb[0].mxu0
        %v843 = vadd.f32 0.0, %v842
        %v844 = vpop.f32.mrb[0].mxu0
        %845 = vmatprep.mubr.bf16.mxu0 0
        %846 = vmatmul.mubr.bf16.gmra.mrb[0].mxu0 %v701
        %v847 = vpop.f32.mrb[0].mxu0
        %v848 = vadd.f32 0.0, %v847
        %v849 = vpop.f32.mrb[0].mxu0
        %v850 = vpop.f32.mrb[0].mxu0
        %v851 = vadd.f32 0.0, %v850
        %v852 = vpop.f32.mrb[0].mxu0
        %853 = vmatprep.mubr.bf16.mxu0 0
        %854 = vmatmul.mubr.bf16.gmra.mrb[0].mxu0 %v704
        %v855 = vpop.f32.mrb[0].mxu0
        %v856 = vadd.f32 0.0, %v855
        %v857 = vpop.f32.mrb[0].mxu0
        %v858 = vpop.f32.mrb[0].mxu0
        %v859 = vadd.f32 0.0, %v858
        %v860 = vpop.f32.mrb[0].mxu0
        %861 = vmatprep.mubr.bf16.mxu0 0
        %862 = vmatmul.mubr.bf16.gmra.mrb[0].mxu0 %v707
        %v863 = vpop.f32.mrb[0].mxu0
        %v864 = vadd.f32 0.0, %v863
        %v865 = vpop.f32.mrb[0].mxu0
        %v866 = vpop.f32.mrb[0].mxu0
        %v867 = vadd.f32 0.0, %v866
        %v868 = vpop.f32.mrb[0].mxu0
        %869 = vdwg.mxu0
        %v902 = vunpack.c.l.b16 %v496
        %v903 = vunpack.c.l.b16 %v497
        %v904 = vunpack.c.l.b16 %v498
        %v905 = vunpack.c.l.b16 %v499
        %v906 = vunpack.c.l.b16 %v500
        %v907 = vunpack.c.l.b16 %v501
        %v908 = vunpack.c.l.b16 %v502
        %v909 = vunpack.c.l.b16 %v503
        %v910 = vunpack.c.l.b16 %v504
        %v911 = vunpack.c.l.b16 %v505
        %v912 = vunpack.c.l.b16 %v506
        %v913 = vunpack.c.l.b16 %v507
        %v914 = vunpack.c.l.b16 %v508
        %v915 = vunpack.c.l.b16 %v509
        %v916 = vunpack.c.l.b16 %v510
        %v917 = vunpack.c.l.b16 %v511
        %v918 = vunpack.c.l.b16 %v512
        %v919 = vunpack.c.l.b16 %v513
        %v920 = vunpack.c.l.b16 %v514
        %v921 = vunpack.c.l.b16 %v515
        %v922 = vunpack.c.l.b16 %v516
        %v923 = vunpack.c.l.b16 %v517
        %v924 = vunpack.c.l.b16 %v518
        %v925 = vunpack.c.l.b16 %v519
        %v926 = vunpack.c.l.b16 %v520
        %v927 = vunpack.c.l.b16 %v521
        %v928 = vunpack.c.l.b16 %v522
        %v929 = vunpack.c.l.b16 %v523
        %v930 = vunpack.c.l.b16 %v524
        %v931 = vunpack.c.l.b16 %v525
        %v932 = vunpack.c.l.b16 %v526
        %v933 = vunpack.c.l.b16 %v527
        %v934 = vpack.c.b16 %v903, %v902
        %v935 = vpack.c.b16 %v905, %v904
        %v936 = vpack.c.b16 %v907, %v906
        %v937 = vpack.c.b16 %v909, %v908
        %v938 = vpack.c.b16 %v911, %v910
        %v939 = vpack.c.b16 %v913, %v912
        %v940 = vpack.c.b16 %v915, %v914
        %v941 = vpack.c.b16 %v917, %v916
        %v942 = vpack.c.b16 %v919, %v918
        %v943 = vpack.c.b16 %v921, %v920
        %v944 = vpack.c.b16 %v923, %v922
        %v945 = vpack.c.b16 %v925, %v924
        %v946 = vpack.c.b16 %v927, %v926
        %v947 = vpack.c.b16 %v929, %v928
        %v948 = vpack.c.b16 %v931, %v930
        %v949 = vpack.c.b16 %v933, %v932
        %v954 = vunpack.c.l.b16 %v528
        %v955 = vunpack.c.l.b16 %v529
        %v956 = vunpack.c.l.b16 %v530
        %v957 = vunpack.c.l.b16 %v531
        %v958 = vpack.c.b16 %v955, %v954
        %v959 = vpack.c.b16 %v957, %v956
        %v963 = vsel %vm660, %v934, 0
        %v966 = vsel %vm660, %v935, 0
        %v969 = vsel %vm660, %v936, 0
        %v972 = vsel %vm660, %v937, 0
        %v975 = vsel %vm660, %v938, 0
        %v978 = vsel %vm660, %v939, 0
        %v981 = vsel %vm660, %v940, 0
        %v984 = vsel %vm660, %v941, 0
        %v987 = vsel %vm660, %v942, 0
        %v990 = vsel %vm660, %v943, 0
        %v993 = vsel %vm660, %v944, 0
        %v996 = vsel %vm660, %v945, 0
        %v999 = vsel %vm660, %v946, 0
        %v1002 = vsel %vm660, %v947, 0
        %v1005 = vsel %vm660, %v948, 0
        %v1008 = vsel %vm660, %v949, 0
        %1010 = vmatprep.subr.bf16.mxu0 0
        %1011 = vmatpush1.bf16.msra.mxu0 %v958
        %1012 = vmatprep.subr.bf16.mxu0 0
        %1013 = vmatpush1.bf16.msra.mxu0 %v959
        %1014 = vmatprep.subr.bf16.mxu0 0
        %1015 = vmatpush1.bf16.msra.mxu0 0
        %1016 = vmatprep.subr.bf16.mxu0 0
        %1017 = vmatpush1.bf16.msra.mxu0 0
        %1018 = vmatprep.subr.bf16.mxu0 0
        %1019 = vmatpush1.bf16.msra.mxu0 0
        %1020 = vmatprep.subr.bf16.mxu0 0
        %1021 = vmatpush1.bf16.msra.mxu0 0
        %1022 = vmatprep.subr.bf16.mxu0 0
        %1023 = vmatpush1.bf16.msra.mxu0 0
        %1024 = vmatprep.subr.bf16.mxu0 0
        %1025 = vmatpush1.bf16.msra.mxu0 0
        %1026 = vmatprep.subr.bf16.mxu0 0
        %1027 = vmatpush1.bf16.msra.mxu0 0
        %1028 = vmatprep.subr.bf16.mxu0 0
        %1029 = vmatpush1.bf16.msra.mxu0 0
        %1030 = vmatprep.subr.bf16.mxu0 0
        %1031 = vmatpush1.bf16.msra.mxu0 0
        %1032 = vmatprep.subr.bf16.mxu0 0
        %1033 = vmatpush1.bf16.msra.mxu0 0
        %1034 = vmatprep.subr.bf16.mxu0 0
        %1035 = vmatpush1.bf16.msra.mxu0 0
        %1036 = vmatprep.subr.bf16.mxu0 0
        %1037 = vmatpush1.bf16.msra.mxu0 0
        %1038 = vmatprep.subr.bf16.mxu0 0
        %1039 = vmatpush1.bf16.msra.mxu0 0
        %1040 = vmatprep.subr.bf16.mxu0 0
        %1041 = vmatpush1.bf16.msra.mxu0 0
        %1042 = vmatprep.mubr.bf16.mxu0 0
        %1043 = vmatmul.mubr.bf16.gmra.mrb[0].mxu0 %v963
        %v1044 = vpop.f32.mrb[0].mxu0
        %v1045 = vadd.f32 %v744, %v1044
        %v1046 = vpop.f32.mrb[0].mxu0
        %v1047 = vpop.f32.mrb[0].mxu0
        %v1048 = vadd.f32 %v747, %v1047
        %v1049 = vpop.f32.mrb[0].mxu0
        %1050 = vmatprep.mubr.bf16.mxu0 0
        %1051 = vmatmul.mubr.bf16.gmra.mrb[0].mxu0 %v966
        %v1052 = vpop.f32.mrb[0].mxu0
        %v1053 = vadd.f32 %v752, %v1052
        %v1054 = vpop.f32.mrb[0].mxu0
        %v1055 = vpop.f32.mrb[0].mxu0
        %v1056 = vadd.f32 %v755, %v1055
        %v1057 = vpop.f32.mrb[0].mxu0
        %1058 = vmatprep.mubr.bf16.mxu0 0
        %1059 = vmatmul.mubr.bf16.gmra.mrb[0].mxu0 %v969
        %v1060 = vpop.f32.mrb[0].mxu0
        %v1061 = vadd.f32 %v760, %v1060
        %v1062 = vpop.f32.mrb[0].mxu0
        %v1063 = vpop.f32.mrb[0].mxu0
        %v1064 = vadd.f32 %v763, %v1063
        %v1065 = vpop.f32.mrb[0].mxu0
        %1066 = vmatprep.mubr.bf16.mxu0 0
        %1067 = vmatmul.mubr.bf16.gmra.mrb[0].mxu0 %v972
        %v1068 = vpop.f32.mrb[0].mxu0
        %v1069 = vadd.f32 %v768, %v1068
        %v1070 = vpop.f32.mrb[0].mxu0
        %v1071 = vpop.f32.mrb[0].mxu0
        %v1072 = vadd.f32 %v771, %v1071
        %v1073 = vpop.f32.mrb[0].mxu0
        %1074 = vmatprep.mubr.bf16.mxu0 0
        %1075 = vmatmul.mubr.bf16.gmra.mrb[0].mxu0 %v975
        %v1076 = vpop.f32.mrb[0].mxu0
        %v1077 = vadd.f32 %v776, %v1076
        %v1078 = vpop.f32.mrb[0].mxu0
        %v1079 = vpop.f32.mrb[0].mxu0
        %v1080 = vadd.f32 %v779, %v1079
        %v1081 = vpop.f32.mrb[0].mxu0
        %1082 = vmatprep.mubr.bf16.mxu0 0
        %1083 = vmatmul.mubr.bf16.gmra.mrb[0].mxu0 %v978
        %v1084 = vpop.f32.mrb[0].mxu0
        %v1085 = vadd.f32 %v784, %v1084
        %v1086 = vpop.f32.mrb[0].mxu0
        %v1087 = vpop.f32.mrb[0].mxu0
        %v1088 = vadd.f32 %v787, %v1087
        %v1089 = vpop.f32.mrb[0].mxu0
        %1090 = vmatprep.mubr.bf16.mxu0 0
        %1091 = vmatmul.mubr.bf16.gmra.mrb[0].mxu0 %v981
        %v1092 = vpop.f32.mrb[0].mxu0
        %v1093 = vadd.f32 %v792, %v1092
        %v1094 = vpop.f32.mrb[0].mxu0
        %v1095 = vpop.f32.mrb[0].mxu0
        %v1096 = vadd.f32 %v795, %v1095
        %v1097 = vpop.f32.mrb[0].mxu0
        %1098 = vmatprep.mubr.bf16.mxu0 0
        %1099 = vmatmul.mubr.bf16.gmra.mrb[0].mxu0 %v984
        %v1100 = vpop.f32.mrb[0].mxu0
        %v1101 = vadd.f32 %v800, %v1100
        %v1102 = vpop.f32.mrb[0].mxu0
        %v1103 = vpop.f32.mrb[0].mxu0
        %v1104 = vadd.f32 %v803, %v1103
        %v1105 = vpop.f32.mrb[0].mxu0
        %1106 = vmatprep.mubr.bf16.mxu0 0
        %1107 = vmatmul.mubr.bf16.gmra.mrb[0].mxu0 %v987
        %v1108 = vpop.f32.mrb[0].mxu0
        %v1109 = vadd.f32 %v808, %v1108
        %v1110 = vpop.f32.mrb[0].mxu0
        %v1111 = vpop.f32.mrb[0].mxu0
        %v1112 = vadd.f32 %v811, %v1111
        %v1113 = vpop.f32.mrb[0].mxu0
        %1114 = vmatprep.mubr.bf16.mxu0 0
        %1115 = vmatmul.mubr.bf16.gmra.mrb[0].mxu0 %v990
        %v1116 = vpop.f32.mrb[0].mxu0
        %v1117 = vadd.f32 %v816, %v1116
        %v1118 = vpop.f32.mrb[0].mxu0
        %v1119 = vpop.f32.mrb[0].mxu0
        %v1120 = vadd.f32 %v819, %v1119
        %v1121 = vpop.f32.mrb[0].mxu0
        %1122 = vmatprep.mubr.bf16.mxu0 0
        %1123 = vmatmul.mubr.bf16.gmra.mrb[0].mxu0 %v993
        %v1124 = vpop.f32.mrb[0].mxu0
        %v1125 = vadd.f32 %v824, %v1124
        %v1126 = vpop.f32.mrb[0].mxu0
        %v1127 = vpop.f32.mrb[0].mxu0
        %v1128 = vadd.f32 %v827, %v1127
        %v1129 = vpop.f32.mrb[0].mxu0
        %1130 = vmatprep.mubr.bf16.mxu0 0
        %1131 = vmatmul.mubr.bf16.gmra.mrb[0].mxu0 %v996
        %v1132 = vpop.f32.mrb[0].mxu0
        %v1133 = vadd.f32 %v832, %v1132
        %v1134 = vpop.f32.mrb[0].mxu0
        %v1135 = vpop.f32.mrb[0].mxu0
        %v1136 = vadd.f32 %v835, %v1135
        %v1137 = vpop.f32.mrb[0].mxu0
        %1138 = vmatprep.mubr.bf16.mxu0 0
        %1139 = vmatmul.mubr.bf16.gmra.mrb[0].mxu0 %v999
        %v1140 = vpop.f32.mrb[0].mxu0
        %v1141 = vadd.f32 %v840, %v1140
        %v1142 = vpop.f32.mrb[0].mxu0
        %v1143 = vpop.f32.mrb[0].mxu0
        %v1144 = vadd.f32 %v843, %v1143
        %v1145 = vpop.f32.mrb[0].mxu0
        %1146 = vmatprep.mubr.bf16.mxu0 0
        %1147 = vmatmul.mubr.bf16.gmra.mrb[0].mxu0 %v1002
        %v1148 = vpop.f32.mrb[0].mxu0
        %v1149 = vadd.f32 %v848, %v1148
        %v1150 = vpop.f32.mrb[0].mxu0
        %v1151 = vpop.f32.mrb[0].mxu0
        %v1152 = vadd.f32 %v851, %v1151
        %v1153 = vpop.f32.mrb[0].mxu0
        %1154 = vmatprep.mubr.bf16.mxu0 0
        %1155 = vmatmul.mubr.bf16.gmra.mrb[0].mxu0 %v1005
        %v1156 = vpop.f32.mrb[0].mxu0
        %v1157 = vadd.f32 %v856, %v1156
        %v1158 = vpop.f32.mrb[0].mxu0
        %v1159 = vpop.f32.mrb[0].mxu0
        %v1160 = vadd.f32 %v859, %v1159
        %v1161 = vpop.f32.mrb[0].mxu0
        %1162 = vmatprep.mubr.bf16.mxu0 0
        %1163 = vmatmul.mubr.bf16.gmra.mrb[0].mxu0 %v1008
        %v1164 = vpop.f32.mrb[0].mxu0
        %v1165 = vadd.f32 %v864, %v1164
        %v1166 = vpop.f32.mrb[0].mxu0
        %v1167 = vpop.f32.mrb[0].mxu0
        %v1168 = vadd.f32 %v867, %v1167
        %v1169 = vpop.f32.mrb[0].mxu0
        %1170 = vdwg.mxu0
        %v1171 = vld [vmem:[%s480] sm:$0xf]
        %v1172 = vld [vmem:[%s480 + $0x4] sm:$0xf]
        %v1173 = vld [vmem:[%s480 + $0x8] sm:$0xf]
        %v1174 = vld [vmem:[%s480 + $0xc] sm:$0xf]
        %v1175 = vld [vmem:[%s480 + $0x10] sm:$0xf]
        %v1176 = vld [vmem:[%s480 + $0x14] sm:$0xf]
        %v1177 = vld [vmem:[%s480 + $0x18] sm:$0xf]
        %v1178 = vld [vmem:[%s480 + $0x1c] sm:$0xf]
        %v1179 = vld [vmem:[%s480 + $0x20] sm:$0xf]
        %v1180 = vld [vmem:[%s480 + $0x24] sm:$0xf]
        %v1181 = vld [vmem:[%s480 + $0x28] sm:$0xf]
        %v1182 = vld [vmem:[%s480 + $0x2c] sm:$0xf]
        %v1183 = vld [vmem:[%s480 + $0x30] sm:$0xf]
        %v1184 = vld [vmem:[%s480 + $0x34] sm:$0xf]
        %v1185 = vld [vmem:[%s480 + $0x38] sm:$0xf]
        %v1186 = vld [vmem:[%s480 + $0x3c] sm:$0xf]
        %v1187 = vld [vmem:[%s480 + $0x40] sm:$0xf]
        %v1188 = vld [vmem:[%s480 + $0x44] sm:$0xf]
        %v1189 = vld [vmem:[%s480 + $0x48] sm:$0xf]
        %v1190 = vld [vmem:[%s480 + $0x4c] sm:$0xf]
        %v1191 = vld [vmem:[%s480 + $0x50] sm:$0xf]
        %v1192 = vld [vmem:[%s480 + $0x54] sm:$0xf]
        %v1193 = vld [vmem:[%s480 + $0x58] sm:$0xf]
        %v1194 = vld [vmem:[%s480 + $0x5c] sm:$0xf]
        %v1195 = vld [vmem:[%s480 + $0x60] sm:$0xf]
        %v1196 = vld [vmem:[%s480 + $0x64] sm:$0xf]
        %v1197 = vld [vmem:[%s480 + $0x68] sm:$0xf]
        %v1198 = vld [vmem:[%s480 + $0x6c] sm:$0xf]
        %v1199 = vld [vmem:[%s480 + $0x70] sm:$0xf]
        %v1200 = vld [vmem:[%s480 + $0x74] sm:$0xf]
        %v1201 = vld [vmem:[%s480 + $0x78] sm:$0xf]
        %v1202 = vld [vmem:[%s480 + $0x7c] sm:$0xf]
        %v1203 = vld [vmem:[%s6] sm:$0xf]
        %v1204 = vld [vmem:[%s6 + $0x4] sm:$0xf]
        %v1205 = vld [vmem:[%s6 + $0x8] sm:$0xf]
        %v1206 = vld [vmem:[%s6 + $0xc] sm:$0xf]
        %v1239 = vunpack.c.l.b16 %v1171
        %v1240 = vunpack.c.l.b16 %v1172
        %v1241 = vunpack.c.l.b16 %v1173
        %v1242 = vunpack.c.l.b16 %v1174
        %v1243 = vunpack.c.l.b16 %v1175
        %v1244 = vunpack.c.l.b16 %v1176
        %v1245 = vunpack.c.l.b16 %v1177
        %v1246 = vunpack.c.l.b16 %v1178
        %v1247 = vunpack.c.l.b16 %v1179
        %v1248 = vunpack.c.l.b16 %v1180
        %v1249 = vunpack.c.l.b16 %v1181
        %v1250 = vunpack.c.l.b16 %v1182
        %v1251 = vunpack.c.l.b16 %v1183
        %v1252 = vunpack.c.l.b16 %v1184
        %v1253 = vunpack.c.l.b16 %v1185
        %v1254 = vunpack.c.l.b16 %v1186
        %v1255 = vunpack.c.l.b16 %v1187
        %v1256 = vunpack.c.l.b16 %v1188
        %v1257 = vunpack.c.l.b16 %v1189
        %v1258 = vunpack.c.l.b16 %v1190
        %v1259 = vunpack.c.l.b16 %v1191
        %v1260 = vunpack.c.l.b16 %v1192
        %v1261 = vunpack.c.l.b16 %v1193
        %v1262 = vunpack.c.l.b16 %v1194
        %v1263 = vunpack.c.l.b16 %v1195
        %v1264 = vunpack.c.l.b16 %v1196
        %v1265 = vunpack.c.l.b16 %v1197
        %v1266 = vunpack.c.l.b16 %v1198
        %v1267 = vunpack.c.l.b16 %v1199
        %v1268 = vunpack.c.l.b16 %v1200
        %v1269 = vunpack.c.l.b16 %v1201
        %v1270 = vunpack.c.l.b16 %v1202
        %v1271 = vpack.c.b16 %v1240, %v1239
        %v1272 = vpack.c.b16 %v1242, %v1241
        %v1273 = vpack.c.b16 %v1244, %v1243
        %v1274 = vpack.c.b16 %v1246, %v1245
        %v1275 = vpack.c.b16 %v1248, %v1247
        %v1276 = vpack.c.b16 %v1250, %v1249
        %v1277 = vpack.c.b16 %v1252, %v1251
        %v1278 = vpack.c.b16 %v1254, %v1253
        %v1279 = vpack.c.b16 %v1256, %v1255
        %v1280 = vpack.c.b16 %v1258, %v1257
        %v1281 = vpack.c.b16 %v1260, %v1259
        %v1282 = vpack.c.b16 %v1262, %v1261
        %v1283 = vpack.c.b16 %v1264, %v1263
        %v1284 = vpack.c.b16 %v1266, %v1265
        %v1285 = vpack.c.b16 %v1268, %v1267
        %v1286 = vpack.c.b16 %v1270, %v1269
        %v1291 = vunpack.c.l.b16 %v1203
        %v1292 = vunpack.c.l.b16 %v1204
        %v1293 = vunpack.c.l.b16 %v1205
        %v1294 = vunpack.c.l.b16 %v1206
        %v1295 = vpack.c.b16 %v1292, %v1291
        %v1296 = vpack.c.b16 %v1294, %v1293
        %v1300 = vsel %vm660, %v1271, 0
        %v1303 = vsel %vm660, %v1272, 0
        %v1306 = vsel %vm660, %v1273, 0
        %v1309 = vsel %vm660, %v1274, 0
        %v1312 = vsel %vm660, %v1275, 0
        %v1315 = vsel %vm660, %v1276, 0
        %v1318 = vsel %vm660, %v1277, 0
        %v1321 = vsel %vm660, %v1278, 0
        %v1324 = vsel %vm660, %v1279, 0
        %v1327 = vsel %vm660, %v1280, 0
        %v1330 = vsel %vm660, %v1281, 0
        %v1333 = vsel %vm660, %v1282, 0
        %v1336 = vsel %vm660, %v1283, 0
        %v1339 = vsel %vm660, %v1284, 0
        %v1342 = vsel %vm660, %v1285, 0
        %v1345 = vsel %vm660, %v1286, 0
        %1347 = vmatprep.subr.bf16.mxu0 0
        %1348 = vmatpush1.bf16.msra.mxu0 %v1295
        %1349 = vmatprep.subr.bf16.mxu0 0
        %1350 = vmatpush1.bf16.msra.mxu0 %v1296
        %1351 = vmatprep.subr.bf16.mxu0 0
        %1352 = vmatpush1.bf16.msra.mxu0 0
        %1353 = vmatprep.subr.bf16.mxu0 0
        %1354 = vmatpush1.bf16.msra.mxu0 0
        %1355 = vmatprep.subr.bf16.mxu0 0
        %1356 = vmatpush1.bf16.msra.mxu0 0
        %1357 = vmatprep.subr.bf16.mxu0 0
        %1358 = vmatpush1.bf16.msra.mxu0 0
        %1359 = vmatprep.subr.bf16.mxu0 0
        %1360 = vmatpush1.bf16.msra.mxu0 0
        %1361 = vmatprep.subr.bf16.mxu0 0
        %1362 = vmatpush1.bf16.msra.mxu0 0
        %1363 = vmatprep.subr.bf16.mxu0 0
        %1364 = vmatpush1.bf16.msra.mxu0 0
        %1365 = vmatprep.subr.bf16.mxu0 0
        %1366 = vmatpush1.bf16.msra.mxu0 0
        %1367 = vmatprep.subr.bf16.mxu0 0
        %1368 = vmatpush1.bf16.msra.mxu0 0
        %1369 = vmatprep.subr.bf16.mxu0 0
        %1370 = vmatpush1.bf16.msra.mxu0 0
        %1371 = vmatprep.subr.bf16.mxu0 0
        %1372 = vmatpush1.bf16.msra.mxu0 0
        %1373 = vmatprep.subr.bf16.mxu0 0
        %1374 = vmatpush1.bf16.msra.mxu0 0
        %1375 = vmatprep.subr.bf16.mxu0 0
        %1376 = vmatpush1.bf16.msra.mxu0 0
        %1377 = vmatprep.subr.bf16.mxu0 0
        %1378 = vmatpush1.bf16.msra.mxu0 0
        %1379 = vmatprep.mubr.bf16.mxu0 0
        %1380 = vmatmul.mubr.bf16.gmra.mrb[0].mxu0 %v1300
        %v1381 = vpop.f32.mrb[0].mxu0
        %v1382 = vadd.f32 0.0, %v1381
        %v1383 = vpop.f32.mrb[0].mxu0
        %v1384 = vpop.f32.mrb[0].mxu0
        %v1385 = vadd.f32 0.0, %v1384
        %v1386 = vpop.f32.mrb[0].mxu0
        %1387 = vmatprep.mubr.bf16.mxu0 0
        %1388 = vmatmul.mubr.bf16.gmra.mrb[0].mxu0 %v1303
        %v1389 = vpop.f32.mrb[0].mxu0
        %v1390 = vadd.f32 0.0, %v1389
        %v1391 = vpop.f32.mrb[0].mxu0
        %v1392 = vpop.f32.mrb[0].mxu0
        %v1393 = vadd.f32 0.0, %v1392
        %v1394 = vpop.f32.mrb[0].mxu0
        %1395 = vmatprep.mubr.bf16.mxu0 0
        %1396 = vmatmul.mubr.bf16.gmra.mrb[0].mxu0 %v1306
        %v1397 = vpop.f32.mrb[0].mxu0
        %v1398 = vadd.f32 0.0, %v1397
        %v1399 = vpop.f32.mrb[0].mxu0
        %v1400 = vpop.f32.mrb[0].mxu0
        %v1401 = vadd.f32 0.0, %v1400
        %v1402 = vpop.f32.mrb[0].mxu0
        %1403 = vmatprep.mubr.bf16.mxu0 0
        %1404 = vmatmul.mubr.bf16.gmra.mrb[0].mxu0 %v1309
        %v1405 = vpop.f32.mrb[0].mxu0
        %v1406 = vadd.f32 0.0, %v1405
        %v1407 = vpop.f32.mrb[0].mxu0
        %v1408 = vpop.f32.mrb[0].mxu0
        %v1409 = vadd.f32 0.0, %v1408
        %v1410 = vpop.f32.mrb[0].mxu0
        %1411 = vmatprep.mubr.bf16.mxu0 0
        %1412 = vmatmul.mubr.bf16.gmra.mrb[0].mxu0 %v1312
        %v1413 = vpop.f32.mrb[0].mxu0
        %v1414 = vadd.f32 0.0, %v1413
        %v1415 = vpop.f32.mrb[0].mxu0
        %v1416 = vpop.f32.mrb[0].mxu0
        %v1417 = vadd.f32 0.0, %v1416
        %v1418 = vpop.f32.mrb[0].mxu0
        %1419 = vmatprep.mubr.bf16.mxu0 0
        %1420 = vmatmul.mubr.bf16.gmra.mrb[0].mxu0 %v1315
        %v1421 = vpop.f32.mrb[0].mxu0
        %v1422 = vadd.f32 0.0, %v1421
        %v1423 = vpop.f32.mrb[0].mxu0
        %v1424 = vpop.f32.mrb[0].mxu0
        %v1425 = vadd.f32 0.0, %v1424
        %v1426 = vpop.f32.mrb[0].mxu0
        %1427 = vmatprep.mubr.bf16.mxu0 0
        %1428 = vmatmul.mubr.bf16.gmra.mrb[0].mxu0 %v1318
        %v1429 = vpop.f32.mrb[0].mxu0
        %v1430 = vadd.f32 0.0, %v1429
        %v1431 = vpop.f32.mrb[0].mxu0
        %v1432 = vpop.f32.mrb[0].mxu0
        %v1433 = vadd.f32 0.0, %v1432
        %v1434 = vpop.f32.mrb[0].mxu0
        %1435 = vmatprep.mubr.bf16.mxu0 0
        %1436 = vmatmul.mubr.bf16.gmra.mrb[0].mxu0 %v1321
        %v1437 = vpop.f32.mrb[0].mxu0
        %v1438 = vadd.f32 0.0, %v1437
        %v1439 = vpop.f32.mrb[0].mxu0
        %v1440 = vpop.f32.mrb[0].mxu0
        %v1441 = vadd.f32 0.0, %v1440
        %v1442 = vpop.f32.mrb[0].mxu0
        %1443 = vmatprep.mubr.bf16.mxu0 0
        %1444 = vmatmul.mubr.bf16.gmra.mrb[0].mxu0 %v1324
        %v1445 = vpop.f32.mrb[0].mxu0
        %v1446 = vadd.f32 0.0, %v1445
        %v1447 = vpop.f32.mrb[0].mxu0
        %v1448 = vpop.f32.mrb[0].mxu0
        %v1449 = vadd.f32 0.0, %v1448
        %v1450 = vpop.f32.mrb[0].mxu0
        %1451 = vmatprep.mubr.bf16.mxu0 0
        %1452 = vmatmul.mubr.bf16.gmra.mrb[0].mxu0 %v1327
        %v1453 = vpop.f32.mrb[0].mxu0
        %v1454 = vadd.f32 0.0, %v1453
        %v1455 = vpop.f32.mrb[0].mxu0
        %v1456 = vpop.f32.mrb[0].mxu0
        %v1457 = vadd.f32 0.0, %v1456
        %v1458 = vpop.f32.mrb[0].mxu0
        %1459 = vmatprep.mubr.bf16.mxu0 0
        %1460 = vmatmul.mubr.bf16.gmra.mrb[0].mxu0 %v1330
        %v1461 = vpop.f32.mrb[0].mxu0
        %v1462 = vadd.f32 0.0, %v1461
        %v1463 = vpop.f32.mrb[0].mxu0
        %v1464 = vpop.f32.mrb[0].mxu0
        %v1465 = vadd.f32 0.0, %v1464
        %v1466 = vpop.f32.mrb[0].mxu0
        %1467 = vmatprep.mubr.bf16.mxu0 0
        %1468 = vmatmul.mubr.bf16.gmra.mrb[0].mxu0 %v1333
        %v1469 = vpop.f32.mrb[0].mxu0
        %v1470 = vadd.f32 0.0, %v1469
        %v1471 = vpop.f32.mrb[0].mxu0
        %v1472 = vpop.f32.mrb[0].mxu0
        %v1473 = vadd.f32 0.0, %v1472
        %v1474 = vpop.f32.mrb[0].mxu0
        %1475 = vmatprep.mubr.bf16.mxu0 0
        %1476 = vmatmul.mubr.bf16.gmra.mrb[0].mxu0 %v1336
        %v1477 = vpop.f32.mrb[0].mxu0
        %v1478 = vadd.f32 0.0, %v1477
        %v1479 = vpop.f32.mrb[0].mxu0
        %v1480 = vpop.f32.mrb[0].mxu0
        %v1481 = vadd.f32 0.0, %v1480
        %v1482 = vpop.f32.mrb[0].mxu0
        %1483 = vmatprep.mubr.bf16.mxu0 0
        %1484 = vmatmul.mubr.bf16.gmra.mrb[0].mxu0 %v1339
        %v1485 = vpop.f32.mrb[0].mxu0
        %v1486 = vadd.f32 0.0, %v1485
        %v1487 = vpop.f32.mrb[0].mxu0
        %v1488 = vpop.f32.mrb[0].mxu0
        %v1489 = vadd.f32 0.0, %v1488
        %v1490 = vpop.f32.mrb[0].mxu0
        %1491 = vmatprep.mubr.bf16.mxu0 0
        %1492 = vmatmul.mubr.bf16.gmra.mrb[0].mxu0 %v1342
        %v1493 = vpop.f32.mrb[0].mxu0
        %v1494 = vadd.f32 0.0, %v1493
        %v1495 = vpop.f32.mrb[0].mxu0
        %v1496 = vpop.f32.mrb[0].mxu0
        %v1497 = vadd.f32 0.0, %v1496
        %v1498 = vpop.f32.mrb[0].mxu0
        %1499 = vmatprep.mubr.bf16.mxu0 0
        %1500 = vmatmul.mubr.bf16.gmra.mrb[0].mxu0 %v1345
        %v1501 = vpop.f32.mrb[0].mxu0
        %v1502 = vadd.f32 0.0, %v1501
        %v1503 = vpop.f32.mrb[0].mxu0
        %v1504 = vpop.f32.mrb[0].mxu0
        %v1505 = vadd.f32 0.0, %v1504
        %v1506 = vpop.f32.mrb[0].mxu0
        %1507 = vdwg.mxu0
        %v1508 = vadd.f32 %v1045, %v1382
        %v1509 = vadd.f32 %v1048, %v1385
        %v1510 = vadd.f32 %v1053, %v1390
        %v1511 = vadd.f32 %v1056, %v1393
        %v1512 = vadd.f32 %v1061, %v1398
        %v1513 = vadd.f32 %v1064, %v1401
        %v1514 = vadd.f32 %v1069, %v1406
        %v1515 = vadd.f32 %v1072, %v1409
        %v1516 = vadd.f32 %v1077, %v1414
        %v1517 = vadd.f32 %v1080, %v1417
        %v1518 = vadd.f32 %v1085, %v1422
        %v1519 = vadd.f32 %v1088, %v1425
        %v1520 = vadd.f32 %v1093, %v1430
        %v1521 = vadd.f32 %v1096, %v1433
        %v1522 = vadd.f32 %v1101, %v1438
        %v1523 = vadd.f32 %v1104, %v1441
        %v1524 = vadd.f32 %v1109, %v1446
        %v1525 = vadd.f32 %v1112, %v1449
        %v1526 = vadd.f32 %v1117, %v1454
        %v1527 = vadd.f32 %v1120, %v1457
        %v1528 = vadd.f32 %v1125, %v1462
        %v1529 = vadd.f32 %v1128, %v1465
        %v1530 = vadd.f32 %v1133, %v1470
        %v1531 = vadd.f32 %v1136, %v1473
        %v1532 = vadd.f32 %v1141, %v1478
        %v1533 = vadd.f32 %v1144, %v1481
        %v1534 = vadd.f32 %v1149, %v1486
        %v1535 = vadd.f32 %v1152, %v1489
        %v1536 = vadd.f32 %v1157, %v1494
        %v1537 = vadd.f32 %v1160, %v1497
        %v1538 = vadd.f32 %v1165, %v1502
        %v1539 = vadd.f32 %v1168, %v1505
        %v1540 = vld [vmem:[%s486] sm:$0xf]
        %v1541 = vld [vmem:[%s486 + $0x4] sm:$0xf]
        %v1542 = vld [vmem:[%s486 + $0x8] sm:$0xf]
        %v1543 = vld [vmem:[%s486 + $0xc] sm:$0xf]
        %v1544 = vld [vmem:[%s486 + $0x10] sm:$0xf]
        %v1545 = vld [vmem:[%s486 + $0x14] sm:$0xf]
        %v1546 = vld [vmem:[%s486 + $0x18] sm:$0xf]
        %v1547 = vld [vmem:[%s486 + $0x1c] sm:$0xf]
        %v1548 = vld [vmem:[%s486 + $0x20] sm:$0xf]
        %v1549 = vld [vmem:[%s486 + $0x24] sm:$0xf]
        %v1550 = vld [vmem:[%s486 + $0x28] sm:$0xf]
        %v1551 = vld [vmem:[%s486 + $0x2c] sm:$0xf]
        %v1552 = vld [vmem:[%s486 + $0x30] sm:$0xf]
        %v1553 = vld [vmem:[%s486 + $0x34] sm:$0xf]
        %v1554 = vld [vmem:[%s486 + $0x38] sm:$0xf]
        %v1555 = vld [vmem:[%s486 + $0x3c] sm:$0xf]
        %v1556 = vld [vmem:[%s486 + $0x40] sm:$0xf]
        %v1557 = vld [vmem:[%s486 + $0x44] sm:$0xf]
        %v1558 = vld [vmem:[%s486 + $0x48] sm:$0xf]
        %v1559 = vld [vmem:[%s486 + $0x4c] sm:$0xf]
        %v1560 = vld [vmem:[%s486 + $0x50] sm:$0xf]
        %v1561 = vld [vmem:[%s486 + $0x54] sm:$0xf]
        %v1562 = vld [vmem:[%s486 + $0x58] sm:$0xf]
        %v1563 = vld [vmem:[%s486 + $0x5c] sm:$0xf]
        %v1564 = vld [vmem:[%s486 + $0x60] sm:$0xf]
        %v1565 = vld [vmem:[%s486 + $0x64] sm:$0xf]
        %v1566 = vld [vmem:[%s486 + $0x68] sm:$0xf]
        %v1567 = vld [vmem:[%s486 + $0x6c] sm:$0xf]
        %v1568 = vld [vmem:[%s486 + $0x70] sm:$0xf]
        %v1569 = vld [vmem:[%s486 + $0x74] sm:$0xf]
        %v1570 = vld [vmem:[%s486 + $0x78] sm:$0xf]
        %v1571 = vld [vmem:[%s486 + $0x7c] sm:$0xf]
        %v1572 = vld [vmem:[%s7] sm:$0xf]
        %v1605 = vunpack.c.l.b16 %v1540
        %v1606 = vunpack.c.l.b16 %v1541
        %v1607 = vunpack.c.l.b16 %v1542
        %v1608 = vunpack.c.l.b16 %v1543
        %v1609 = vunpack.c.l.b16 %v1544
        %v1610 = vunpack.c.l.b16 %v1545
        %v1611 = vunpack.c.l.b16 %v1546
        %v1612 = vunpack.c.l.b16 %v1547
        %v1613 = vunpack.c.l.b16 %v1548
        %v1614 = vunpack.c.l.b16 %v1549
        %v1615 = vunpack.c.l.b16 %v1550
        %v1616 = vunpack.c.l.b16 %v1551
        %v1617 = vunpack.c.l.b16 %v1552
        %v1618 = vunpack.c.l.b16 %v1553
        %v1619 = vunpack.c.l.b16 %v1554
        %v1620 = vunpack.c.l.b16 %v1555
        %v1621 = vunpack.c.l.b16 %v1556
        %v1622 = vunpack.c.l.b16 %v1557
        %v1623 = vunpack.c.l.b16 %v1558
        %v1624 = vunpack.c.l.b16 %v1559
        %v1625 = vunpack.c.l.b16 %v1560
        %v1626 = vunpack.c.l.b16 %v1561
        %v1627 = vunpack.c.l.b16 %v1562
        %v1628 = vunpack.c.l.b16 %v1563
        %v1629 = vunpack.c.l.b16 %v1564
        %v1630 = vunpack.c.l.b16 %v1565
        %v1631 = vunpack.c.l.b16 %v1566
        %v1632 = vunpack.c.l.b16 %v1567
        %v1633 = vunpack.c.l.b16 %v1568
        %v1634 = vunpack.c.l.b16 %v1569
        %v1635 = vunpack.c.l.b16 %v1570
        %v1636 = vunpack.c.l.b16 %v1571
        %v1637 = vpack.c.b16 %v1606, %v1605
        %v1638 = vpack.c.b16 %v1608, %v1607
        %v1639 = vpack.c.b16 %v1610, %v1609
        %v1640 = vpack.c.b16 %v1612, %v1611
        %v1641 = vpack.c.b16 %v1614, %v1613
        %v1642 = vpack.c.b16 %v1616, %v1615
        %v1643 = vpack.c.b16 %v1618, %v1617
        %v1644 = vpack.c.b16 %v1620, %v1619
        %v1645 = vpack.c.b16 %v1622, %v1621
        %v1646 = vpack.c.b16 %v1624, %v1623
        %v1647 = vpack.c.b16 %v1626, %v1625
        %v1648 = vpack.c.b16 %v1628, %v1627
        %v1649 = vpack.c.b16 %v1630, %v1629
        %v1650 = vpack.c.b16 %v1632, %v1631
        %v1651 = vpack.c.b16 %v1634, %v1633
        %v1652 = vpack.c.b16 %v1636, %v1635
        %vm1653 = vcmask 64512
        %v1655 = vsel %vm1653, %v1637, 0
        %v1658 = vsel %vm1653, %v1638, 0
        %v1661 = vsel %vm1653, %v1639, 0
        %v1664 = vsel %vm1653, %v1640, 0
        %v1667 = vsel %vm1653, %v1641, 0
        %v1670 = vsel %vm1653, %v1642, 0
        %v1673 = vsel %vm1653, %v1643, 0
        %v1676 = vsel %vm1653, %v1644, 0
        %v1679 = vsel %vm1653, %v1645, 0
        %v1682 = vsel %vm1653, %v1646, 0
        %v1685 = vsel %vm1653, %v1647, 0
        %v1688 = vsel %vm1653, %v1648, 0
        %v1691 = vsel %vm1653, %v1649, 0
        %v1694 = vsel %vm1653, %v1650, 0
        %v1697 = vsel %vm1653, %v1651, 0
        %v1700 = vsel %vm1653, %v1652, 0
        %vm1702 = vcmask 1043456
        %v1704 = vsel %vm1702, %v1572, 0
        %1706 = vmatprep.subr.bf16.mxu0 0
        %1707 = vmatpush1.bf16.msra.mxu0 %v1704
        %1708 = vmatprep.subr.bf16.mxu0 0
        %1709 = vmatpush1.bf16.msra.mxu0 0
        %1710 = vmatprep.subr.bf16.mxu0 0
        %1711 = vmatpush1.bf16.msra.mxu0 0
        %1712 = vmatprep.subr.bf16.mxu0 0
        %1713 = vmatpush1.bf16.msra.mxu0 0
        %1714 = vmatprep.subr.bf16.mxu0 0
        %1715 = vmatpush1.bf16.msra.mxu0 0
        %1716 = vmatprep.subr.bf16.mxu0 0
        %1717 = vmatpush1.bf16.msra.mxu0 0
        %1718 = vmatprep.subr.bf16.mxu0 0
        %1719 = vmatpush1.bf16.msra.mxu0 0
        %1720 = vmatprep.subr.bf16.mxu0 0
        %1721 = vmatpush1.bf16.msra.mxu0 0
        %1722 = vmatprep.subr.bf16.mxu0 0
        %1723 = vmatpush1.bf16.msra.mxu0 0
        %1724 = vmatprep.subr.bf16.mxu0 0
        %1725 = vmatpush1.bf16.msra.mxu0 0
        %1726 = vmatprep.subr.bf16.mxu0 0
        %1727 = vmatpush1.bf16.msra.mxu0 0
        %1728 = vmatprep.subr.bf16.mxu0 0
        %1729 = vmatpush1.bf16.msra.mxu0 0
        %1730 = vmatprep.subr.bf16.mxu0 0
        %1731 = vmatpush1.bf16.msra.mxu0 0
        %1732 = vmatprep.subr.bf16.mxu0 0
        %1733 = vmatpush1.bf16.msra.mxu0 0
        %1734 = vmatprep.subr.bf16.mxu0 0
        %1735 = vmatpush1.bf16.msra.mxu0 0
        %1736 = vmatprep.subr.bf16.mxu0 0
        %1737 = vmatpush1.bf16.msra.mxu0 0
        %1738 = vmatprep.mubr.bf16.mxu0 0
        %1739 = vmatmul.mubr.bf16.gmra.mrb[0].mxu0 %v1655
        %v1740 = vpop.f32.mrb[0].mxu0
        %v1741 = vadd.f32 0.0, %v1740
        %v1742 = vpop.f32.mrb[0].mxu0
        %v1743 = vpop.f32.mrb[0].mxu0
        %v1744 = vadd.f32 0.0, %v1743
        %v1745 = vpop.f32.mrb[0].mxu0
        %1746 = vmatprep.mubr.bf16.mxu0 0
        %1747 = vmatmul.mubr.bf16.gmra.mrb[0].mxu0 %v1658
        %v1748 = vpop.f32.mrb[0].mxu0
        %v1749 = vadd.f32 0.0, %v1748
        %v1750 = vpop.f32.mrb[0].mxu0
        %v1751 = vpop.f32.mrb[0].mxu0
        %v1752 = vadd.f32 0.0, %v1751
        %v1753 = vpop.f32.mrb[0].mxu0
        %1754 = vmatprep.mubr.bf16.mxu0 0
        %1755 = vmatmul.mubr.bf16.gmra.mrb[0].mxu0 %v1661
        %v1756 = vpop.f32.mrb[0].mxu0
        %v1757 = vadd.f32 0.0, %v1756
        %v1758 = vpop.f32.mrb[0].mxu0
        %v1759 = vpop.f32.mrb[0].mxu0
        %v1760 = vadd.f32 0.0, %v1759
        %v1761 = vpop.f32.mrb[0].mxu0
        %1762 = vmatprep.mubr.bf16.mxu0 0
        %1763 = vmatmul.mubr.bf16.gmra.mrb[0].mxu0 %v1664
        %v1764 = vpop.f32.mrb[0].mxu0
        %v1765 = vadd.f32 0.0, %v1764
        %v1766 = vpop.f32.mrb[0].mxu0
        %v1767 = vpop.f32.mrb[0].mxu0
        %v1768 = vadd.f32 0.0, %v1767
        %v1769 = vpop.f32.mrb[0].mxu0
        %1770 = vmatprep.mubr.bf16.mxu0 0
        %1771 = vmatmul.mubr.bf16.gmra.mrb[0].mxu0 %v1667
        %v1772 = vpop.f32.mrb[0].mxu0
        %v1773 = vadd.f32 0.0, %v1772
        %v1774 = vpop.f32.mrb[0].mxu0
        %v1775 = vpop.f32.mrb[0].mxu0
        %v1776 = vadd.f32 0.0, %v1775
        %v1777 = vpop.f32.mrb[0].mxu0
        %1778 = vmatprep.mubr.bf16.mxu0 0
        %1779 = vmatmul.mubr.bf16.gmra.mrb[0].mxu0 %v1670
        %v1780 = vpop.f32.mrb[0].mxu0
        %v1781 = vadd.f32 0.0, %v1780
        %v1782 = vpop.f32.mrb[0].mxu0
        %v1783 = vpop.f32.mrb[0].mxu0
        %v1784 = vadd.f32 0.0, %v1783
        %v1785 = vpop.f32.mrb[0].mxu0
        %1786 = vmatprep.mubr.bf16.mxu0 0
        %1787 = vmatmul.mubr.bf16.gmra.mrb[0].mxu0 %v1673
        %v1788 = vpop.f32.mrb[0].mxu0
        %v1789 = vadd.f32 0.0, %v1788
        %v1790 = vpop.f32.mrb[0].mxu0
        %v1791 = vpop.f32.mrb[0].mxu0
        %v1792 = vadd.f32 0.0, %v1791
        %v1793 = vpop.f32.mrb[0].mxu0
        %1794 = vmatprep.mubr.bf16.mxu0 0
        %1795 = vmatmul.mubr.bf16.gmra.mrb[0].mxu0 %v1676
        %v1796 = vpop.f32.mrb[0].mxu0
        %v1797 = vadd.f32 0.0, %v1796
        %v1798 = vpop.f32.mrb[0].mxu0
        %v1799 = vpop.f32.mrb[0].mxu0
        %v1800 = vadd.f32 0.0, %v1799
        %v1801 = vpop.f32.mrb[0].mxu0
        %1802 = vmatprep.mubr.bf16.mxu0 0
        %1803 = vmatmul.mubr.bf16.gmra.mrb[0].mxu0 %v1679
        %v1804 = vpop.f32.mrb[0].mxu0
        %v1805 = vadd.f32 0.0, %v1804
        %v1806 = vpop.f32.mrb[0].mxu0
        %v1807 = vpop.f32.mrb[0].mxu0
        %v1808 = vadd.f32 0.0, %v1807
        %v1809 = vpop.f32.mrb[0].mxu0
        %1810 = vmatprep.mubr.bf16.mxu0 0
        %1811 = vmatmul.mubr.bf16.gmra.mrb[0].mxu0 %v1682
        %v1812 = vpop.f32.mrb[0].mxu0
        %v1813 = vadd.f32 0.0, %v1812
        %v1814 = vpop.f32.mrb[0].mxu0
        %v1815 = vpop.f32.mrb[0].mxu0
        %v1816 = vadd.f32 0.0, %v1815
        %v1817 = vpop.f32.mrb[0].mxu0
        %1818 = vmatprep.mubr.bf16.mxu0 0
        %1819 = vmatmul.mubr.bf16.gmra.mrb[0].mxu0 %v1685
        %v1820 = vpop.f32.mrb[0].mxu0
        %v1821 = vadd.f32 0.0, %v1820
        %v1822 = vpop.f32.mrb[0].mxu0
        %v1823 = vpop.f32.mrb[0].mxu0
        %v1824 = vadd.f32 0.0, %v1823
        %v1825 = vpop.f32.mrb[0].mxu0
        %1826 = vmatprep.mubr.bf16.mxu0 0
        %1827 = vmatmul.mubr.bf16.gmra.mrb[0].mxu0 %v1688
        %v1828 = vpop.f32.mrb[0].mxu0
        %v1829 = vadd.f32 0.0, %v1828
        %v1830 = vpop.f32.mrb[0].mxu0
        %v1831 = vpop.f32.mrb[0].mxu0
        %v1832 = vadd.f32 0.0, %v1831
        %v1833 = vpop.f32.mrb[0].mxu0
        %1834 = vmatprep.mubr.bf16.mxu0 0
        %1835 = vmatmul.mubr.bf16.gmra.mrb[0].mxu0 %v1691
        %v1836 = vpop.f32.mrb[0].mxu0
        %v1837 = vadd.f32 0.0, %v1836
        %v1838 = vpop.f32.mrb[0].mxu0
        %v1839 = vpop.f32.mrb[0].mxu0
        %v1840 = vadd.f32 0.0, %v1839
        %v1841 = vpop.f32.mrb[0].mxu0
        %1842 = vmatprep.mubr.bf16.mxu0 0
        %1843 = vmatmul.mubr.bf16.gmra.mrb[0].mxu0 %v1694
        %v1844 = vpop.f32.mrb[0].mxu0
        %v1845 = vadd.f32 0.0, %v1844
        %v1846 = vpop.f32.mrb[0].mxu0
        %v1847 = vpop.f32.mrb[0].mxu0
        %v1848 = vadd.f32 0.0, %v1847
        %v1849 = vpop.f32.mrb[0].mxu0
        %1850 = vmatprep.mubr.bf16.mxu0 0
        %1851 = vmatmul.mubr.bf16.gmra.mrb[0].mxu0 %v1697
        %v1852 = vpop.f32.mrb[0].mxu0
        %v1853 = vadd.f32 0.0, %v1852
        %v1854 = vpop.f32.mrb[0].mxu0
        %v1855 = vpop.f32.mrb[0].mxu0
        %v1856 = vadd.f32 0.0, %v1855
        %v1857 = vpop.f32.mrb[0].mxu0
        %1858 = vmatprep.mubr.bf16.mxu0 0
        %1859 = vmatmul.mubr.bf16.gmra.mrb[0].mxu0 %v1700
        %v1860 = vpop.f32.mrb[0].mxu0
        %v1861 = vadd.f32 0.0, %v1860
        %v1862 = vpop.f32.mrb[0].mxu0
        %v1863 = vpop.f32.mrb[0].mxu0
        %v1864 = vadd.f32 0.0, %v1863
        %v1865 = vpop.f32.mrb[0].mxu0
        %1866 = vdwg.mxu0
        %v1867 = vadd.f32 %v1508, %v1741
        %v1868 = vadd.f32 %v1509, %v1744
        %v1869 = vadd.f32 %v1510, %v1749
        %v1870 = vadd.f32 %v1511, %v1752
        %v1871 = vadd.f32 %v1512, %v1757
        %v1872 = vadd.f32 %v1513, %v1760
        %v1873 = vadd.f32 %v1514, %v1765
        %v1874 = vadd.f32 %v1515, %v1768
        %v1875 = vadd.f32 %v1516, %v1773
        %v1876 = vadd.f32 %v1517, %v1776
        %v1877 = vadd.f32 %v1518, %v1781
        %v1878 = vadd.f32 %v1519, %v1784
        %v1879 = vadd.f32 %v1520, %v1789
        %v1880 = vadd.f32 %v1521, %v1792
        %v1881 = vadd.f32 %v1522, %v1797
        %v1882 = vadd.f32 %v1523, %v1800
        %v1883 = vadd.f32 %v1524, %v1805
        %v1884 = vadd.f32 %v1525, %v1808
        %v1885 = vadd.f32 %v1526, %v1813
        %v1886 = vadd.f32 %v1527, %v1816
        %v1887 = vadd.f32 %v1528, %v1821
        %v1888 = vadd.f32 %v1529, %v1824
        %v1889 = vadd.f32 %v1530, %v1829
        %v1890 = vadd.f32 %v1531, %v1832
        %v1891 = vadd.f32 %v1532, %v1837
        %v1892 = vadd.f32 %v1533, %v1840
        %v1893 = vadd.f32 %v1534, %v1845
        %v1894 = vadd.f32 %v1535, %v1848
        %v1895 = vadd.f32 %v1536, %v1853
        %v1896 = vadd.f32 %v1537, %v1856
        %v1897 = vadd.f32 %v1538, %v1861
        %v1898 = vadd.f32 %v1539, %v1864
        %v1899 = vld [vmem:[%s8] sm:$0x1]
        %v1901 = vlaneseq
        %v1902 = vshrl.u32 %v1901, 7
        %v1903 = vsub.s32 0, %v1902
        %v1904 = vrot.slane %v1899, %v1903
        %v1906 = vadd.f32 %v1867, %v1904
        %v1907 = vadd.f32 %v1868, %v1904
        %v1908 = vadd.f32 %v1869, %v1904
        %v1909 = vadd.f32 %v1870, %v1904
        %v1910 = vadd.f32 %v1871, %v1904
        %v1911 = vadd.f32 %v1872, %v1904
        %v1912 = vadd.f32 %v1873, %v1904
        %v1913 = vadd.f32 %v1874, %v1904
        %v1914 = vadd.f32 %v1875, %v1904
        %v1915 = vadd.f32 %v1876, %v1904
        %v1916 = vadd.f32 %v1877, %v1904
        %v1917 = vadd.f32 %v1878, %v1904
        %v1918 = vadd.f32 %v1879, %v1904
        %v1919 = vadd.f32 %v1880, %v1904
        %v1920 = vadd.f32 %v1881, %v1904
        %v1921 = vadd.f32 %v1882, %v1904
        %v1922 = vadd.f32 %v1883, %v1904
        %v1923 = vadd.f32 %v1884, %v1904
        %v1924 = vadd.f32 %v1885, %v1904
        %v1925 = vadd.f32 %v1886, %v1904
        %v1926 = vadd.f32 %v1887, %v1904
        %v1927 = vadd.f32 %v1888, %v1904
        %v1928 = vadd.f32 %v1889, %v1904
        %v1929 = vadd.f32 %v1890, %v1904
        %v1930 = vadd.f32 %v1891, %v1904
        %v1931 = vadd.f32 %v1892, %v1904
        %v1932 = vadd.f32 %v1893, %v1904
        %v1933 = vadd.f32 %v1894, %v1904
        %v1934 = vadd.f32 %v1895, %v1904
        %v1935 = vadd.f32 %v1896, %v1904
        %v1936 = vadd.f32 %v1897, %v1904
        %v1937 = vadd.f32 %v1898, %v1904
        %v1938 = vmax.f32 %v1906, 0.0
        %v1939 = vmax.f32 %v1907, 0.0
        %v1940 = vmax.f32 %v1908, 0.0
        %v1941 = vmax.f32 %v1909, 0.0
        %v1942 = vmax.f32 %v1910, 0.0
        %v1943 = vmax.f32 %v1911, 0.0
        %v1944 = vmax.f32 %v1912, 0.0
        %v1945 = vmax.f32 %v1913, 0.0
        %v1946 = vmax.f32 %v1914, 0.0
        %v1947 = vmax.f32 %v1915, 0.0
        %v1948 = vmax.f32 %v1916, 0.0
        %v1949 = vmax.f32 %v1917, 0.0
        %v1950 = vmax.f32 %v1918, 0.0
        %v1951 = vmax.f32 %v1919, 0.0
        %v1952 = vmax.f32 %v1920, 0.0
        %v1953 = vmax.f32 %v1921, 0.0
        %v1954 = vmax.f32 %v1922, 0.0
        %v1955 = vmax.f32 %v1923, 0.0
        %v1956 = vmax.f32 %v1924, 0.0
        %v1957 = vmax.f32 %v1925, 0.0
        %v1958 = vmax.f32 %v1926, 0.0
        %v1959 = vmax.f32 %v1927, 0.0
        %v1960 = vmax.f32 %v1928, 0.0
        %v1961 = vmax.f32 %v1929, 0.0
        %v1962 = vmax.f32 %v1930, 0.0
        %v1963 = vmax.f32 %v1931, 0.0
        %v1964 = vmax.f32 %v1932, 0.0
        %v1965 = vmax.f32 %v1933, 0.0
        %v1966 = vmax.f32 %v1934, 0.0
        %v1967 = vmax.f32 %v1935, 0.0
        %v1968 = vmax.f32 %v1936, 0.0
        %v1969 = vmax.f32 %v1937, 0.0
        %v1970 = vpack.c.bf16 %v1939, %v1938
        %v1971 = vpack.c.bf16 %v1941, %v1940
        %v1972 = vpack.c.bf16 %v1943, %v1942
        %v1973 = vpack.c.bf16 %v1945, %v1944
        %v1974 = vpack.c.bf16 %v1947, %v1946
        %v1975 = vpack.c.bf16 %v1949, %v1948
        %v1976 = vpack.c.bf16 %v1951, %v1950
        %v1977 = vpack.c.bf16 %v1953, %v1952
        %v1978 = vpack.c.bf16 %v1955, %v1954
        %v1979 = vpack.c.bf16 %v1957, %v1956
        %v1980 = vpack.c.bf16 %v1959, %v1958
        %v1981 = vpack.c.bf16 %v1961, %v1960
        %v1982 = vpack.c.bf16 %v1963, %v1962
        %v1983 = vpack.c.bf16 %v1965, %v1964
        %v1984 = vpack.c.bf16 %v1967, %v1966
        %v1985 = vpack.c.bf16 %v1969, %v1968
        %v1986 = vld [vmem:[%s9] sm:$0xff]
        %v1987 = vld [vmem:[%s9 + $0x8] sm:$0xf]
        %v1988 = vld [vmem:[%s9 + $0xc] sm:$0xff]
        %v1989 = vld [vmem:[%s9 + $0x14] sm:$0xf]
        %v1990 = vld [vmem:[%s9 + $0x18] sm:$0xff]
        %v1991 = vld [vmem:[%s9 + $0x20] sm:$0xf]
        %v1992 = vld [vmem:[%s9 + $0x24] sm:$0xff]
        %v1993 = vld [vmem:[%s9 + $0x2c] sm:$0xf]
        %v1994 = vld [vmem:[%s10] sm:$0x7]
        %v1996 = vlaneseq
        %v1997 = vshrl.u32 %v1996, 7
        %v1998 = vsub.s32 0, %v1997
        %v1999 = vrot.slane %v1994, %v1998
        %v2000 = vlaneseq
        %v2001 = vshrl.u32 %v2000, 7
        %v2002 = vsub.s32 1, %v2001
        %v2003 = vrot.slane %v1994, %v2002
        %v2004 = vlaneseq
        %v2005 = vshrl.u32 %v2004, 7
        %v2006 = vsub.s32 2, %v2005
        %v2007 = vrot.slane %v1994, %v2006
        %v2019 = vunpack.c.l.b16 %v1986
        %v2020 = vunpack.c.h.b16 %v1986
        %v2021 = vunpack.c.l.b16 %v1987
        %v2022 = vunpack.c.l.b16 %v1988
        %v2023 = vunpack.c.h.b16 %v1988
        %v2024 = vunpack.c.l.b16 %v1989
        %v2025 = vunpack.c.l.b16 %v1990
        %v2026 = vunpack.c.h.b16 %v1990
        %v2027 = vunpack.c.l.b16 %v1991
        %v2028 = vunpack.c.l.b16 %v1992
        %v2029 = vunpack.c.h.b16 %v1992
        %v2030 = vunpack.c.l.b16 %v1993
        %v2031 = vpack.c.b16 %v2022, %v2019
        %v2032 = vpack.c.b16 %v2023, %v2020
        %v2033 = vpack.c.b16 %v2024, %v2021
        %v2034 = vpack.c.b16 %v2028, %v2025
        %v2035 = vpack.c.b16 %v2029, %v2026
        %v2036 = vpack.c.b16 %v2030, %v2027
        %v2044 = vsel %vm660, %v1970, 0
        %v2047 = vsel %vm660, %v1971, 0
        %v2050 = vsel %vm660, %v1972, 0
        %v2053 = vsel %vm660, %v1973, 0
        %v2056 = vsel %vm660, %v1974, 0
        %v2059 = vsel %vm660, %v1975, 0
        %v2062 = vsel %vm660, %v1976, 0
        %v2065 = vsel %vm660, %v1977, 0
        %v2068 = vsel %vm660, %v1978, 0
        %v2071 = vsel %vm660, %v1979, 0
        %v2074 = vsel %vm660, %v1980, 0
        %v2077 = vsel %vm660, %v1981, 0
        %v2080 = vsel %vm660, %v1982, 0
        %v2083 = vsel %vm660, %v1983, 0
        %v2086 = vsel %vm660, %v1984, 0
        %v2089 = vsel %vm660, %v1985, 0
        %2091 = vmatprep.subr.bf16.mxu0 %v2032
        %2092 = vmatpush1.bf16.msra.mxu0 %v2031
        %2093 = vmatprep.subr.bf16.mxu0 %v2035
        %2094 = vmatpush1.bf16.msra.mxu0 %v2034
        %2095 = vmatprep.subr.bf16.mxu0 0
        %2096 = vmatpush1.bf16.msra.mxu0 0
        %2097 = vmatprep.subr.bf16.mxu0 0
        %2098 = vmatpush1.bf16.msra.mxu0 0
        %2099 = vmatprep.subr.bf16.mxu0 0
        %2100 = vmatpush1.bf16.msra.mxu0 0
        %2101 = vmatprep.subr.bf16.mxu0 0
        %2102 = vmatpush1.bf16.msra.mxu0 0
        %2103 = vmatprep.subr.bf16.mxu0 0
        %2104 = vmatpush1.bf16.msra.mxu0 0
        %2105 = vmatprep.subr.bf16.mxu0 0
        %2106 = vmatpush1.bf16.msra.mxu0 0
        %2107 = vmatprep.subr.bf16.mxu0 0
        %2108 = vmatpush1.bf16.msra.mxu0 0
        %2109 = vmatprep.subr.bf16.mxu0 0
        %2110 = vmatpush1.bf16.msra.mxu0 0
        %2111 = vmatprep.subr.bf16.mxu0 0
        %2112 = vmatpush1.bf16.msra.mxu0 0
        %2113 = vmatprep.subr.bf16.mxu0 0
        %2114 = vmatpush1.bf16.msra.mxu0 0
        %2115 = vmatprep.subr.bf16.mxu0 0
        %2116 = vmatpush1.bf16.msra.mxu0 0
        %2117 = vmatprep.subr.bf16.mxu0 0
        %2118 = vmatpush1.bf16.msra.mxu0 0
        %2119 = vmatprep.subr.bf16.mxu0 0
        %2120 = vmatpush1.bf16.msra.mxu0 0
        %2121 = vmatprep.subr.bf16.mxu0 0
        %2122 = vmatpush1.bf16.msra.mxu0 0
        %2123 = vmatprep.mubr.bf16.mxu0 0
        %2124 = vmatmul.mubr.bf16.gmra.mrb[0].mxu0 %v2044
        %v2125 = vpop.f32.mrb[0].mxu0
        %v2126 = vadd.f32 %v1999, %v2125
        %v2127 = vpop.f32.mrb[0].mxu0
        %v2128 = vadd.f32 %v2003, %v2127
        %v2129 = vpop.f32.mrb[0].mxu0
        %v2130 = vadd.f32 %v1999, %v2129
        %v2131 = vpop.f32.mrb[0].mxu0
        %v2132 = vadd.f32 %v2003, %v2131
        %2133 = vmatprep.mubr.bf16.mxu0 0
        %2134 = vmatmul.mubr.bf16.gmra.mrb[0].mxu0 %v2047
        %v2135 = vpop.f32.mrb[0].mxu0
        %v2136 = vadd.f32 %v1999, %v2135
        %v2137 = vpop.f32.mrb[0].mxu0
        %v2138 = vadd.f32 %v2003, %v2137
        %v2139 = vpop.f32.mrb[0].mxu0
        %v2140 = vadd.f32 %v1999, %v2139
        %v2141 = vpop.f32.mrb[0].mxu0
        %v2142 = vadd.f32 %v2003, %v2141
        %2143 = vmatprep.mubr.bf16.mxu0 0
        %2144 = vmatmul.mubr.bf16.gmra.mrb[0].mxu0 %v2050
        %v2145 = vpop.f32.mrb[0].mxu0
        %v2146 = vadd.f32 %v1999, %v2145
        %v2147 = vpop.f32.mrb[0].mxu0
        %v2148 = vadd.f32 %v2003, %v2147
        %v2149 = vpop.f32.mrb[0].mxu0
        %v2150 = vadd.f32 %v1999, %v2149
        %v2151 = vpop.f32.mrb[0].mxu0
        %v2152 = vadd.f32 %v2003, %v2151
        %2153 = vmatprep.mubr.bf16.mxu0 0
        %2154 = vmatmul.mubr.bf16.gmra.mrb[0].mxu0 %v2053
        %v2155 = vpop.f32.mrb[0].mxu0
        %v2156 = vadd.f32 %v1999, %v2155
        %v2157 = vpop.f32.mrb[0].mxu0
        %v2158 = vadd.f32 %v2003, %v2157
        %v2159 = vpop.f32.mrb[0].mxu0
        %v2160 = vadd.f32 %v1999, %v2159
        %v2161 = vpop.f32.mrb[0].mxu0
        %v2162 = vadd.f32 %v2003, %v2161
        %2163 = vmatprep.mubr.bf16.mxu0 0
        %2164 = vmatmul.mubr.bf16.gmra.mrb[0].mxu0 %v2056
        %v2165 = vpop.f32.mrb[0].mxu0
        %v2166 = vadd.f32 %v1999, %v2165
        %v2167 = vpop.f32.mrb[0].mxu0
        %v2168 = vadd.f32 %v2003, %v2167
        %v2169 = vpop.f32.mrb[0].mxu0
        %v2170 = vadd.f32 %v1999, %v2169
        %v2171 = vpop.f32.mrb[0].mxu0
        %v2172 = vadd.f32 %v2003, %v2171
        %2173 = vmatprep.mubr.bf16.mxu0 0
        %2174 = vmatmul.mubr.bf16.gmra.mrb[0].mxu0 %v2059
        %v2175 = vpop.f32.mrb[0].mxu0
        %v2176 = vadd.f32 %v1999, %v2175
        %v2177 = vpop.f32.mrb[0].mxu0
        %v2178 = vadd.f32 %v2003, %v2177
        %v2179 = vpop.f32.mrb[0].mxu0
        %v2180 = vadd.f32 %v1999, %v2179
        %v2181 = vpop.f32.mrb[0].mxu0
        %v2182 = vadd.f32 %v2003, %v2181
        %2183 = vmatprep.mubr.bf16.mxu0 0
        %2184 = vmatmul.mubr.bf16.gmra.mrb[0].mxu0 %v2062
        %v2185 = vpop.f32.mrb[0].mxu0
        %v2186 = vadd.f32 %v1999, %v2185
        %v2187 = vpop.f32.mrb[0].mxu0
        %v2188 = vadd.f32 %v2003, %v2187
        %v2189 = vpop.f32.mrb[0].mxu0
        %v2190 = vadd.f32 %v1999, %v2189
        %v2191 = vpop.f32.mrb[0].mxu0
        %v2192 = vadd.f32 %v2003, %v2191
        %2193 = vmatprep.mubr.bf16.mxu0 0
        %2194 = vmatmul.mubr.bf16.gmra.mrb[0].mxu0 %v2065
        %v2195 = vpop.f32.mrb[0].mxu0
        %v2196 = vadd.f32 %v1999, %v2195
        %v2197 = vpop.f32.mrb[0].mxu0
        %v2198 = vadd.f32 %v2003, %v2197
        %v2199 = vpop.f32.mrb[0].mxu0
        %v2200 = vadd.f32 %v1999, %v2199
        %v2201 = vpop.f32.mrb[0].mxu0
        %v2202 = vadd.f32 %v2003, %v2201
        %2203 = vmatprep.mubr.bf16.mxu0 0
        %2204 = vmatmul.mubr.bf16.gmra.mrb[0].mxu0 %v2068
        %v2205 = vpop.f32.mrb[0].mxu0
        %v2206 = vadd.f32 %v1999, %v2205
        %v2207 = vpop.f32.mrb[0].mxu0
        %v2208 = vadd.f32 %v2003, %v2207
        %v2209 = vpop.f32.mrb[0].mxu0
        %v2210 = vadd.f32 %v1999, %v2209
        %v2211 = vpop.f32.mrb[0].mxu0
        %v2212 = vadd.f32 %v2003, %v2211
        %2213 = vmatprep.mubr.bf16.mxu0 0
        %2214 = vmatmul.mubr.bf16.gmra.mrb[0].mxu0 %v2071
        %v2215 = vpop.f32.mrb[0].mxu0
        %v2216 = vadd.f32 %v1999, %v2215
        %v2217 = vpop.f32.mrb[0].mxu0
        %v2218 = vadd.f32 %v2003, %v2217
        %v2219 = vpop.f32.mrb[0].mxu0
        %v2220 = vadd.f32 %v1999, %v2219
        %v2221 = vpop.f32.mrb[0].mxu0
        %v2222 = vadd.f32 %v2003, %v2221
        %2223 = vmatprep.mubr.bf16.mxu0 0
        %2224 = vmatmul.mubr.bf16.gmra.mrb[0].mxu0 %v2074
        %v2225 = vpop.f32.mrb[0].mxu0
        %v2226 = vadd.f32 %v1999, %v2225
        %v2227 = vpop.f32.mrb[0].mxu0
        %v2228 = vadd.f32 %v2003, %v2227
        %v2229 = vpop.f32.mrb[0].mxu0
        %v2230 = vadd.f32 %v1999, %v2229
        %v2231 = vpop.f32.mrb[0].mxu0
        %v2232 = vadd.f32 %v2003, %v2231
        %2233 = vmatprep.mubr.bf16.mxu0 0
        %2234 = vmatmul.mubr.bf16.gmra.mrb[0].mxu0 %v2077
        %v2235 = vpop.f32.mrb[0].mxu0
        %v2236 = vadd.f32 %v1999, %v2235
        %v2237 = vpop.f32.mrb[0].mxu0
        %v2238 = vadd.f32 %v2003, %v2237
        %v2239 = vpop.f32.mrb[0].mxu0
        %v2240 = vadd.f32 %v1999, %v2239
        %v2241 = vpop.f32.mrb[0].mxu0
        %v2242 = vadd.f32 %v2003, %v2241
        %2243 = vmatprep.mubr.bf16.mxu0 0
        %2244 = vmatmul.mubr.bf16.gmra.mrb[0].mxu0 %v2080
        %v2245 = vpop.f32.mrb[0].mxu0
        %v2246 = vadd.f32 %v1999, %v2245
        %v2247 = vpop.f32.mrb[0].mxu0
        %v2248 = vadd.f32 %v2003, %v2247
        %v2249 = vpop.f32.mrb[0].mxu0
        %v2250 = vadd.f32 %v1999, %v2249
        %v2251 = vpop.f32.mrb[0].mxu0
        %v2252 = vadd.f32 %v2003, %v2251
        %2253 = vmatprep.mubr.bf16.mxu0 0
        %2254 = vmatmul.mubr.bf16.gmra.mrb[0].mxu0 %v2083
        %v2255 = vpop.f32.mrb[0].mxu0
        %v2256 = vadd.f32 %v1999, %v2255
        %v2257 = vpop.f32.mrb[0].mxu0
        %v2258 = vadd.f32 %v2003, %v2257
        %v2259 = vpop.f32.mrb[0].mxu0
        %v2260 = vadd.f32 %v1999, %v2259
        %v2261 = vpop.f32.mrb[0].mxu0
        %v2262 = vadd.f32 %v2003, %v2261
        %2263 = vmatprep.mubr.bf16.mxu0 0
        %2264 = vmatmul.mubr.bf16.gmra.mrb[0].mxu0 %v2086
        %v2265 = vpop.f32.mrb[0].mxu0
        %v2266 = vadd.f32 %v1999, %v2265
        %v2267 = vpop.f32.mrb[0].mxu0
        %v2268 = vadd.f32 %v2003, %v2267
        %v2269 = vpop.f32.mrb[0].mxu0
        %v2270 = vadd.f32 %v1999, %v2269
        %v2271 = vpop.f32.mrb[0].mxu0
        %v2272 = vadd.f32 %v2003, %v2271
        %2273 = vmatprep.mubr.bf16.mxu0 0
        %2274 = vmatmul.mubr.bf16.gmra.mrb[0].mxu0 %v2089
        %v2275 = vpop.f32.mrb[0].mxu0
        %v2276 = vadd.f32 %v1999, %v2275
        %v2277 = vpop.f32.mrb[0].mxu0
        %v2278 = vadd.f32 %v2003, %v2277
        %v2279 = vpop.f32.mrb[0].mxu0
        %v2280 = vadd.f32 %v1999, %v2279
        %v2281 = vpop.f32.mrb[0].mxu0
        %v2282 = vadd.f32 %v2003, %v2281
        %2283 = vdwg.mxu0
        %2284 = vmatprep.subr.bf16.mxu0 0
        %2285 = vmatpush1.bf16.msra.mxu0 %v2033
        %2286 = vmatprep.subr.bf16.mxu0 0
        %2287 = vmatpush1.bf16.msra.mxu0 %v2036
        %2288 = vmatprep.subr.bf16.mxu0 0
        %2289 = vmatpush1.bf16.msra.mxu0 0
        %2290 = vmatprep.subr.bf16.mxu0 0
        %2291 = vmatpush1.bf16.msra.mxu0 0
        %2292 = vmatprep.subr.bf16.mxu0 0
        %2293 = vmatpush1.bf16.msra.mxu0 0
        %2294 = vmatprep.subr.bf16.mxu0 0
        %2295 = vmatpush1.bf16.msra.mxu0 0
        %2296 = vmatprep.subr.bf16.mxu0 0
        %2297 = vmatpush1.bf16.msra.mxu0 0
        %2298 = vmatprep.subr.bf16.mxu0 0
        %2299 = vmatpush1.bf16.msra.mxu0 0
        %2300 = vmatprep.subr.bf16.mxu0 0
        %2301 = vmatpush1.bf16.msra.mxu0 0
        %2302 = vmatprep.subr.bf16.mxu0 0
        %2303 = vmatpush1.bf16.msra.mxu0 0
        %2304 = vmatprep.subr.bf16.mxu0 0
        %2305 = vmatpush1.bf16.msra.mxu0 0
        %2306 = vmatprep.subr.bf16.mxu0 0
        %2307 = vmatpush1.bf16.msra.mxu0 0
        %2308 = vmatprep.subr.bf16.mxu0 0
        %2309 = vmatpush1.bf16.msra.mxu0 0
        %2310 = vmatprep.subr.bf16.mxu0 0
        %2311 = vmatpush1.bf16.msra.mxu0 0
        %2312 = vmatprep.subr.bf16.mxu0 0
        %2313 = vmatpush1.bf16.msra.mxu0 0
        %2314 = vmatprep.subr.bf16.mxu0 0
        %2315 = vmatpush1.bf16.msra.mxu0 0
        %2316 = vmatprep.mubr.bf16.mxu0 0
        %2317 = vmatmul.mubr.bf16.gmra.mrb[0].mxu0 %v2044
        %v2318 = vpop.f32.mrb[0].mxu0
        %v2319 = vadd.f32 %v2007, %v2318
        %v2320 = vpop.f32.mrb[0].mxu0
        %v2321 = vpop.f32.mrb[0].mxu0
        %v2322 = vadd.f32 %v2007, %v2321
        %v2323 = vpop.f32.mrb[0].mxu0
        %2324 = vmatprep.mubr.bf16.mxu0 0
        %2325 = vmatmul.mubr.bf16.gmra.mrb[0].mxu0 %v2047
        %v2326 = vpop.f32.mrb[0].mxu0
        %v2327 = vadd.f32 %v2007, %v2326
        %v2328 = vpop.f32.mrb[0].mxu0
        %v2329 = vpop.f32.mrb[0].mxu0
        %v2330 = vadd.f32 %v2007, %v2329
        %v2331 = vpop.f32.mrb[0].mxu0
        %2332 = vmatprep.mubr.bf16.mxu0 0
        %2333 = vmatmul.mubr.bf16.gmra.mrb[0].mxu0 %v2050
        %v2334 = vpop.f32.mrb[0].mxu0
        %v2335 = vadd.f32 %v2007, %v2334
        %v2336 = vpop.f32.mrb[0].mxu0
        %v2337 = vpop.f32.mrb[0].mxu0
        %v2338 = vadd.f32 %v2007, %v2337
        %v2339 = vpop.f32.mrb[0].mxu0
        %2340 = vmatprep.mubr.bf16.mxu0 0
        %2341 = vmatmul.mubr.bf16.gmra.mrb[0].mxu0 %v2053
        %v2342 = vpop.f32.mrb[0].mxu0
        %v2343 = vadd.f32 %v2007, %v2342
        %v2344 = vpop.f32.mrb[0].mxu0
        %v2345 = vpop.f32.mrb[0].mxu0
        %v2346 = vadd.f32 %v2007, %v2345
        %v2347 = vpop.f32.mrb[0].mxu0
        %2348 = vmatprep.mubr.bf16.mxu0 0
        %2349 = vmatmul.mubr.bf16.gmra.mrb[0].mxu0 %v2056
        %v2350 = vpop.f32.mrb[0].mxu0
        %v2351 = vadd.f32 %v2007, %v2350
        %v2352 = vpop.f32.mrb[0].mxu0
        %v2353 = vpop.f32.mrb[0].mxu0
        %v2354 = vadd.f32 %v2007, %v2353
        %v2355 = vpop.f32.mrb[0].mxu0
        %2356 = vmatprep.mubr.bf16.mxu0 0
        %2357 = vmatmul.mubr.bf16.gmra.mrb[0].mxu0 %v2059
        %v2358 = vpop.f32.mrb[0].mxu0
        %v2359 = vadd.f32 %v2007, %v2358
        %v2360 = vpop.f32.mrb[0].mxu0
        %v2361 = vpop.f32.mrb[0].mxu0
        %v2362 = vadd.f32 %v2007, %v2361
        %v2363 = vpop.f32.mrb[0].mxu0
        %2364 = vmatprep.mubr.bf16.mxu0 0
        %2365 = vmatmul.mubr.bf16.gmra.mrb[0].mxu0 %v2062
        %v2366 = vpop.f32.mrb[0].mxu0
        %v2367 = vadd.f32 %v2007, %v2366
        %v2368 = vpop.f32.mrb[0].mxu0
        %v2369 = vpop.f32.mrb[0].mxu0
        %v2370 = vadd.f32 %v2007, %v2369
        %v2371 = vpop.f32.mrb[0].mxu0
        %2372 = vmatprep.mubr.bf16.mxu0 0
        %2373 = vmatmul.mubr.bf16.gmra.mrb[0].mxu0 %v2065
        %v2374 = vpop.f32.mrb[0].mxu0
        %v2375 = vadd.f32 %v2007, %v2374
        %v2376 = vpop.f32.mrb[0].mxu0
        %v2377 = vpop.f32.mrb[0].mxu0
        %v2378 = vadd.f32 %v2007, %v2377
        %v2379 = vpop.f32.mrb[0].mxu0
        %2380 = vmatprep.mubr.bf16.mxu0 0
        %2381 = vmatmul.mubr.bf16.gmra.mrb[0].mxu0 %v2068
        %v2382 = vpop.f32.mrb[0].mxu0
        %v2383 = vadd.f32 %v2007, %v2382
        %v2384 = vpop.f32.mrb[0].mxu0
        %v2385 = vpop.f32.mrb[0].mxu0
        %v2386 = vadd.f32 %v2007, %v2385
        %v2387 = vpop.f32.mrb[0].mxu0
        %2388 = vmatprep.mubr.bf16.mxu0 0
        %2389 = vmatmul.mubr.bf16.gmra.mrb[0].mxu0 %v2071
        %v2390 = vpop.f32.mrb[0].mxu0
        %v2391 = vadd.f32 %v2007, %v2390
        %v2392 = vpop.f32.mrb[0].mxu0
        %v2393 = vpop.f32.mrb[0].mxu0
        %v2394 = vadd.f32 %v2007, %v2393
        %v2395 = vpop.f32.mrb[0].mxu0
        %2396 = vmatprep.mubr.bf16.mxu0 0
        %2397 = vmatmul.mubr.bf16.gmra.mrb[0].mxu0 %v2074
        %v2398 = vpop.f32.mrb[0].mxu0
        %v2399 = vadd.f32 %v2007, %v2398
        %v2400 = vpop.f32.mrb[0].mxu0
        %v2401 = vpop.f32.mrb[0].mxu0
        %v2402 = vadd.f32 %v2007, %v2401
        %v2403 = vpop.f32.mrb[0].mxu0
        %2404 = vmatprep.mubr.bf16.mxu0 0
        %2405 = vmatmul.mubr.bf16.gmra.mrb[0].mxu0 %v2077
        %v2406 = vpop.f32.mrb[0].mxu0
        %v2407 = vadd.f32 %v2007, %v2406
        %v2408 = vpop.f32.mrb[0].mxu0
        %v2409 = vpop.f32.mrb[0].mxu0
        %v2410 = vadd.f32 %v2007, %v2409
        %v2411 = vpop.f32.mrb[0].mxu0
        %2412 = vmatprep.mubr.bf16.mxu0 0
        %2413 = vmatmul.mubr.bf16.gmra.mrb[0].mxu0 %v2080
        %v2414 = vpop.f32.mrb[0].mxu0
        %v2415 = vadd.f32 %v2007, %v2414
        %v2416 = vpop.f32.mrb[0].mxu0
        %v2417 = vpop.f32.mrb[0].mxu0
        %v2418 = vadd.f32 %v2007, %v2417
        %v2419 = vpop.f32.mrb[0].mxu0
        %2420 = vmatprep.mubr.bf16.mxu0 0
        %2421 = vmatmul.mubr.bf16.gmra.mrb[0].mxu0 %v2083
        %v2422 = vpop.f32.mrb[0].mxu0
        %v2423 = vadd.f32 %v2007, %v2422
        %v2424 = vpop.f32.mrb[0].mxu0
        %v2425 = vpop.f32.mrb[0].mxu0
        %v2426 = vadd.f32 %v2007, %v2425
        %v2427 = vpop.f32.mrb[0].mxu0
        %2428 = vmatprep.mubr.bf16.mxu0 0
        %2429 = vmatmul.mubr.bf16.gmra.mrb[0].mxu0 %v2086
        %v2430 = vpop.f32.mrb[0].mxu0
        %v2431 = vadd.f32 %v2007, %v2430
        %v2432 = vpop.f32.mrb[0].mxu0
        %v2433 = vpop.f32.mrb[0].mxu0
        %v2434 = vadd.f32 %v2007, %v2433
        %v2435 = vpop.f32.mrb[0].mxu0
        %2436 = vmatprep.mubr.bf16.mxu0 0
        %2437 = vmatmul.mubr.bf16.gmra.mrb[0].mxu0 %v2089
        %v2438 = vpop.f32.mrb[0].mxu0
        %v2439 = vadd.f32 %v2007, %v2438
        %v2440 = vpop.f32.mrb[0].mxu0
        %v2441 = vpop.f32.mrb[0].mxu0
        %v2442 = vadd.f32 %v2007, %v2441
        %v2443 = vpop.f32.mrb[0].mxu0
        %2444 = vdwg.mxu0
        %v2445 = vmax.f32 %v2126, 0.0
        %v2446 = vmax.f32 %v2128, 0.0
        %v2447 = vmax.f32 %v2130, 0.0
        %v2448 = vmax.f32 %v2132, 0.0
        %v2449 = vmax.f32 %v2136, 0.0
        %v2450 = vmax.f32 %v2138, 0.0
        %v2451 = vmax.f32 %v2140, 0.0
        %v2452 = vmax.f32 %v2142, 0.0
        %v2453 = vmax.f32 %v2146, 0.0
        %v2454 = vmax.f32 %v2148, 0.0
        %v2455 = vmax.f32 %v2150, 0.0
        %v2456 = vmax.f32 %v2152, 0.0
        %v2457 = vmax.f32 %v2156, 0.0
        %v2458 = vmax.f32 %v2158, 0.0
        %v2459 = vmax.f32 %v2160, 0.0
        %v2460 = vmax.f32 %v2162, 0.0
        %v2461 = vmax.f32 %v2166, 0.0
        %v2462 = vmax.f32 %v2168, 0.0
        %v2463 = vmax.f32 %v2170, 0.0
        %v2464 = vmax.f32 %v2172, 0.0
        %v2465 = vmax.f32 %v2176, 0.0
        %v2466 = vmax.f32 %v2178, 0.0
        %v2467 = vmax.f32 %v2180, 0.0
        %v2468 = vmax.f32 %v2182, 0.0
        %v2469 = vmax.f32 %v2186, 0.0
        %v2470 = vmax.f32 %v2188, 0.0
        %v2471 = vmax.f32 %v2190, 0.0
        %v2472 = vmax.f32 %v2192, 0.0
        %v2473 = vmax.f32 %v2196, 0.0
        %v2474 = vmax.f32 %v2198, 0.0
        %v2475 = vmax.f32 %v2200, 0.0
        %v2476 = vmax.f32 %v2202, 0.0
        %v2477 = vmax.f32 %v2206, 0.0
        %v2478 = vmax.f32 %v2208, 0.0
        %v2479 = vmax.f32 %v2210, 0.0
        %v2480 = vmax.f32 %v2212, 0.0
        %v2481 = vmax.f32 %v2216, 0.0
        %v2482 = vmax.f32 %v2218, 0.0
        %v2483 = vmax.f32 %v2220, 0.0
        %v2484 = vmax.f32 %v2222, 0.0
        %v2485 = vmax.f32 %v2226, 0.0
        %v2486 = vmax.f32 %v2228, 0.0
        %v2487 = vmax.f32 %v2230, 0.0
        %v2488 = vmax.f32 %v2232, 0.0
        %v2489 = vmax.f32 %v2236, 0.0
        %v2490 = vmax.f32 %v2238, 0.0
        %v2491 = vmax.f32 %v2240, 0.0
        %v2492 = vmax.f32 %v2242, 0.0
        %v2493 = vmax.f32 %v2246, 0.0
        %v2494 = vmax.f32 %v2248, 0.0
        %v2495 = vmax.f32 %v2250, 0.0
        %v2496 = vmax.f32 %v2252, 0.0
        %v2497 = vmax.f32 %v2256, 0.0
        %v2498 = vmax.f32 %v2258, 0.0
        %v2499 = vmax.f32 %v2260, 0.0
        %v2500 = vmax.f32 %v2262, 0.0
        %v2501 = vmax.f32 %v2266, 0.0
        %v2502 = vmax.f32 %v2268, 0.0
        %v2503 = vmax.f32 %v2270, 0.0
        %v2504 = vmax.f32 %v2272, 0.0
        %v2505 = vmax.f32 %v2276, 0.0
        %v2506 = vmax.f32 %v2278, 0.0
        %v2507 = vmax.f32 %v2280, 0.0
        %v2508 = vmax.f32 %v2282, 0.0
        %2509 = vst [vmem:[%s463] sm:$0xff] %v2445
        %2510 = vst [vmem:[%s463 + $0x8] sm:$0xff] %v2446
        %2511 = vst [vmem:[%s463 + $0x10] sm:$0xff] %v2447
        %2512 = vst [vmem:[%s463 + $0x18] sm:$0xff] %v2448
        %2513 = vst [vmem:[%s463 + $0x20] sm:$0xff] %v2449
        %2514 = vst [vmem:[%s463 + $0x28] sm:$0xff] %v2450
        %2515 = vst [vmem:[%s463 + $0x30] sm:$0xff] %v2451
        %2516 = vst [vmem:[%s463 + $0x38] sm:$0xff] %v2452
        %2517 = vst [vmem:[%s463 + $0x40] sm:$0xff] %v2453
        %2518 = vst [vmem:[%s463 + $0x48] sm:$0xff] %v2454
        %2519 = vst [vmem:[%s463 + $0x50] sm:$0xff] %v2455
        %2520 = vst [vmem:[%s463 + $0x58] sm:$0xff] %v2456
        %2521 = vst [vmem:[%s463 + $0x60] sm:$0xff] %v2457
        %2522 = vst [vmem:[%s463 + $0x68] sm:$0xff] %v2458
        %2523 = vst [vmem:[%s463 + $0x70] sm:$0xff] %v2459
        %2524 = vst [vmem:[%s463 + $0x78] sm:$0xff] %v2460
        %2525 = vst [vmem:[%s463 + $0x80] sm:$0xff] %v2461
        %2526 = vst [vmem:[%s463 + $0x88] sm:$0xff] %v2462
        %2527 = vst [vmem:[%s463 + $0x90] sm:$0xff] %v2463
        %2528 = vst [vmem:[%s463 + $0x98] sm:$0xff] %v2464
        %2529 = vst [vmem:[%s463 + $0xa0] sm:$0xff] %v2465
        %2530 = vst [vmem:[%s463 + $0xa8] sm:$0xff] %v2466
        %2531 = vst [vmem:[%s463 + $0xb0] sm:$0xff] %v2467
        %2532 = vst [vmem:[%s463 + $0xb8] sm:$0xff] %v2468
        %2533 = vst [vmem:[%s463 + $0xc0] sm:$0xff] %v2469
        %2534 = vst [vmem:[%s463 + $0xc8] sm:$0xff] %v2470
        %2535 = vst [vmem:[%s463 + $0xd0] sm:$0xff] %v2471
        %2536 = vst [vmem:[%s463 + $0xd8] sm:$0xff] %v2472
        %2537 = vst [vmem:[%s463 + $0xe0] sm:$0xff] %v2473
        %2538 = vst [vmem:[%s463 + $0xe8] sm:$0xff] %v2474
        %2539 = vst [vmem:[%s463 + $0xf0] sm:$0xff] %v2475
        %2540 = vst [vmem:[%s463 + $0xf8] sm:$0xff] %v2476
        %2541 = vst [vmem:[%s463 + $0x100] sm:$0xff] %v2477
        %2542 = vst [vmem:[%s463 + $0x108] sm:$0xff] %v2478
        %2543 = vst [vmem:[%s463 + $0x110] sm:$0xff] %v2479
        %2544 = vst [vmem:[%s463 + $0x118] sm:$0xff] %v2480
        %2545 = vst [vmem:[%s463 + $0x120] sm:$0xff] %v2481
        %2546 = vst [vmem:[%s463 + $0x128] sm:$0xff] %v2482
        %2547 = vst [vmem:[%s463 + $0x130] sm:$0xff] %v2483
        %2548 = vst [vmem:[%s463 + $0x138] sm:$0xff] %v2484
        %2549 = vst [vmem:[%s463 + $0x140] sm:$0xff] %v2485
        %2550 = vst [vmem:[%s463 + $0x148] sm:$0xff] %v2486
        %2551 = vst [vmem:[%s463 + $0x150] sm:$0xff] %v2487
        %2552 = vst [vmem:[%s463 + $0x158] sm:$0xff] %v2488
        %2553 = vst [vmem:[%s463 + $0x160] sm:$0xff] %v2489
        %2554 = vst [vmem:[%s463 + $0x168] sm:$0xff] %v2490
        %2555 = vst [vmem:[%s463 + $0x170] sm:$0xff] %v2491
        %2556 = vst [vmem:[%s463 + $0x178] sm:$0xff] %v2492
        %2557 = vst [vmem:[%s463 + $0x180] sm:$0xff] %v2493
        %2558 = vst [vmem:[%s463 + $0x188] sm:$0xff] %v2494
        %2559 = vst [vmem:[%s463 + $0x190] sm:$0xff] %v2495
        %2560 = vst [vmem:[%s463 + $0x198] sm:$0xff] %v2496
        %2561 = vst [vmem:[%s463 + $0x1a0] sm:$0xff] %v2497
        %2562 = vst [vmem:[%s463 + $0x1a8] sm:$0xff] %v2498
        %2563 = vst [vmem:[%s463 + $0x1b0] sm:$0xff] %v2499
        %2564 = vst [vmem:[%s463 + $0x1b8] sm:$0xff] %v2500
        %2565 = vst [vmem:[%s463 + $0x1c0] sm:$0xff] %v2501
        %2566 = vst [vmem:[%s463 + $0x1c8] sm:$0xff] %v2502
        %2567 = vst [vmem:[%s463 + $0x1d0] sm:$0xff] %v2503
        %2568 = vst [vmem:[%s463 + $0x1d8] sm:$0xff] %v2504
        %2569 = vst [vmem:[%s463 + $0x1e0] sm:$0xff] %v2505
        %2570 = vst [vmem:[%s463 + $0x1e8] sm:$0xff] %v2506
        %2571 = vst [vmem:[%s463 + $0x1f0] sm:$0xff] %v2507
        %2572 = vst [vmem:[%s463 + $0x1f8] sm:$0xff] %v2508
        %2573 = vst [vmem:[%s492] sm:$0xff] %v2319
        %2574 = vst [vmem:[%s492 + $0x8] sm:$0xff] %v2322
        %2575 = vst [vmem:[%s492 + $0x10] sm:$0xff] %v2327
        %2576 = vst [vmem:[%s492 + $0x18] sm:$0xff] %v2330
        %2577 = vst [vmem:[%s492 + $0x20] sm:$0xff] %v2335
        %2578 = vst [vmem:[%s492 + $0x28] sm:$0xff] %v2338
        %2579 = vst [vmem:[%s492 + $0x30] sm:$0xff] %v2343
        %2580 = vst [vmem:[%s492 + $0x38] sm:$0xff] %v2346
        %2581 = vst [vmem:[%s492 + $0x40] sm:$0xff] %v2351
        %2582 = vst [vmem:[%s492 + $0x48] sm:$0xff] %v2354
        %2583 = vst [vmem:[%s492 + $0x50] sm:$0xff] %v2359
        %2584 = vst [vmem:[%s492 + $0x58] sm:$0xff] %v2362
        %2585 = vst [vmem:[%s492 + $0x60] sm:$0xff] %v2367
        %2586 = vst [vmem:[%s492 + $0x68] sm:$0xff] %v2370
        %2587 = vst [vmem:[%s492 + $0x70] sm:$0xff] %v2375
        %2588 = vst [vmem:[%s492 + $0x78] sm:$0xff] %v2378
        %2589 = vst [vmem:[%s492 + $0x80] sm:$0xff] %v2383
        %2590 = vst [vmem:[%s492 + $0x88] sm:$0xff] %v2386
        %2591 = vst [vmem:[%s492 + $0x90] sm:$0xff] %v2391
        %2592 = vst [vmem:[%s492 + $0x98] sm:$0xff] %v2394
        %2593 = vst [vmem:[%s492 + $0xa0] sm:$0xff] %v2399
        %2594 = vst [vmem:[%s492 + $0xa8] sm:$0xff] %v2402
        %2595 = vst [vmem:[%s492 + $0xb0] sm:$0xff] %v2407
        %2596 = vst [vmem:[%s492 + $0xb8] sm:$0xff] %v2410
        %2597 = vst [vmem:[%s492 + $0xc0] sm:$0xff] %v2415
        %2598 = vst [vmem:[%s492 + $0xc8] sm:$0xff] %v2418
        %2599 = vst [vmem:[%s492 + $0xd0] sm:$0xff] %v2423
        %2600 = vst [vmem:[%s492 + $0xd8] sm:$0xff] %v2426
        %2601 = vst [vmem:[%s492 + $0xe0] sm:$0xff] %v2431
        %2602 = vst [vmem:[%s492 + $0xe8] sm:$0xff] %v2434
        %2603 = vst [vmem:[%s492 + $0xf0] sm:$0xff] %v2439
        %2604 = vst [vmem:[%s492 + $0xf8] sm:$0xff] %v2442
        %s2605 = smul.u32 32, %s27
        %p2606 = scmp.lt.s32.totalorder %s2605, 63
        %s2607 = scalar_select %p2606, %s2605, 63
        %s2608 = smul.addr %s2607, 8
        %s2609 = scalar_lea.vmem %s11, %s2608
        %s2610 = sand.u32 %s312, 1
        %s2611 = scalar_lea.sflag [#allocation3], %s2610
        %s2612 = sand.u32 %s312, 1
        %s2613 = smul.addr %s2612, 512
        %s2614 = scalar_lea.vmem [#allocation2], %s2613
        // Predicated region
        $region65: #{_lambda_.7} parent=63 // pred_check
          %p2615 = pneg %p296
        $region66: #{_lambda_.7} parent=63 // pred_check_branch
          %2617 = sbr.rel (%p2615) target = $region68
        $region67: #{_lambda_.7} parent=63 // pred_region
          %s2618 = smul.u32 32, %s27
        $region68: #{_lambda_.7} parent=63 // pred_fallthru
          _
        // Predicated region
        $region69: #{_lambda_.7} parent=63 // pred_check
          %p2619 = pneg %p322
        $region70: #{_lambda_.7} parent=63 // pred_check_branch
          %2621 = sbr.rel (%p2619) target = $region72
        $region71: #{_lambda_.7} parent=63 // pred_region
          %s2622 = smul.u32 32, %s27
          %s2624 = ssub.s32 8192, 8192
          %2625 = vsyncadd %s2611, %s2624
          %s2626 = smul.addr %s2622, 2
          %s2627 = smul.addr %s2626, 128
          %s2628 = scalar_lea.hbm %s12, %s2627
          %s2629 = sshll.u32 %s2614, 4
          %s2630 = int_to_ptr.vmem [resolvable:$true] %s2629
          %2635 = dma.vmem_to_hbm [thread:$0]  %s2630, 8192, %s2628, %s2611, 256, 256, 16
        $region72: #{_lambda_.7} parent=63 // pred_fallthru
          _
      $region64: #{_lambda_.7} parent=5 // pred_fallthru
        _
      %p2636 = scmp.le.s32.totalorder 2, %s22
      // Predicated region
      $region73: #{_lambda_.7} parent=5 // pred_check
        %p2637 = pneg %p2636
      $region74: #{_lambda_.7} parent=5 // pred_check_branch
        %2639 = sbr.rel (%p2637) target = $region76
      $region75: #{_lambda_.7} parent=5 // pred_region
        %s2640 = ssub.s32 %s22, 2
        // Predicated region
        $region77: #{_lambda_.7} parent=75 // pred_check
          %p2641 = pneg %p302
        $region78: #{_lambda_.7} parent=75 // pred_check_branch
          %2643 = sbr.rel (%p2641) target = $region80
        $region79: #{_lambda_.7} parent=75 // pred_region
          %s2644 = smul.u32 32, %s28
          %p2645 = scmp.lt.s32.totalorder %s2644, 63
          %s2646 = scalar_select %p2645, %s2644, 63
          %s2647 = smul.addr %s2646, 8
          %s2648 = scalar_lea.vmem %s11, %s2647
        $region80: #{_lambda_.7} parent=75 // pred_fallthru
          _
        // Predicated region
        $region81: #{_lambda_.7} parent=75 // pred_check
          %p2649 = pneg %p328
        $region82: #{_lambda_.7} parent=75 // pred_check_branch
          %2651 = sbr.rel (%p2649) target = $region84
        $region83: #{_lambda_.7} parent=75 // pred_region
          %s2652 = sand.u32 %s313, 1
          %s2653 = scalar_lea.sflag [#allocation3], %s2652
          %s2654 = sand.u32 %s313, 1
          %s2655 = smul.addr %s2654, 512
          %s2656 = scalar_lea.vmem [#allocation2], %s2655
          %2657 = dma.done %s2653, 8192
        $region84: #{_lambda_.7} parent=75 // pred_fallthru
          _
      $region76: #{_lambda_.7} parent=5 // pred_fallthru
        _
    $region6: #{_lambda_.7} parent=1 // loop_footer
      %s26 = sadd.s32 1, %s22
    $region7: #{_lambda_.7} parent=1 // loop_footer_branch
      %21 = sbr.rel target = $region3
    $region8: #{_lambda_.7} parent=1 // loop_exit
      _
    %2658 = vsyncpa [#allocation3], 1
    %s2659 = scalar_lea.sflag [#allocation3], 1
    %2660 = vsyncpa %s2659, 1

</llo_original>
